<compile_context>
chip_gen: v6e
topology: v6e:2x2x1
jax: 0.10.0
libtpu: 0.0.40
codegen_flags: <defaults>
</compile_context>

<pallas_src>
import numpy as np
import jax
import jax.numpy as jnp
from jax.experimental import pallas as pl
from jax.experimental.pallas import tpu as pltpu


# ------------------------------ fused kernel --------------------------------

def _pfld_fused_kernel(x_ref, t1_ref, w1_ref, b1_ref, t2_ref, w2_ref, b2_ref,
                       wa_ref, wb_ref, wc_ref, bfc_ref, o_ref):
    """Whole PFLD head, fully resident in VMEM.

    x_ref  : (B, S, Cin)      channel-last input, S = H*W
    t1_ref : (k1, S1, S)      conv1 0/1 selection matrices (im2col + padding)
    w1_ref : (k1, Cin, F0)    conv1 weights with BN scale folded in
    b1_ref : (1, F0)          conv1 folded BN bias
    t2_ref : (k2, S2, S1)     conv2 selection matrices
    w2_ref : (k2, F0, F1)     conv2 weights with BN scale folded in
    b2_ref : (1, F1)          conv2 folded BN bias
    wa/wb/wc_ref : (Cin,Opad)/(F0,Opad)/(F1,Opad)  fc weight blocks, lane padded
    bfc_ref: (1, Opad)        fc bias, lane padded
    o_ref  : (B, Opad)        lane-dense output (real width sliced in wrapper)
    """
    B = x_ref.shape[0]
    k1 = t1_ref.shape[0]
    k2 = t2_ref.shape[0]
    f32 = jnp.float32

    for b in range(B):                      # B is tiny & static -> unrolled
        xb = x_ref[b]                                       # (S, Cin)
        x1 = jnp.mean(xb, axis=0, keepdims=True)            # (1, Cin)  pool

        # conv1 (3x3 / stride 2 / pad 1) + folded BN + ReLU
        acc1 = None
        for p in range(k1):
            patch = jnp.dot(t1_ref[p], xb, preferred_element_type=f32)     # (S1, Cin)
            term = jnp.dot(patch, w1_ref[p], preferred_element_type=f32)   # (S1, F0)
            acc1 = term if acc1 is None else acc1 + term
        y1 = jnp.maximum(acc1 + b1_ref[...], 0.0)           # (S1, F0)
        x2 = jnp.mean(y1, axis=0, keepdims=True)            # (1, F0)  pool

        # conv2 (2x2 / stride 1 / pad 0) + folded BN + ReLU
        acc2 = None
        for p in range(k2):
            patch = jnp.dot(t2_ref[p], y1, preferred_element_type=f32)     # (S2, F0)
            term = jnp.dot(patch, w2_ref[p], preferred_element_type=f32)   # (S2, F1)
            acc2 = term if acc2 is None else acc2 + term
        y2 = jnp.maximum(acc2 + b2_ref[...], 0.0)           # (S2, F1)
        x3 = jnp.mean(y2, axis=0, keepdims=True)            # (1, F1)  pool

        # fc(concat([x1, x2, x3])) as three partial matmuls (no concat needed)
        row = (jnp.dot(x1, wa_ref[...], preferred_element_type=f32)
               + jnp.dot(x2, wb_ref[...], preferred_element_type=f32)
               + jnp.dot(x3, wc_ref[...], preferred_element_type=f32)
               + bfc_ref[...])                              # (1, Opad)
        o_ref[pl.ds(b, 1), :] = row


# --------------------------- one-time preparation ----------------------------

def _build_selection(H, W, kh, kw, stride, pad):
    """0/1 matrices T[p] (Ho*Wo, H*W): im2col gather + zero padding per tap."""
    Ho = (H + 2 * pad - kh) // stride + 1
    Wo = (W + 2 * pad - kw) // stride + 1
    T = np.zeros((kh * kw, Ho * Wo, H * W), np.float32)
    for ki in range(kh):
        for kj in range(kw):
            p = ki * kw + kj
            for oh in range(Ho):
                for ow in range(Wo):
                    ih = oh * stride + ki - pad
                    iw = ow * stride + kj - pad
                    if 0 <= ih < H and 0 <= iw < W:
                        T[p, oh * Wo + ow, ih * W + iw] = 1.0
    return jnp.asarray(T), Ho, Wo


def _fold_bn(gamma, beta, mean, var, eps=1e-5):
    scale = gamma / jnp.sqrt(var + eps)
    return scale, beta - mean * scale


def prepare_pfld_params(params, input_hw, lane_pad=128):
    """Fold BN into conv weights, build selection matrices, split/pad the fc."""
    H, W = input_hw
    w1, w2 = params["w1"], params["w2"]
    F0, Cin, k1h, k1w = w1.shape
    F1, _, k2h, k2w = w2.shape

    t1, Ho1, Wo1 = _build_selection(H, W, k1h, k1w, stride=2, pad=1)
    t2, _, _ = _build_selection(Ho1, Wo1, k2h, k2w, stride=1, pad=0)

    s1, b1 = _fold_bn(params["g1"], params["be1"], params["m1"], params["v1"])
    s2, b2 = _fold_bn(params["g2"], params["be2"], params["m2"], params["v2"])
    # fold BN scale into weights, reorder OIHW -> (kh*kw, Cin, Cout)
    w1f = (w1 * s1[:, None, None, None]).transpose(2, 3, 1, 0).reshape(k1h * k1w, Cin, F0)
    w2f = (w2 * s2[:, None, None, None]).transpose(2, 3, 1, 0).reshape(k2h * k2w, F0, F1)

    fcw, fcb = params["fcw"], params["fcb"]          # (O, Cin+F0+F1), (O,)
    O = fcw.shape[0]
    o_pad = ((O + lane_pad - 1) // lane_pad) * lane_pad

    def _pad_lanes(a):
        return jnp.pad(a, ((0, 0), (0, o_pad - O)))

    wa = _pad_lanes(fcw[:, :Cin].T)                  # (Cin, Opad)
    wb = _pad_lanes(fcw[:, Cin:Cin + F0].T)          # (F0,  Opad)
    wc = _pad_lanes(fcw[:, Cin + F0:].T)             # (F1,  Opad)
    bfc = _pad_lanes(fcb.reshape(1, O))              # (1,   Opad)

    arrays = (t1, w1f, b1.reshape(1, F0), t2, w2f, b2.reshape(1, F1),
              wa, wb, wc, bfc)
    return {"arrays": arrays, "o": O, "o_pad": o_pad}


def build_pfld_head(params, input_hw):
    """Returns a jitted forward(x) with all weight prep hoisted out of the hot path."""
    prep = prepare_pfld_params(params, input_hw)
    arrays = prep["arrays"]
    o, o_pad = prep["o"], prep["o_pad"]
    n_in = 1 + len(arrays)
    vmem = pltpu.MemorySpace.VMEM

    @jax.jit
    def forward(x):
        B, Cin, H, W = x.shape
        x_cl = jnp.transpose(x.reshape(B, Cin, H * W), (0, 2, 1))   # (B, S, Cin)
        out = pl.pallas_call(
            _pfld_fused_kernel,
            out_shape=jax.ShapeDtypeStruct((B, o_pad), jnp.float32),
            in_specs=[pl.BlockSpec(memory_space=vmem)] * n_in,
            out_specs=pl.BlockSpec(memory_space=vmem),
        )(x_cl, *arrays)
        return out[:, :o]

    return forward


# ---------------------------- pure-JAX reference -----------------------------

def reference_forward(x, params):
    def conv_bn_relu(inp, w, g, be, m, v, stride, pad):
        out = jax.lax.conv_general_dilated(
            inp, w, (stride, stride), ((pad, pad), (pad, pad)),
            dimension_numbers=("NCHW", "OIHW", "NCHW"))
        s, b = _fold_bn(g, be, m, v)
        out = out * s[None, :, None, None] + b[None, :, None, None]
        return jnp.maximum(out, 0.0)

    x1 = jnp.mean(x, axis=(2, 3))
    c1 = conv_bn_relu(x, params["w1"], params["g1"], params["be1"],
                      params["m1"], params["v1"], 2, 1)
    x2 = jnp.mean(c1, axis=(2, 3))
    c2 = conv_bn_relu(c1, params["w2"], params["g2"], params["be2"],
                      params["m2"], params["v2"], 1, 0)
    x3 = jnp.mean(c2, axis=(2, 3))
    ms = jnp.concatenate([x1, x2, x3], axis=1)
    return ms @ params["fcw"].T + params["fcb"]


# ----------------------------------- main ------------------------------------

if __name__ == "__main__":
    # Small PFLD-consistent shapes: num_point=1, input_channel=16,
    # feature_num=[32, 32], spatial 8x8, batch 2.
    B, Cin, H, W = 2, 16, 8, 8
    F0, F1 = 32, 32
    num_point = 1

    key = jax.random.PRNGKey(0)
    ks = jax.random.split(key, 13)

    params = {
        # conv1: Conv2d(Cin, F0, 3, stride=2, padding=1, bias=False) + BN + ReLU
        "w1": 0.1 * jax.random.normal(ks[0], (F0, Cin, 3, 3), jnp.float32),
        "g1": 1.0 + 0.1 * jax.random.normal(ks[1], (F0,), jnp.float32),
        "be1": 0.1 * jax.random.normal(ks[2], (F0,), jnp.float32),
        "m1": 0.1 * jax.random.normal(ks[3], (F0,), jnp.float32),
        "v1": jax.random.uniform(ks[4], (F0,), jnp.float32, 0.5, 1.5),
        # conv2: Conv2d(F0, F1, 2, stride=1, padding=0, bias=False) + BN + ReLU
        "w2": 0.1 * jax.random.normal(ks[5], (F1, F0, 2, 2), jnp.float32),
        "g2": 1.0 + 0.1 * jax.random.normal(ks[6], (F1,), jnp.float32),
        "be2": 0.1 * jax.random.normal(ks[7], (F1,), jnp.float32),
        "m2": 0.1 * jax.random.normal(ks[8], (F1,), jnp.float32),
        "v2": jax.random.uniform(ks[9], (F1,), jnp.float32, 0.5, 1.5),
        # fc: Linear(Cin + F0 + F1, num_point * 2)
        "fcw": 0.1 * jax.random.normal(ks[10], (num_point * 2, Cin + F0 + F1),
                                       jnp.float32),
        "fcb": 0.1 * jax.random.normal(ks[11], (num_point * 2,), jnp.float32),
    }

    x = jax.random.normal(ks[12], (B, Cin, H, W), jnp.float32)

    forward = build_pfld_head(params, (H, W))
    out = jax.block_until_ready(forward(x))

    ref = jax.block_until_ready(reference_forward(x, params))
    assert out.shape == (B, num_point * 2), out.shape
    assert jnp.allclose(out, ref, atol=1e-4, rtol=1e-4), (out, ref)

    print("KERNEL_OK")
</pallas_src>

<mosaic_0001>
module attributes {stable_mosaic.version = 11 : i64} {
  func.func @_pfld_fused_kernel(%arg0: memref<2x64x16xf32, #tpu.memory_space<vmem>>, %arg1: memref<9x16x64xf32, #tpu.memory_space<vmem>>, %arg2: memref<9x16x32xf32, #tpu.memory_space<vmem>>, %arg3: memref<1x32xf32, #tpu.memory_space<vmem>>, %arg4: memref<4x9x16xf32, #tpu.memory_space<vmem>>, %arg5: memref<4x32x32xf32, #tpu.memory_space<vmem>>, %arg6: memref<1x32xf32, #tpu.memory_space<vmem>>, %arg7: memref<16x128xf32, #tpu.memory_space<vmem>>, %arg8: memref<32x128xf32, #tpu.memory_space<vmem>>, %arg9: memref<32x128xf32, #tpu.memory_space<vmem>>, %arg10: memref<1x128xf32, #tpu.memory_space<vmem>>, %arg11: memref<2x128xf32, #tpu.memory_space<vmem>>) attributes {dimension_semantics = [], scalar_prefetch = 0 : i64, scratch_operands = 0 : i64, tpu.core_type = #tpu.core_type<tc>} {
    %c0 = arith.constant 0 : index
    %c0_0 = arith.constant 0 : index
    %c0_1 = arith.constant 0 : index
    %0 = vector.load %arg0[%c0, %c0_0, %c0_1] : memref<2x64x16xf32, #tpu.memory_space<vmem>>, vector<1x64x16xf32>
    %1 = vector.shape_cast %0 : vector<1x64x16xf32> to vector<64x16xf32>
    %cst = arith.constant dense<0.000000e+00> : vector<16xf32>
    %2 = vector.multi_reduction <add>, %1, %cst [0] : vector<64x16xf32> to vector<16xf32>
    %3 = vector.shape_cast %2 : vector<16xf32> to vector<1x16xf32>
    %cst_2 = arith.constant 6.400000e+01 : f32
    %4 = vector.broadcast %cst_2 : f32 to vector<1x16xf32>
    %5 = arith.divf %3, %4 : vector<1x16xf32>
    %c0_3 = arith.constant 0 : index
    %c0_4 = arith.constant 0 : index
    %c0_5 = arith.constant 0 : index
    %6 = vector.load %arg1[%c0_3, %c0_4, %c0_5] : memref<9x16x64xf32, #tpu.memory_space<vmem>>, vector<1x16x64xf32>
    %7 = vector.shape_cast %6 : vector<1x16x64xf32> to vector<16x64xf32>
    %cst_6 = arith.constant dense<0.000000e+00> : vector<16x16xf32>
    %8 = tpu.matmul %7, %1, %cst_6 {dimension_numbers = #tpu.dot_dimension_numbers<[1], [0], [0], [1], [0, 0, 1, 1], [], []>} : vector<16x64xf32>, vector<64x16xf32>, vector<16x16xf32> -> vector<16x16xf32>
    %c0_7 = arith.constant 0 : index
    %c0_8 = arith.constant 0 : index
    %c0_9 = arith.constant 0 : index
    %9 = vector.load %arg2[%c0_7, %c0_8, %c0_9] : memref<9x16x32xf32, #tpu.memory_space<vmem>>, vector<1x16x32xf32>
    %10 = vector.shape_cast %9 : vector<1x16x32xf32> to vector<16x32xf32>
    %cst_10 = arith.constant dense<0.000000e+00> : vector<16x32xf32>
    %11 = tpu.matmul %8, %10, %cst_10 {dimension_numbers = #tpu.dot_dimension_numbers<[1], [0], [0], [1], [0, 0, 1, 1], [], []>} : vector<16x16xf32>, vector<16x32xf32>, vector<16x32xf32> -> vector<16x32xf32>
    %c1 = arith.constant 1 : index
    %c0_11 = arith.constant 0 : index
    %c0_12 = arith.constant 0 : index
    %12 = vector.load %arg1[%c1, %c0_11, %c0_12] : memref<9x16x64xf32, #tpu.memory_space<vmem>>, vector<1x16x64xf32>
    %13 = vector.shape_cast %12 : vector<1x16x64xf32> to vector<16x64xf32>
    %cst_13 = arith.constant dense<0.000000e+00> : vector<16x16xf32>
    %14 = tpu.matmul %13, %1, %cst_13 {dimension_numbers = #tpu.dot_dimension_numbers<[1], [0], [0], [1], [0, 0, 1, 1], [], []>} : vector<16x64xf32>, vector<64x16xf32>, vector<16x16xf32> -> vector<16x16xf32>
    %c1_14 = arith.constant 1 : index
    %c0_15 = arith.constant 0 : index
    %c0_16 = arith.constant 0 : index
    %15 = vector.load %arg2[%c1_14, %c0_15, %c0_16] : memref<9x16x32xf32, #tpu.memory_space<vmem>>, vector<1x16x32xf32>
    %16 = vector.shape_cast %15 : vector<1x16x32xf32> to vector<16x32xf32>
    %cst_17 = arith.constant dense<0.000000e+00> : vector<16x32xf32>
    %17 = tpu.matmul %14, %16, %cst_17 {dimension_numbers = #tpu.dot_dimension_numbers<[1], [0], [0], [1], [0, 0, 1, 1], [], []>} : vector<16x16xf32>, vector<16x32xf32>, vector<16x32xf32> -> vector<16x32xf32>
    %18 = arith.addf %11, %17 : vector<16x32xf32>
    %c2 = arith.constant 2 : index
    %c0_18 = arith.constant 0 : index
    %c0_19 = arith.constant 0 : index
    %19 = vector.load %arg1[%c2, %c0_18, %c0_19] : memref<9x16x64xf32, #tpu.memory_space<vmem>>, vector<1x16x64xf32>
    %20 = vector.shape_cast %19 : vector<1x16x64xf32> to vector<16x64xf32>
    %cst_20 = arith.constant dense<0.000000e+00> : vector<16x16xf32>
    %21 = tpu.matmul %20, %1, %cst_20 {dimension_numbers = #tpu.dot_dimension_numbers<[1], [0], [0], [1], [0, 0, 1, 1], [], []>} : vector<16x64xf32>, vector<64x16xf32>, vector<16x16xf32> -> vector<16x16xf32>
    %c2_21 = arith.constant 2 : index
    %c0_22 = arith.constant 0 : index
    %c0_23 = arith.constant 0 : index
    %22 = vector.load %arg2[%c2_21, %c0_22, %c0_23] : memref<9x16x32xf32, #tpu.memory_space<vmem>>, vector<1x16x32xf32>
    %23 = vector.shape_cast %22 : vector<1x16x32xf32> to vector<16x32xf32>
    %cst_24 = arith.constant dense<0.000000e+00> : vector<16x32xf32>
    %24 = tpu.matmul %21, %23, %cst_24 {dimension_numbers = #tpu.dot_dimension_numbers<[1], [0], [0], [1], [0, 0, 1, 1], [], []>} : vector<16x16xf32>, vector<16x32xf32>, vector<16x32xf32> -> vector<16x32xf32>
    %25 = arith.addf %18, %24 : vector<16x32xf32>
    %c3 = arith.constant 3 : index
    %c0_25 = arith.constant 0 : index
    %c0_26 = arith.constant 0 : index
    %26 = vector.load %arg1[%c3, %c0_25, %c0_26] : memref<9x16x64xf32, #tpu.memory_space<vmem>>, vector<1x16x64xf32>
    %27 = vector.shape_cast %26 : vector<1x16x64xf32> to vector<16x64xf32>
    %cst_27 = arith.constant dense<0.000000e+00> : vector<16x16xf32>
    %28 = tpu.matmul %27, %1, %cst_27 {dimension_numbers = #tpu.dot_dimension_numbers<[1], [0], [0], [1], [0, 0, 1, 1], [], []>} : vector<16x64xf32>, vector<64x16xf32>, vector<16x16xf32> -> vector<16x16xf32>
    %c3_28 = arith.constant 3 : index
    %c0_29 = arith.constant 0 : index
    %c0_30 = arith.constant 0 : index
    %29 = vector.load %arg2[%c3_28, %c0_29, %c0_30] : memref<9x16x32xf32, #tpu.memory_space<vmem>>, vector<1x16x32xf32>
    %30 = vector.shape_cast %29 : vector<1x16x32xf32> to vector<16x32xf32>
    %cst_31 = arith.constant dense<0.000000e+00> : vector<16x32xf32>
    %31 = tpu.matmul %28, %30, %cst_31 {dimension_numbers = #tpu.dot_dimension_numbers<[1], [0], [0], [1], [0, 0, 1, 1], [], []>} : vector<16x16xf32>, vector<16x32xf32>, vector<16x32xf32> -> vector<16x32xf32>
    %32 = arith.addf %25, %31 : vector<16x32xf32>
    %c4 = arith.constant 4 : index
    %c0_32 = arith.constant 0 : index
    %c0_33 = arith.constant 0 : index
    %33 = vector.load %arg1[%c4, %c0_32, %c0_33] : memref<9x16x64xf32, #tpu.memory_space<vmem>>, vector<1x16x64xf32>
    %34 = vector.shape_cast %33 : vector<1x16x64xf32> to vector<16x64xf32>
    %cst_34 = arith.constant dense<0.000000e+00> : vector<16x16xf32>
    %35 = tpu.matmul %34, %1, %cst_34 {dimension_numbers = #tpu.dot_dimension_numbers<[1], [0], [0], [1], [0, 0, 1, 1], [], []>} : vector<16x64xf32>, vector<64x16xf32>, vector<16x16xf32> -> vector<16x16xf32>
    %c4_35 = arith.constant 4 : index
    %c0_36 = arith.constant 0 : index
    %c0_37 = arith.constant 0 : index
    %36 = vector.load %arg2[%c4_35, %c0_36, %c0_37] : memref<9x16x32xf32, #tpu.memory_space<vmem>>, vector<1x16x32xf32>
    %37 = vector.shape_cast %36 : vector<1x16x32xf32> to vector<16x32xf32>
    %cst_38 = arith.constant dense<0.000000e+00> : vector<16x32xf32>
    %38 = tpu.matmul %35, %37, %cst_38 {dimension_numbers = #tpu.dot_dimension_numbers<[1], [0], [0], [1], [0, 0, 1, 1], [], []>} : vector<16x16xf32>, vector<16x32xf32>, vector<16x32xf32> -> vector<16x32xf32>
    %39 = arith.addf %32, %38 : vector<16x32xf32>
    %c5 = arith.constant 5 : index
    %c0_39 = arith.constant 0 : index
    %c0_40 = arith.constant 0 : index
    %40 = vector.load %arg1[%c5, %c0_39, %c0_40] : memref<9x16x64xf32, #tpu.memory_space<vmem>>, vector<1x16x64xf32>
    %41 = vector.shape_cast %40 : vector<1x16x64xf32> to vector<16x64xf32>
    %cst_41 = arith.constant dense<0.000000e+00> : vector<16x16xf32>
    %42 = tpu.matmul %41, %1, %cst_41 {dimension_numbers = #tpu.dot_dimension_numbers<[1], [0], [0], [1], [0, 0, 1, 1], [], []>} : vector<16x64xf32>, vector<64x16xf32>, vector<16x16xf32> -> vector<16x16xf32>
    %c5_42 = arith.constant 5 : index
    %c0_43 = arith.constant 0 : index
    %c0_44 = arith.constant 0 : index
    %43 = vector.load %arg2[%c5_42, %c0_43, %c0_44] : memref<9x16x32xf32, #tpu.memory_space<vmem>>, vector<1x16x32xf32>
    %44 = vector.shape_cast %43 : vector<1x16x32xf32> to vector<16x32xf32>
    %cst_45 = arith.constant dense<0.000000e+00> : vector<16x32xf32>
    %45 = tpu.matmul %42, %44, %cst_45 {dimension_numbers = #tpu.dot_dimension_numbers<[1], [0], [0], [1], [0, 0, 1, 1], [], []>} : vector<16x16xf32>, vector<16x32xf32>, vector<16x32xf32> -> vector<16x32xf32>
    %46 = arith.addf %39, %45 : vector<16x32xf32>
    %c6 = arith.constant 6 : index
    %c0_46 = arith.constant 0 : index
    %c0_47 = arith.constant 0 : index
    %47 = vector.load %arg1[%c6, %c0_46, %c0_47] : memref<9x16x64xf32, #tpu.memory_space<vmem>>, vector<1x16x64xf32>
    %48 = vector.shape_cast %47 : vector<1x16x64xf32> to vector<16x64xf32>
    %cst_48 = arith.constant dense<0.000000e+00> : vector<16x16xf32>
    %49 = tpu.matmul %48, %1, %cst_48 {dimension_numbers = #tpu.dot_dimension_numbers<[1], [0], [0], [1], [0, 0, 1, 1], [], []>} : vector<16x64xf32>, vector<64x16xf32>, vector<16x16xf32> -> vector<16x16xf32>
    %c6_49 = arith.constant 6 : index
    %c0_50 = arith.constant 0 : index
    %c0_51 = arith.constant 0 : index
    %50 = vector.load %arg2[%c6_49, %c0_50, %c0_51] : memref<9x16x32xf32, #tpu.memory_space<vmem>>, vector<1x16x32xf32>
    %51 = vector.shape_cast %50 : vector<1x16x32xf32> to vector<16x32xf32>
    %cst_52 = arith.constant dense<0.000000e+00> : vector<16x32xf32>
    %52 = tpu.matmul %49, %51, %cst_52 {dimension_numbers = #tpu.dot_dimension_numbers<[1], [0], [0], [1], [0, 0, 1, 1], [], []>} : vector<16x16xf32>, vector<16x32xf32>, vector<16x32xf32> -> vector<16x32xf32>
    %53 = arith.addf %46, %52 : vector<16x32xf32>
    %c7 = arith.constant 7 : index
    %c0_53 = arith.constant 0 : index
    %c0_54 = arith.constant 0 : index
    %54 = vector.load %arg1[%c7, %c0_53, %c0_54] : memref<9x16x64xf32, #tpu.memory_space<vmem>>, vector<1x16x64xf32>
    %55 = vector.shape_cast %54 : vector<1x16x64xf32> to vector<16x64xf32>
    %cst_55 = arith.constant dense<0.000000e+00> : vector<16x16xf32>
    %56 = tpu.matmul %55, %1, %cst_55 {dimension_numbers = #tpu.dot_dimension_numbers<[1], [0], [0], [1], [0, 0, 1, 1], [], []>} : vector<16x64xf32>, vector<64x16xf32>, vector<16x16xf32> -> vector<16x16xf32>
    %c7_56 = arith.constant 7 : index
    %c0_57 = arith.constant 0 : index
    %c0_58 = arith.constant 0 : index
    %57 = vector.load %arg2[%c7_56, %c0_57, %c0_58] : memref<9x16x32xf32, #tpu.memory_space<vmem>>, vector<1x16x32xf32>
    %58 = vector.shape_cast %57 : vector<1x16x32xf32> to vector<16x32xf32>
    %cst_59 = arith.constant dense<0.000000e+00> : vector<16x32xf32>
    %59 = tpu.matmul %56, %58, %cst_59 {dimension_numbers = #tpu.dot_dimension_numbers<[1], [0], [0], [1], [0, 0, 1, 1], [], []>} : vector<16x16xf32>, vector<16x32xf32>, vector<16x32xf32> -> vector<16x32xf32>
    %60 = arith.addf %53, %59 : vector<16x32xf32>
    %c8 = arith.constant 8 : index
    %c0_60 = arith.constant 0 : index
    %c0_61 = arith.constant 0 : index
    %61 = vector.load %arg1[%c8, %c0_60, %c0_61] : memref<9x16x64xf32, #tpu.memory_space<vmem>>, vector<1x16x64xf32>
    %62 = vector.shape_cast %61 : vector<1x16x64xf32> to vector<16x64xf32>
    %cst_62 = arith.constant dense<0.000000e+00> : vector<16x16xf32>
    %63 = tpu.matmul %62, %1, %cst_62 {dimension_numbers = #tpu.dot_dimension_numbers<[1], [0], [0], [1], [0, 0, 1, 1], [], []>} : vector<16x64xf32>, vector<64x16xf32>, vector<16x16xf32> -> vector<16x16xf32>
    %c8_63 = arith.constant 8 : index
    %c0_64 = arith.constant 0 : index
    %c0_65 = arith.constant 0 : index
    %64 = vector.load %arg2[%c8_63, %c0_64, %c0_65] : memref<9x16x32xf32, #tpu.memory_space<vmem>>, vector<1x16x32xf32>
    %65 = vector.shape_cast %64 : vector<1x16x32xf32> to vector<16x32xf32>
    %cst_66 = arith.constant dense<0.000000e+00> : vector<16x32xf32>
    %66 = tpu.matmul %63, %65, %cst_66 {dimension_numbers = #tpu.dot_dimension_numbers<[1], [0], [0], [1], [0, 0, 1, 1], [], []>} : vector<16x16xf32>, vector<16x32xf32>, vector<16x32xf32> -> vector<16x32xf32>
    %67 = arith.addf %60, %66 : vector<16x32xf32>
    %c0_67 = arith.constant 0 : index
    %c0_68 = arith.constant 0 : index
    %68 = vector.load %arg3[%c0_67, %c0_68] : memref<1x32xf32, #tpu.memory_space<vmem>>, vector<1x32xf32>
    %69 = vector.broadcast %68 : vector<1x32xf32> to vector<16x32xf32>
    %70 = arith.addf %67, %69 : vector<16x32xf32>
    %cst_69 = arith.constant 0.000000e+00 : f32
    %71 = vector.broadcast %cst_69 : f32 to vector<16x32xf32>
    %72 = arith.maximumf %70, %71 : vector<16x32xf32>
    %cst_70 = arith.constant dense<0.000000e+00> : vector<32xf32>
    %73 = vector.multi_reduction <add>, %72, %cst_70 [0] : vector<16x32xf32> to vector<32xf32>
    %74 = vector.shape_cast %73 : vector<32xf32> to vector<1x32xf32>
    %cst_71 = arith.constant 1.600000e+01 : f32
    %75 = vector.broadcast %cst_71 : f32 to vector<1x32xf32>
    %76 = arith.divf %74, %75 : vector<1x32xf32>
    %c0_72 = arith.constant 0 : index
    %c0_73 = arith.constant 0 : index
    %c0_74 = arith.constant 0 : index
    %77 = vector.load %arg4[%c0_72, %c0_73, %c0_74] : memref<4x9x16xf32, #tpu.memory_space<vmem>>, vector<1x9x16xf32>
    %78 = vector.shape_cast %77 : vector<1x9x16xf32> to vector<9x16xf32>
    %cst_75 = arith.constant dense<0.000000e+00> : vector<9x32xf32>
    %79 = tpu.matmul %78, %72, %cst_75 {dimension_numbers = #tpu.dot_dimension_numbers<[1], [0], [0], [1], [0, 0, 1, 1], [], []>} : vector<9x16xf32>, vector<16x32xf32>, vector<9x32xf32> -> vector<9x32xf32>
    %c0_76 = arith.constant 0 : index
    %c0_77 = arith.constant 0 : index
    %c0_78 = arith.constant 0 : index
    %80 = vector.load %arg5[%c0_76, %c0_77, %c0_78] : memref<4x32x32xf32, #tpu.memory_space<vmem>>, vector<1x32x32xf32>
    %81 = vector.shape_cast %80 : vector<1x32x32xf32> to vector<32x32xf32>
    %cst_79 = arith.constant dense<0.000000e+00> : vector<9x32xf32>
    %82 = tpu.matmul %79, %81, %cst_79 {dimension_numbers = #tpu.dot_dimension_numbers<[1], [0], [0], [1], [0, 0, 1, 1], [], []>} : vector<9x32xf32>, vector<32x32xf32>, vector<9x32xf32> -> vector<9x32xf32>
    %c1_80 = arith.constant 1 : index
    %c0_81 = arith.constant 0 : index
    %c0_82 = arith.constant 0 : index
    %83 = vector.load %arg4[%c1_80, %c0_81, %c0_82] : memref<4x9x16xf32, #tpu.memory_space<vmem>>, vector<1x9x16xf32>
    %84 = vector.shape_cast %83 : vector<1x9x16xf32> to vector<9x16xf32>
    %cst_83 = arith.constant dense<0.000000e+00> : vector<9x32xf32>
    %85 = tpu.matmul %84, %72, %cst_83 {dimension_numbers = #tpu.dot_dimension_numbers<[1], [0], [0], [1], [0, 0, 1, 1], [], []>} : vector<9x16xf32>, vector<16x32xf32>, vector<9x32xf32> -> vector<9x32xf32>
    %c1_84 = arith.constant 1 : index
    %c0_85 = arith.constant 0 : index
    %c0_86 = arith.constant 0 : index
    %86 = vector.load %arg5[%c1_84, %c0_85, %c0_86] : memref<4x32x32xf32, #tpu.memory_space<vmem>>, vector<1x32x32xf32>
    %87 = vector.shape_cast %86 : vector<1x32x32xf32> to vector<32x32xf32>
    %cst_87 = arith.constant dense<0.000000e+00> : vector<9x32xf32>
    %88 = tpu.matmul %85, %87, %cst_87 {dimension_numbers = #tpu.dot_dimension_numbers<[1], [0], [0], [1], [0, 0, 1, 1], [], []>} : vector<9x32xf32>, vector<32x32xf32>, vector<9x32xf32> -> vector<9x32xf32>
    %89 = arith.addf %82, %88 : vector<9x32xf32>
    %c2_88 = arith.constant 2 : index
    %c0_89 = arith.constant 0 : index
    %c0_90 = arith.constant 0 : index
    %90 = vector.load %arg4[%c2_88, %c0_89, %c0_90] : memref<4x9x16xf32, #tpu.memory_space<vmem>>, vector<1x9x16xf32>
    %91 = vector.shape_cast %90 : vector<1x9x16xf32> to vector<9x16xf32>
    %cst_91 = arith.constant dense<0.000000e+00> : vector<9x32xf32>
    %92 = tpu.matmul %91, %72, %cst_91 {dimension_numbers = #tpu.dot_dimension_numbers<[1], [0], [0], [1], [0, 0, 1, 1], [], []>} : vector<9x16xf32>, vector<16x32xf32>, vector<9x32xf32> -> vector<9x32xf32>
    %c2_92 = arith.constant 2 : index
    %c0_93 = arith.constant 0 : index
    %c0_94 = arith.constant 0 : index
    %93 = vector.load %arg5[%c2_92, %c0_93, %c0_94] : memref<4x32x32xf32, #tpu.memory_space<vmem>>, vector<1x32x32xf32>
    %94 = vector.shape_cast %93 : vector<1x32x32xf32> to vector<32x32xf32>
    %cst_95 = arith.constant dense<0.000000e+00> : vector<9x32xf32>
    %95 = tpu.matmul %92, %94, %cst_95 {dimension_numbers = #tpu.dot_dimension_numbers<[1], [0], [0], [1], [0, 0, 1, 1], [], []>} : vector<9x32xf32>, vector<32x32xf32>, vector<9x32xf32> -> vector<9x32xf32>
    %96 = arith.addf %89, %95 : vector<9x32xf32>
    %c3_96 = arith.constant 3 : index
    %c0_97 = arith.constant 0 : index
    %c0_98 = arith.constant 0 : index
    %97 = vector.load %arg4[%c3_96, %c0_97, %c0_98] : memref<4x9x16xf32, #tpu.memory_space<vmem>>, vector<1x9x16xf32>
    %98 = vector.shape_cast %97 : vector<1x9x16xf32> to vector<9x16xf32>
    %cst_99 = arith.constant dense<0.000000e+00> : vector<9x32xf32>
    %99 = tpu.matmul %98, %72, %cst_99 {dimension_numbers = #tpu.dot_dimension_numbers<[1], [0], [0], [1], [0, 0, 1, 1], [], []>} : vector<9x16xf32>, vector<16x32xf32>, vector<9x32xf32> -> vector<9x32xf32>
    %c3_100 = arith.constant 3 : index
    %c0_101 = arith.constant 0 : index
    %c0_102 = arith.constant 0 : index
    %100 = vector.load %arg5[%c3_100, %c0_101, %c0_102] : memref<4x32x32xf32, #tpu.memory_space<vmem>>, vector<1x32x32xf32>
    %101 = vector.shape_cast %100 : vector<1x32x32xf32> to vector<32x32xf32>
    %cst_103 = arith.constant dense<0.000000e+00> : vector<9x32xf32>
    %102 = tpu.matmul %99, %101, %cst_103 {dimension_numbers = #tpu.dot_dimension_numbers<[1], [0], [0], [1], [0, 0, 1, 1], [], []>} : vector<9x32xf32>, vector<32x32xf32>, vector<9x32xf32> -> vector<9x32xf32>
    %103 = arith.addf %96, %102 : vector<9x32xf32>
    %c0_104 = arith.constant 0 : index
    %c0_105 = arith.constant 0 : index
    %104 = vector.load %arg6[%c0_104, %c0_105] : memref<1x32xf32, #tpu.memory_space<vmem>>, vector<1x32xf32>
    %105 = vector.broadcast %104 : vector<1x32xf32> to vector<9x32xf32>
    %106 = arith.addf %103, %105 : vector<9x32xf32>
    %cst_106 = arith.constant 0.000000e+00 : f32
    %107 = vector.broadcast %cst_106 : f32 to vector<9x32xf32>
    %108 = arith.maximumf %106, %107 : vector<9x32xf32>
    %cst_107 = arith.constant dense<0.000000e+00> : vector<32xf32>
    %109 = vector.multi_reduction <add>, %108, %cst_107 [0] : vector<9x32xf32> to vector<32xf32>
    %110 = vector.shape_cast %109 : vector<32xf32> to vector<1x32xf32>
    %cst_108 = arith.constant 9.000000e+00 : f32
    %111 = vector.broadcast %cst_108 : f32 to vector<1x32xf32>
    %112 = arith.divf %110, %111 : vector<1x32xf32>
    %c0_109 = arith.constant 0 : index
    %c0_110 = arith.constant 0 : index
    %113 = vector.load %arg7[%c0_109, %c0_110] : memref<16x128xf32, #tpu.memory_space<vmem>>, vector<16x128xf32>
    %cst_111 = arith.constant dense<0.000000e+00> : vector<1x128xf32>
    %114 = tpu.matmul %5, %113, %cst_111 {dimension_numbers = #tpu.dot_dimension_numbers<[1], [0], [0], [1], [0, 0, 1, 1], [], []>} : vector<1x16xf32>, vector<16x128xf32>, vector<1x128xf32> -> vector<1x128xf32>
    %c0_112 = arith.constant 0 : index
    %c0_113 = arith.constant 0 : index
    %115 = vector.load %arg8[%c0_112, %c0_113] : memref<32x128xf32, #tpu.memory_space<vmem>>, vector<32x128xf32>
    %cst_114 = arith.constant dense<0.000000e+00> : vector<1x128xf32>
    %116 = tpu.matmul %76, %115, %cst_114 {dimension_numbers = #tpu.dot_dimension_numbers<[1], [0], [0], [1], [0, 0, 1, 1], [], []>} : vector<1x32xf32>, vector<32x128xf32>, vector<1x128xf32> -> vector<1x128xf32>
    %117 = arith.addf %114, %116 : vector<1x128xf32>
    %c0_115 = arith.constant 0 : index
    %c0_116 = arith.constant 0 : index
    %118 = vector.load %arg9[%c0_115, %c0_116] : memref<32x128xf32, #tpu.memory_space<vmem>>, vector<32x128xf32>
    %cst_117 = arith.constant dense<0.000000e+00> : vector<1x128xf32>
    %119 = tpu.matmul %112, %118, %cst_117 {dimension_numbers = #tpu.dot_dimension_numbers<[1], [0], [0], [1], [0, 0, 1, 1], [], []>} : vector<1x32xf32>, vector<32x128xf32>, vector<1x128xf32> -> vector<1x128xf32>
    %120 = arith.addf %117, %119 : vector<1x128xf32>
    %c0_118 = arith.constant 0 : index
    %c0_119 = arith.constant 0 : index
    %121 = vector.load %arg10[%c0_118, %c0_119] : memref<1x128xf32, #tpu.memory_space<vmem>>, vector<1x128xf32>
    %122 = arith.addf %120, %121 : vector<1x128xf32>
    %c0_120 = arith.constant 0 : index
    %c0_121 = arith.constant 0 : index
    %123 = vector.load %arg11[%c0_120, %c0_121] : memref<2x128xf32, #tpu.memory_space<vmem>>, vector<1x128xf32>
    tpu.vector_store %arg11[%c0_120, %c0_121], %122 {strides = array<i32>} : memref<2x128xf32, #tpu.memory_space<vmem>>, vector<1x128xf32>,
    %c1_122 = arith.constant 1 : index
    %c0_123 = arith.constant 0 : index
    %c0_124 = arith.constant 0 : index
    %124 = vector.load %arg0[%c1_122, %c0_123, %c0_124] : memref<2x64x16xf32, #tpu.memory_space<vmem>>, vector<1x64x16xf32>
    %125 = vector.shape_cast %124 : vector<1x64x16xf32> to vector<64x16xf32>
    %cst_125 = arith.constant dense<0.000000e+00> : vector<16xf32>
    %126 = vector.multi_reduction <add>, %125, %cst_125 [0] : vector<64x16xf32> to vector<16xf32>
    %127 = vector.shape_cast %126 : vector<16xf32> to vector<1x16xf32>
    %cst_126 = arith.constant 6.400000e+01 : f32
    %128 = vector.broadcast %cst_126 : f32 to vector<1x16xf32>
    %129 = arith.divf %127, %128 : vector<1x16xf32>
    %c0_127 = arith.constant 0 : index
    %c0_128 = arith.constant 0 : index
    %c0_129 = arith.constant 0 : index
    %130 = vector.load %arg1[%c0_127, %c0_128, %c0_129] : memref<9x16x64xf32, #tpu.memory_space<vmem>>, vector<1x16x64xf32>
    %131 = vector.shape_cast %130 : vector<1x16x64xf32> to vector<16x64xf32>
    %cst_130 = arith.constant dense<0.000000e+00> : vector<16x16xf32>
    %132 = tpu.matmul %131, %125, %cst_130 {dimension_numbers = #tpu.dot_dimension_numbers<[1], [0], [0], [1], [0, 0, 1, 1], [], []>} : vector<16x64xf32>, vector<64x16xf32>, vector<16x16xf32> -> vector<16x16xf32>
    %c0_131 = arith.constant 0 : index
    %c0_132 = arith.constant 0 : index
    %c0_133 = arith.constant 0 : index
    %133 = vector.load %arg2[%c0_131, %c0_132, %c0_133] : memref<9x16x32xf32, #tpu.memory_space<vmem>>, vector<1x16x32xf32>
    %134 = vector.shape_cast %133 : vector<1x16x32xf32> to vector<16x32xf32>
    %cst_134 = arith.constant dense<0.000000e+00> : vector<16x32xf32>
    %135 = tpu.matmul %132, %134, %cst_134 {dimension_numbers = #tpu.dot_dimension_numbers<[1], [0], [0], [1], [0, 0, 1, 1], [], []>} : vector<16x16xf32>, vector<16x32xf32>, vector<16x32xf32> -> vector<16x32xf32>
    %c1_135 = arith.constant 1 : index
    %c0_136 = arith.constant 0 : index
    %c0_137 = arith.constant 0 : index
    %136 = vector.load %arg1[%c1_135, %c0_136, %c0_137] : memref<9x16x64xf32, #tpu.memory_space<vmem>>, vector<1x16x64xf32>
    %137 = vector.shape_cast %136 : vector<1x16x64xf32> to vector<16x64xf32>
    %cst_138 = arith.constant dense<0.000000e+00> : vector<16x16xf32>
    %138 = tpu.matmul %137, %125, %cst_138 {dimension_numbers = #tpu.dot_dimension_numbers<[1], [0], [0], [1], [0, 0, 1, 1], [], []>} : vector<16x64xf32>, vector<64x16xf32>, vector<16x16xf32> -> vector<16x16xf32>
    %c1_139 = arith.constant 1 : index
    %c0_140 = arith.constant 0 : index
    %c0_141 = arith.constant 0 : index
    %139 = vector.load %arg2[%c1_139, %c0_140, %c0_141] : memref<9x16x32xf32, #tpu.memory_space<vmem>>, vector<1x16x32xf32>
    %140 = vector.shape_cast %139 : vector<1x16x32xf32> to vector<16x32xf32>
    %cst_142 = arith.constant dense<0.000000e+00> : vector<16x32xf32>
    %141 = tpu.matmul %138, %140, %cst_142 {dimension_numbers = #tpu.dot_dimension_numbers<[1], [0], [0], [1], [0, 0, 1, 1], [], []>} : vector<16x16xf32>, vector<16x32xf32>, vector<16x32xf32> -> vector<16x32xf32>
    %142 = arith.addf %135, %141 : vector<16x32xf32>
    %c2_143 = arith.constant 2 : index
    %c0_144 = arith.constant 0 : index
    %c0_145 = arith.constant 0 : index
    %143 = vector.load %arg1[%c2_143, %c0_144, %c0_145] : memref<9x16x64xf32, #tpu.memory_space<vmem>>, vector<1x16x64xf32>
    %144 = vector.shape_cast %143 : vector<1x16x64xf32> to vector<16x64xf32>
    %cst_146 = arith.constant dense<0.000000e+00> : vector<16x16xf32>
    %145 = tpu.matmul %144, %125, %cst_146 {dimension_numbers = #tpu.dot_dimension_numbers<[1], [0], [0], [1], [0, 0, 1, 1], [], []>} : vector<16x64xf32>, vector<64x16xf32>, vector<16x16xf32> -> vector<16x16xf32>
    %c2_147 = arith.constant 2 : index
    %c0_148 = arith.constant 0 : index
    %c0_149 = arith.constant 0 : index
    %146 = vector.load %arg2[%c2_147, %c0_148, %c0_149] : memref<9x16x32xf32, #tpu.memory_space<vmem>>, vector<1x16x32xf32>
    %147 = vector.shape_cast %146 : vector<1x16x32xf32> to vector<16x32xf32>
    %cst_150 = arith.constant dense<0.000000e+00> : vector<16x32xf32>
    %148 = tpu.matmul %145, %147, %cst_150 {dimension_numbers = #tpu.dot_dimension_numbers<[1], [0], [0], [1], [0, 0, 1, 1], [], []>} : vector<16x16xf32>, vector<16x32xf32>, vector<16x32xf32> -> vector<16x32xf32>
    %149 = arith.addf %142, %148 : vector<16x32xf32>
    %c3_151 = arith.constant 3 : index
    %c0_152 = arith.constant 0 : index
    %c0_153 = arith.constant 0 : index
    %150 = vector.load %arg1[%c3_151, %c0_152, %c0_153] : memref<9x16x64xf32, #tpu.memory_space<vmem>>, vector<1x16x64xf32>
    %151 = vector.shape_cast %150 : vector<1x16x64xf32> to vector<16x64xf32>
    %cst_154 = arith.constant dense<0.000000e+00> : vector<16x16xf32>
    %152 = tpu.matmul %151, %125, %cst_154 {dimension_numbers = #tpu.dot_dimension_numbers<[1], [0], [0], [1], [0, 0, 1, 1], [], []>} : vector<16x64xf32>, vector<64x16xf32>, vector<16x16xf32> -> vector<16x16xf32>
    %c3_155 = arith.constant 3 : index
    %c0_156 = arith.constant 0 : index
    %c0_157 = arith.constant 0 : index
    %153 = vector.load %arg2[%c3_155, %c0_156, %c0_157] : memref<9x16x32xf32, #tpu.memory_space<vmem>>, vector<1x16x32xf32>
    %154 = vector.shape_cast %153 : vector<1x16x32xf32> to vector<16x32xf32>
    %cst_158 = arith.constant dense<0.000000e+00> : vector<16x32xf32>
    %155 = tpu.matmul %152, %154, %cst_158 {dimension_numbers = #tpu.dot_dimension_numbers<[1], [0], [0], [1], [0, 0, 1, 1], [], []>} : vector<16x16xf32>, vector<16x32xf32>, vector<16x32xf32> -> vector<16x32xf32>
    %156 = arith.addf %149, %155 : vector<16x32xf32>
    %c4_159 = arith.constant 4 : index
    %c0_160 = arith.constant 0 : index
    %c0_161 = arith.constant 0 : index
    %157 = vector.load %arg1[%c4_159, %c0_160, %c0_161] : memref<9x16x64xf32, #tpu.memory_space<vmem>>, vector<1x16x64xf32>
    %158 = vector.shape_cast %157 : vector<1x16x64xf32> to vector<16x64xf32>
    %cst_162 = arith.constant dense<0.000000e+00> : vector<16x16xf32>
    %159 = tpu.matmul %158, %125, %cst_162 {dimension_numbers = #tpu.dot_dimension_numbers<[1], [0], [0], [1], [0, 0, 1, 1], [], []>} : vector<16x64xf32>, vector<64x16xf32>, vector<16x16xf32> -> vector<16x16xf32>
    %c4_163 = arith.constant 4 : index
    %c0_164 = arith.constant 0 : index
    %c0_165 = arith.constant 0 : index
    %160 = vector.load %arg2[%c4_163, %c0_164, %c0_165] : memref<9x16x32xf32, #tpu.memory_space<vmem>>, vector<1x16x32xf32>
    %161 = vector.shape_cast %160 : vector<1x16x32xf32> to vector<16x32xf32>
    %cst_166 = arith.constant dense<0.000000e+00> : vector<16x32xf32>
    %162 = tpu.matmul %159, %161, %cst_166 {dimension_numbers = #tpu.dot_dimension_numbers<[1], [0], [0], [1], [0, 0, 1, 1], [], []>} : vector<16x16xf32>, vector<16x32xf32>, vector<16x32xf32> -> vector<16x32xf32>
    %163 = arith.addf %156, %162 : vector<16x32xf32>
    %c5_167 = arith.constant 5 : index
    %c0_168 = arith.constant 0 : index
    %c0_169 = arith.constant 0 : index
    %164 = vector.load %arg1[%c5_167, %c0_168, %c0_169] : memref<9x16x64xf32, #tpu.memory_space<vmem>>, vector<1x16x64xf32>
    %165 = vector.shape_cast %164 : vector<1x16x64xf32> to vector<16x64xf32>
    %cst_170 = arith.constant dense<0.000000e+00> : vector<16x16xf32>
    %166 = tpu.matmul %165, %125, %cst_170 {dimension_numbers = #tpu.dot_dimension_numbers<[1], [0], [0], [1], [0, 0, 1, 1], [], []>} : vector<16x64xf32>, vector<64x16xf32>, vector<16x16xf32> -> vector<16x16xf32>
    %c5_171 = arith.constant 5 : index
    %c0_172 = arith.constant 0 : index
    %c0_173 = arith.constant 0 : index
    %167 = vector.load %arg2[%c5_171, %c0_172, %c0_173] : memref<9x16x32xf32, #tpu.memory_space<vmem>>, vector<1x16x32xf32>
    %168 = vector.shape_cast %167 : vector<1x16x32xf32> to vector<16x32xf32>
    %cst_174 = arith.constant dense<0.000000e+00> : vector<16x32xf32>
    %169 = tpu.matmul %166, %168, %cst_174 {dimension_numbers = #tpu.dot_dimension_numbers<[1], [0], [0], [1], [0, 0, 1, 1], [], []>} : vector<16x16xf32>, vector<16x32xf32>, vector<16x32xf32> -> vector<16x32xf32>
    %170 = arith.addf %163, %169 : vector<16x32xf32>
    %c6_175 = arith.constant 6 : index
    %c0_176 = arith.constant 0 : index
    %c0_177 = arith.constant 0 : index
    %171 = vector.load %arg1[%c6_175, %c0_176, %c0_177] : memref<9x16x64xf32, #tpu.memory_space<vmem>>, vector<1x16x64xf32>
    %172 = vector.shape_cast %171 : vector<1x16x64xf32> to vector<16x64xf32>
    %cst_178 = arith.constant dense<0.000000e+00> : vector<16x16xf32>
    %173 = tpu.matmul %172, %125, %cst_178 {dimension_numbers = #tpu.dot_dimension_numbers<[1], [0], [0], [1], [0, 0, 1, 1], [], []>} : vector<16x64xf32>, vector<64x16xf32>, vector<16x16xf32> -> vector<16x16xf32>
    %c6_179 = arith.constant 6 : index
    %c0_180 = arith.constant 0 : index
    %c0_181 = arith.constant 0 : index
    %174 = vector.load %arg2[%c6_179, %c0_180, %c0_181] : memref<9x16x32xf32, #tpu.memory_space<vmem>>, vector<1x16x32xf32>
    %175 = vector.shape_cast %174 : vector<1x16x32xf32> to vector<16x32xf32>
    %cst_182 = arith.constant dense<0.000000e+00> : vector<16x32xf32>
    %176 = tpu.matmul %173, %175, %cst_182 {dimension_numbers = #tpu.dot_dimension_numbers<[1], [0], [0], [1], [0, 0, 1, 1], [], []>} : vector<16x16xf32>, vector<16x32xf32>, vector<16x32xf32> -> vector<16x32xf32>
    %177 = arith.addf %170, %176 : vector<16x32xf32>
    %c7_183 = arith.constant 7 : index
    %c0_184 = arith.constant 0 : index
    %c0_185 = arith.constant 0 : index
    %178 = vector.load %arg1[%c7_183, %c0_184, %c0_185] : memref<9x16x64xf32, #tpu.memory_space<vmem>>, vector<1x16x64xf32>
    %179 = vector.shape_cast %178 : vector<1x16x64xf32> to vector<16x64xf32>
    %cst_186 = arith.constant dense<0.000000e+00> : vector<16x16xf32>
    %180 = tpu.matmul %179, %125, %cst_186 {dimension_numbers = #tpu.dot_dimension_numbers<[1], [0], [0], [1], [0, 0, 1, 1], [], []>} : vector<16x64xf32>, vector<64x16xf32>, vector<16x16xf32> -> vector<16x16xf32>
    %c7_187 = arith.constant 7 : index
    %c0_188 = arith.constant 0 : index
    %c0_189 = arith.constant 0 : index
    %181 = vector.load %arg2[%c7_187, %c0_188, %c0_189] : memref<9x16x32xf32, #tpu.memory_space<vmem>>, vector<1x16x32xf32>
    %182 = vector.shape_cast %181 : vector<1x16x32xf32> to vector<16x32xf32>
    %cst_190 = arith.constant dense<0.000000e+00> : vector<16x32xf32>
    %183 = tpu.matmul %180, %182, %cst_190 {dimension_numbers = #tpu.dot_dimension_numbers<[1], [0], [0], [1], [0, 0, 1, 1], [], []>} : vector<16x16xf32>, vector<16x32xf32>, vector<16x32xf32> -> vector<16x32xf32>
    %184 = arith.addf %177, %183 : vector<16x32xf32>
    %c8_191 = arith.constant 8 : index
    %c0_192 = arith.constant 0 : index
    %c0_193 = arith.constant 0 : index
    %185 = vector.load %arg1[%c8_191, %c0_192, %c0_193] : memref<9x16x64xf32, #tpu.memory_space<vmem>>, vector<1x16x64xf32>
    %186 = vector.shape_cast %185 : vector<1x16x64xf32> to vector<16x64xf32>
    %cst_194 = arith.constant dense<0.000000e+00> : vector<16x16xf32>
    %187 = tpu.matmul %186, %125, %cst_194 {dimension_numbers = #tpu.dot_dimension_numbers<[1], [0], [0], [1], [0, 0, 1, 1], [], []>} : vector<16x64xf32>, vector<64x16xf32>, vector<16x16xf32> -> vector<16x16xf32>
    %c8_195 = arith.constant 8 : index
    %c0_196 = arith.constant 0 : index
    %c0_197 = arith.constant 0 : index
    %188 = vector.load %arg2[%c8_195, %c0_196, %c0_197] : memref<9x16x32xf32, #tpu.memory_space<vmem>>, vector<1x16x32xf32>
    %189 = vector.shape_cast %188 : vector<1x16x32xf32> to vector<16x32xf32>
    %cst_198 = arith.constant dense<0.000000e+00> : vector<16x32xf32>
    %190 = tpu.matmul %187, %189, %cst_198 {dimension_numbers = #tpu.dot_dimension_numbers<[1], [0], [0], [1], [0, 0, 1, 1], [], []>} : vector<16x16xf32>, vector<16x32xf32>, vector<16x32xf32> -> vector<16x32xf32>
    %191 = arith.addf %184, %190 : vector<16x32xf32>
    %c0_199 = arith.constant 0 : index
    %c0_200 = arith.constant 0 : index
    %192 = vector.load %arg3[%c0_199, %c0_200] : memref<1x32xf32, #tpu.memory_space<vmem>>, vector<1x32xf32>
    %193 = vector.broadcast %192 : vector<1x32xf32> to vector<16x32xf32>
    %194 = arith.addf %191, %193 : vector<16x32xf32>
    %cst_201 = arith.constant 0.000000e+00 : f32
    %195 = vector.broadcast %cst_201 : f32 to vector<16x32xf32>
    %196 = arith.maximumf %194, %195 : vector<16x32xf32>
    %cst_202 = arith.constant dense<0.000000e+00> : vector<32xf32>
    %197 = vector.multi_reduction <add>, %196, %cst_202 [0] : vector<16x32xf32> to vector<32xf32>
    %198 = vector.shape_cast %197 : vector<32xf32> to vector<1x32xf32>
    %cst_203 = arith.constant 1.600000e+01 : f32
    %199 = vector.broadcast %cst_203 : f32 to vector<1x32xf32>
    %200 = arith.divf %198, %199 : vector<1x32xf32>
    %c0_204 = arith.constant 0 : index
    %c0_205 = arith.constant 0 : index
    %c0_206 = arith.constant 0 : index
    %201 = vector.load %arg4[%c0_204, %c0_205, %c0_206] : memref<4x9x16xf32, #tpu.memory_space<vmem>>, vector<1x9x16xf32>
    %202 = vector.shape_cast %201 : vector<1x9x16xf32> to vector<9x16xf32>
    %cst_207 = arith.constant dense<0.000000e+00> : vector<9x32xf32>
    %203 = tpu.matmul %202, %196, %cst_207 {dimension_numbers = #tpu.dot_dimension_numbers<[1], [0], [0], [1], [0, 0, 1, 1], [], []>} : vector<9x16xf32>, vector<16x32xf32>, vector<9x32xf32> -> vector<9x32xf32>
    %c0_208 = arith.constant 0 : index
    %c0_209 = arith.constant 0 : index
    %c0_210 = arith.constant 0 : index
    %204 = vector.load %arg5[%c0_208, %c0_209, %c0_210] : memref<4x32x32xf32, #tpu.memory_space<vmem>>, vector<1x32x32xf32>
    %205 = vector.shape_cast %204 : vector<1x32x32xf32> to vector<32x32xf32>
    %cst_211 = arith.constant dense<0.000000e+00> : vector<9x32xf32>
    %206 = tpu.matmul %203, %205, %cst_211 {dimension_numbers = #tpu.dot_dimension_numbers<[1], [0], [0], [1], [0, 0, 1, 1], [], []>} : vector<9x32xf32>, vector<32x32xf32>, vector<9x32xf32> -> vector<9x32xf32>
    %c1_212 = arith.constant 1 : index
    %c0_213 = arith.constant 0 : index
    %c0_214 = arith.constant 0 : index
    %207 = vector.load %arg4[%c1_212, %c0_213, %c0_214] : memref<4x9x16xf32, #tpu.memory_space<vmem>>, vector<1x9x16xf32>
    %208 = vector.shape_cast %207 : vector<1x9x16xf32> to vector<9x16xf32>
    %cst_215 = arith.constant dense<0.000000e+00> : vector<9x32xf32>
    %209 = tpu.matmul %208, %196, %cst_215 {dimension_numbers = #tpu.dot_dimension_numbers<[1], [0], [0], [1], [0, 0, 1, 1], [], []>} : vector<9x16xf32>, vector<16x32xf32>, vector<9x32xf32> -> vector<9x32xf32>
    %c1_216 = arith.constant 1 : index
    %c0_217 = arith.constant 0 : index
    %c0_218 = arith.constant 0 : index
    %210 = vector.load %arg5[%c1_216, %c0_217, %c0_218] : memref<4x32x32xf32, #tpu.memory_space<vmem>>, vector<1x32x32xf32>
    %211 = vector.shape_cast %210 : vector<1x32x32xf32> to vector<32x32xf32>
    %cst_219 = arith.constant dense<0.000000e+00> : vector<9x32xf32>
    %212 = tpu.matmul %209, %211, %cst_219 {dimension_numbers = #tpu.dot_dimension_numbers<[1], [0], [0], [1], [0, 0, 1, 1], [], []>} : vector<9x32xf32>, vector<32x32xf32>, vector<9x32xf32> -> vector<9x32xf32>
    %213 = arith.addf %206, %212 : vector<9x32xf32>
    %c2_220 = arith.constant 2 : index
    %c0_221 = arith.constant 0 : index
    %c0_222 = arith.constant 0 : index
    %214 = vector.load %arg4[%c2_220, %c0_221, %c0_222] : memref<4x9x16xf32, #tpu.memory_space<vmem>>, vector<1x9x16xf32>
    %215 = vector.shape_cast %214 : vector<1x9x16xf32> to vector<9x16xf32>
    %cst_223 = arith.constant dense<0.000000e+00> : vector<9x32xf32>
    %216 = tpu.matmul %215, %196, %cst_223 {dimension_numbers = #tpu.dot_dimension_numbers<[1], [0], [0], [1], [0, 0, 1, 1], [], []>} : vector<9x16xf32>, vector<16x32xf32>, vector<9x32xf32> -> vector<9x32xf32>
    %c2_224 = arith.constant 2 : index
    %c0_225 = arith.constant 0 : index
    %c0_226 = arith.constant 0 : index
    %217 = vector.load %arg5[%c2_224, %c0_225, %c0_226] : memref<4x32x32xf32, #tpu.memory_space<vmem>>, vector<1x32x32xf32>
    %218 = vector.shape_cast %217 : vector<1x32x32xf32> to vector<32x32xf32>
    %cst_227 = arith.constant dense<0.000000e+00> : vector<9x32xf32>
    %219 = tpu.matmul %216, %218, %cst_227 {dimension_numbers = #tpu.dot_dimension_numbers<[1], [0], [0], [1], [0, 0, 1, 1], [], []>} : vector<9x32xf32>, vector<32x32xf32>, vector<9x32xf32> -> vector<9x32xf32>
    %220 = arith.addf %213, %219 : vector<9x32xf32>
    %c3_228 = arith.constant 3 : index
    %c0_229 = arith.constant 0 : index
    %c0_230 = arith.constant 0 : index
    %221 = vector.load %arg4[%c3_228, %c0_229, %c0_230] : memref<4x9x16xf32, #tpu.memory_space<vmem>>, vector<1x9x16xf32>
    %222 = vector.shape_cast %221 : vector<1x9x16xf32> to vector<9x16xf32>
    %cst_231 = arith.constant dense<0.000000e+00> : vector<9x32xf32>
    %223 = tpu.matmul %222, %196, %cst_231 {dimension_numbers = #tpu.dot_dimension_numbers<[1], [0], [0], [1], [0, 0, 1, 1], [], []>} : vector<9x16xf32>, vector<16x32xf32>, vector<9x32xf32> -> vector<9x32xf32>
    %c3_232 = arith.constant 3 : index
    %c0_233 = arith.constant 0 : index
    %c0_234 = arith.constant 0 : index
    %224 = vector.load %arg5[%c3_232, %c0_233, %c0_234] : memref<4x32x32xf32, #tpu.memory_space<vmem>>, vector<1x32x32xf32>
    %225 = vector.shape_cast %224 : vector<1x32x32xf32> to vector<32x32xf32>
    %cst_235 = arith.constant dense<0.000000e+00> : vector<9x32xf32>
    %226 = tpu.matmul %223, %225, %cst_235 {dimension_numbers = #tpu.dot_dimension_numbers<[1], [0], [0], [1], [0, 0, 1, 1], [], []>} : vector<9x32xf32>, vector<32x32xf32>, vector<9x32xf32> -> vector<9x32xf32>
    %227 = arith.addf %220, %226 : vector<9x32xf32>
    %c0_236 = arith.constant 0 : index
    %c0_237 = arith.constant 0 : index
    %228 = vector.load %arg6[%c0_236, %c0_237] : memref<1x32xf32, #tpu.memory_space<vmem>>, vector<1x32xf32>
    %229 = vector.broadcast %228 : vector<1x32xf32> to vector<9x32xf32>
    %230 = arith.addf %227, %229 : vector<9x32xf32>
    %cst_238 = arith.constant 0.000000e+00 : f32
    %231 = vector.broadcast %cst_238 : f32 to vector<9x32xf32>
    %232 = arith.maximumf %230, %231 : vector<9x32xf32>
    %cst_239 = arith.constant dense<0.000000e+00> : vector<32xf32>
    %233 = vector.multi_reduction <add>, %232, %cst_239 [0] : vector<9x32xf32> to vector<32xf32>
    %234 = vector.shape_cast %233 : vector<32xf32> to vector<1x32xf32>
    %cst_240 = arith.constant 9.000000e+00 : f32
    %235 = vector.broadcast %cst_240 : f32 to vector<1x32xf32>
    %236 = arith.divf %234, %235 : vector<1x32xf32>
    %c0_241 = arith.constant 0 : index
    %c0_242 = arith.constant 0 : index
    %237 = vector.load %arg7[%c0_241, %c0_242] : memref<16x128xf32, #tpu.memory_space<vmem>>, vector<16x128xf32>
    %cst_243 = arith.constant dense<0.000000e+00> : vector<1x128xf32>
    %238 = tpu.matmul %129, %237, %cst_243 {dimension_numbers = #tpu.dot_dimension_numbers<[1], [0], [0], [1], [0, 0, 1, 1], [], []>} : vector<1x16xf32>, vector<16x128xf32>, vector<1x128xf32> -> vector<1x128xf32>
    %c0_244 = arith.constant 0 : index
    %c0_245 = arith.constant 0 : index
    %239 = vector.load %arg8[%c0_244, %c0_245] : memref<32x128xf32, #tpu.memory_space<vmem>>, vector<32x128xf32>
    %cst_246 = arith.constant dense<0.000000e+00> : vector<1x128xf32>
    %240 = tpu.matmul %200, %239, %cst_246 {dimension_numbers = #tpu.dot_dimension_numbers<[1], [0], [0], [1], [0, 0, 1, 1], [], []>} : vector<1x32xf32>, vector<32x128xf32>, vector<1x128xf32> -> vector<1x128xf32>
    %241 = arith.addf %238, %240 : vector<1x128xf32>
    %c0_247 = arith.constant 0 : index
    %c0_248 = arith.constant 0 : index
    %242 = vector.load %arg9[%c0_247, %c0_248] : memref<32x128xf32, #tpu.memory_space<vmem>>, vector<32x128xf32>
    %cst_249 = arith.constant dense<0.000000e+00> : vector<1x128xf32>
    %243 = tpu.matmul %236, %242, %cst_249 {dimension_numbers = #tpu.dot_dimension_numbers<[1], [0], [0], [1], [0, 0, 1, 1], [], []>} : vector<1x32xf32>, vector<32x128xf32>, vector<1x128xf32> -> vector<1x128xf32>
    %244 = arith.addf %241, %243 : vector<1x128xf32>
    %c0_250 = arith.constant 0 : index
    %c0_251 = arith.constant 0 : index
    %245 = vector.load %arg10[%c0_250, %c0_251] : memref<1x128xf32, #tpu.memory_space<vmem>>, vector<1x128xf32>
    %246 = arith.addf %244, %245 : vector<1x128xf32>
    %c1_252 = arith.constant 1 : index
    %c0_253 = arith.constant 0 : index
    %247 = vector.load %arg11[%c1_252, %c0_253] : memref<2x128xf32, #tpu.memory_space<vmem>>, vector<1x128xf32>
    tpu.vector_store %arg11[%c1_252, %c0_253], %246 {strides = array<i32>} : memref<2x128xf32, #tpu.memory_space<vmem>>, vector<1x128xf32>,
    return
  }
}

</mosaic_0001>

<llo_original>
// kernel: forward.1
$region0: #{forward.1}
  #allocation0 [shape = 'u32[]', space=smem, size = 0x4, offset = 0x4, fixed_abs, tag = 'smem constant byte address 0x4 - core index']
  #allocation1 [shape = 'u32[144,128]{1,0:T(1,128)}', space=vmem, size = 0x12000, scoped, tag = 'internal scratch']
  %s0 = inlined_call_operand.hbm [shape: f32[2,64,16], index: 0, kind: input, shape index: {}]
  %s1 = inlined_call_operand.hbm [shape: f32[9,16,64], index: 1, kind: input, shape index: {}]
  %s2 = inlined_call_operand.hbm [shape: f32[9,16,32], index: 2, kind: input, shape index: {}]
  %s3 = inlined_call_operand.vmem [shape: f32[1,32], index: 3, kind: input, shape index: {}]
  %s4 = inlined_call_operand.hbm [shape: f32[4,9,16], index: 4, kind: input, shape index: {}]
  %s5 = inlined_call_operand.hbm [shape: f32[4,32,32], index: 5, kind: input, shape index: {}]
  %s6 = inlined_call_operand.vmem [shape: f32[1,32], index: 6, kind: input, shape index: {}]
  %s7 = inlined_call_operand.hbm [shape: f32[16,128], index: 7, kind: input, shape index: {}]
  %s8 = inlined_call_operand.hbm [shape: f32[32,128], index: 8, kind: input, shape index: {}]
  %s9 = inlined_call_operand.hbm [shape: f32[32,128], index: 9, kind: input, shape index: {}]
  %s10 = inlined_call_operand.vmem [shape: f32[1,128], index: 10, kind: input, shape index: {}]
  %s11 = inlined_call_operand.hbm [shape: f32[2,128], index: 11, kind: output, shape index: {}]
  %s12 = sld [smem:[#allocation0]]
  $region86: #{forward.1} parent=0
    _
  %s14 = ssub.s32 1, %s12
  %s15 = scalar_select 0, %s14, %s12
  $region1: #{forward.1} parent=0
    #allocation2 [shape = 'u8[65536]{0}', space=vmem, size = 0x10000, scoped, tag = 'input window, operand 0, single buffered']
    #allocation3 [shape = 's32[1]{0}', space=sflag, size = 0x4, scoped, tag = 'scoped memory for forward.1']
    #allocation4 [shape = 's32[1]{0}', space=sflag, size = 0x4, scoped, tag = 'scoped memory for forward.1']
    #allocation5 [shape = 'u8[73728]{0}', space=vmem, size = 0x12000, scoped, tag = 'input window, operand 1, single buffered']
    #allocation6 [shape = 's32[1]{0}', space=sflag, size = 0x4, scoped, tag = 'scoped memory for forward.1']
    #allocation7 [shape = 'u8[73728]{0}', space=vmem, size = 0x12000, scoped, tag = 'input window, operand 2, single buffered']
    #allocation8 [shape = 'u8[32768]{0}', space=vmem, size = 0x8000, scoped, tag = 'input window, operand 4, single buffered']
    #allocation9 [shape = 's32[1]{0}', space=sflag, size = 0x4, scoped, tag = 'scoped memory for forward.1']
    #allocation10 [shape = 'u8[65536]{0}', space=vmem, size = 0x10000, scoped, tag = 'input window, operand 5, single buffered']
    #allocation11 [shape = 'u8[8192]{0}', space=vmem, size = 0x2000, scoped, tag = 'input window, operand 7, single buffered']
    #allocation12 [shape = 's32[1]{0}', space=sflag, size = 0x4, scoped, tag = 'scoped memory for forward.1']
    #allocation13 [shape = 'u8[16384]{0}', space=vmem, size = 0x4000, scoped, tag = 'input window, operand 8, single buffered']
    #allocation14 [shape = 'u8[16384]{0}', space=vmem, size = 0x4000, scoped, tag = 'input window, operand 9, single buffered']
    #allocation15 [shape = 's32[1]{0}', space=sflag, size = 0x4, scoped, tag = 'scoped memory for forward.1']
    #allocation16 [shape = 'u8[1024]{0}', space=vmem, size = 0x400, scoped, tag = 'output window, operand 0, single buffered']
    %16 = vsyncpa [#allocation3], 0
    %17 = vsyncpa [#allocation6], 0
    %18 = vsyncpa [#allocation9], 0
    %19 = vsyncpa [#allocation12], 0
    %20 = vsyncpa [#allocation15], 0
    %21 = vsyncpa [#allocation4], 0
    // Predicated region
    $region2: #{forward.1} parent=1 // pred_check
      _
    $region3: #{forward.1} parent=1 // pred_check_branch
      %23 = sbr.rel (0) target = $region5
    $region4: #{forward.1} parent=1 // pred_region
      %s25 = ssub.s32 2048, 2048
      %26 = vsyncadd [#allocation3], %s25
      %s27 = sshll.u32 [#allocation2], 4
      %s28 = int_to_ptr.vmem [resolvable:$true] %s27
      %33 = dma.hbm_to_vmem [thread:$0]  %s0, 2048, %s28, [#allocation3], 128, 128, 8
    $region5: #{forward.1} parent=1 // pred_fallthru
      _
    // Predicated region
    $region6: #{forward.1} parent=1 // pred_check
      _
    $region7: #{forward.1} parent=1 // pred_check_branch
      %35 = sbr.rel (0) target = $region9
    $region8: #{forward.1} parent=1 // pred_region
      %s37 = ssub.s32 2304, 2304
      %38 = vsyncadd [#allocation6], %s37
      %s39 = sshll.u32 [#allocation5], 4
      %s40 = int_to_ptr.vmem [resolvable:$true] %s39
      %45 = dma.hbm_to_vmem [thread:$0]  %s1, 2304, %s40, [#allocation6], 128, 128, 8
    $region9: #{forward.1} parent=1 // pred_fallthru
      _
    // Predicated region
    $region10: #{forward.1} parent=1 // pred_check
      _
    $region11: #{forward.1} parent=1 // pred_check_branch
      %47 = sbr.rel (0) target = $region13
    $region12: #{forward.1} parent=1 // pred_region
      %s49 = ssub.s32 2304, 2304
      %50 = vsyncadd [#allocation6], %s49
      %s51 = sshll.u32 [#allocation7], 4
      %s52 = int_to_ptr.vmem [resolvable:$true] %s51
      %57 = dma.hbm_to_vmem [thread:$0]  %s2, 2304, %s52, [#allocation6], 128, 128, 8
    $region13: #{forward.1} parent=1 // pred_fallthru
      _
    // Predicated region
    $region14: #{forward.1} parent=1 // pred_check
      _
    $region15: #{forward.1} parent=1 // pred_check_branch
      %59 = sbr.rel (0) target = $region17
    $region16: #{forward.1} parent=1 // pred_region
      _
    $region17: #{forward.1} parent=1 // pred_fallthru
      _
    // Predicated region
    $region18: #{forward.1} parent=1 // pred_check
      _
    $region19: #{forward.1} parent=1 // pred_check_branch
      %61 = sbr.rel (0) target = $region21
    $region20: #{forward.1} parent=1 // pred_region
      %s63 = ssub.s32 1024, 1024
      %64 = vsyncadd [#allocation9], %s63
      %s65 = sshll.u32 [#allocation8], 4
      %s66 = int_to_ptr.vmem [resolvable:$true] %s65
      %71 = dma.hbm_to_vmem [thread:$0]  %s4, 1024, %s66, [#allocation9], 128, 128, 8
    $region21: #{forward.1} parent=1 // pred_fallthru
      _
    // Predicated region
    $region22: #{forward.1} parent=1 // pred_check
      _
    $region23: #{forward.1} parent=1 // pred_check_branch
      %73 = sbr.rel (0) target = $region25
    $region24: #{forward.1} parent=1 // pred_region
      %s75 = ssub.s32 2048, 2048
      %76 = vsyncadd [#allocation9], %s75
      %s77 = sshll.u32 [#allocation10], 4
      %s78 = int_to_ptr.vmem [resolvable:$true] %s77
      %83 = dma.hbm_to_vmem [thread:$0]  %s5, 2048, %s78, [#allocation9], 128, 128, 8
    $region25: #{forward.1} parent=1 // pred_fallthru
      _
    // Predicated region
    $region26: #{forward.1} parent=1 // pred_check
      _
    $region27: #{forward.1} parent=1 // pred_check_branch
      %85 = sbr.rel (0) target = $region29
    $region28: #{forward.1} parent=1 // pred_region
      _
    $region29: #{forward.1} parent=1 // pred_fallthru
      _
    // Predicated region
    $region30: #{forward.1} parent=1 // pred_check
      _
    $region31: #{forward.1} parent=1 // pred_check_branch
      %87 = sbr.rel (0) target = $region33
    $region32: #{forward.1} parent=1 // pred_region
      %s89 = ssub.s32 256, 256
      %90 = vsyncadd [#allocation12], %s89
      %s91 = sshll.u32 [#allocation11], 4
      %s92 = int_to_ptr.vmem [resolvable:$true] %s91
      %97 = dma.hbm_to_vmem [thread:$0]  %s7, 256, %s92, [#allocation12], 128, 128, 8
    $region33: #{forward.1} parent=1 // pred_fallthru
      _
    // Predicated region
    $region34: #{forward.1} parent=1 // pred_check
      _
    $region35: #{forward.1} parent=1 // pred_check_branch
      %99 = sbr.rel (0) target = $region37
    $region36: #{forward.1} parent=1 // pred_region
      %s101 = ssub.s32 512, 512
      %102 = vsyncadd [#allocation12], %s101
      %s103 = sshll.u32 [#allocation13], 4
      %s104 = int_to_ptr.vmem [resolvable:$true] %s103
      %109 = dma.hbm_to_vmem [thread:$0]  %s8, 512, %s104, [#allocation12], 128, 128, 8
    $region37: #{forward.1} parent=1 // pred_fallthru
      _
    // Predicated region
    $region38: #{forward.1} parent=1 // pred_check
      _
    $region39: #{forward.1} parent=1 // pred_check_branch
      %111 = sbr.rel (0) target = $region41
    $region40: #{forward.1} parent=1 // pred_region
      %s113 = ssub.s32 512, 512
      %114 = vsyncadd [#allocation15], %s113
      %s115 = sshll.u32 [#allocation14], 4
      %s116 = int_to_ptr.vmem [resolvable:$true] %s115
      %121 = dma.hbm_to_vmem [thread:$0]  %s9, 512, %s116, [#allocation15], 128, 128, 8
    $region41: #{forward.1} parent=1 // pred_fallthru
      _
    // Predicated region
    $region42: #{forward.1} parent=1 // pred_check
      _
    $region43: #{forward.1} parent=1 // pred_check_branch
      %123 = sbr.rel (0) target = $region45
    $region44: #{forward.1} parent=1 // pred_region
      _
    $region45: #{forward.1} parent=1 // pred_fallthru
      _
    // Predicated region
    $region46: #{forward.1} parent=1 // pred_check
      _
    $region47: #{forward.1} parent=1 // pred_check_branch
      %125 = sbr.rel (0) target = $region49
    $region48: #{forward.1} parent=1 // pred_region
      %126 = dma.done [#allocation3], 2048
    $region49: #{forward.1} parent=1 // pred_fallthru
      _
    // Predicated region
    $region50: #{forward.1} parent=1 // pred_check
      _
    $region51: #{forward.1} parent=1 // pred_check_branch
      %128 = sbr.rel (0) target = $region53
    $region52: #{forward.1} parent=1 // pred_region
      %129 = dma.done [#allocation6], 2304
    $region53: #{forward.1} parent=1 // pred_fallthru
      _
    // Predicated region
    $region54: #{forward.1} parent=1 // pred_check
      _
    $region55: #{forward.1} parent=1 // pred_check_branch
      %131 = sbr.rel (0) target = $region57
    $region56: #{forward.1} parent=1 // pred_region
      %132 = dma.done [#allocation6], 2304
    $region57: #{forward.1} parent=1 // pred_fallthru
      _
    // Predicated region
    $region58: #{forward.1} parent=1 // pred_check
      _
    $region59: #{forward.1} parent=1 // pred_check_branch
      %134 = sbr.rel (0) target = $region61
    $region60: #{forward.1} parent=1 // pred_region
      %135 = dma.done [#allocation9], 1024
    $region61: #{forward.1} parent=1 // pred_fallthru
      _
    // Predicated region
    $region62: #{forward.1} parent=1 // pred_check
      _
    $region63: #{forward.1} parent=1 // pred_check_branch
      %137 = sbr.rel (0) target = $region65
    $region64: #{forward.1} parent=1 // pred_region
      %138 = dma.done [#allocation9], 2048
    $region65: #{forward.1} parent=1 // pred_fallthru
      _
    // Predicated region
    $region66: #{forward.1} parent=1 // pred_check
      _
    $region67: #{forward.1} parent=1 // pred_check_branch
      %140 = sbr.rel (0) target = $region69
    $region68: #{forward.1} parent=1 // pred_region
      %141 = dma.done [#allocation12], 256
    $region69: #{forward.1} parent=1 // pred_fallthru
      _
    // Predicated region
    $region70: #{forward.1} parent=1 // pred_check
      _
    $region71: #{forward.1} parent=1 // pred_check_branch
      %143 = sbr.rel (0) target = $region73
    $region72: #{forward.1} parent=1 // pred_region
      %144 = dma.done [#allocation12], 512
    $region73: #{forward.1} parent=1 // pred_fallthru
      _
    // Predicated region
    $region74: #{forward.1} parent=1 // pred_check
      _
    $region75: #{forward.1} parent=1 // pred_check_branch
      %146 = sbr.rel (0) target = $region77
    $region76: #{forward.1} parent=1 // pred_region
      %147 = dma.done [#allocation15], 512
    $region77: #{forward.1} parent=1 // pred_fallthru
      _
    %v148 = vld [vmem:[#allocation2] sm:$0xff]
    %v149 = vld [vmem:[#allocation2 + $0x8] sm:$0xff]
    %v150 = vld [vmem:[#allocation2 + $0x10] sm:$0xff]
    %v151 = vld [vmem:[#allocation2 + $0x18] sm:$0xff]
    %v152 = vld [vmem:[#allocation2 + $0x20] sm:$0xff]
    %v153 = vld [vmem:[#allocation2 + $0x28] sm:$0xff]
    %v154 = vld [vmem:[#allocation2 + $0x30] sm:$0xff]
    %v155 = vld [vmem:[#allocation2 + $0x38] sm:$0xff]
    %vm156 = vcmask 130048
    %v157 = vsel %vm156, %v148, 0.0
    %v158 = vsel %vm156, %v149, 0.0
    %v159 = vadd.f32 %v157, %v158
    %v160 = vsel %vm156, %v150, 0.0
    %v161 = vadd.f32 %v159, %v160
    %v162 = vsel %vm156, %v151, 0.0
    %v163 = vadd.f32 %v161, %v162
    %v164 = vsel %vm156, %v152, 0.0
    %v165 = vadd.f32 %v163, %v164
    %v166 = vsel %vm156, %v153, 0.0
    %v167 = vadd.f32 %v165, %v166
    %v168 = vsel %vm156, %v154, 0.0
    %v169 = vadd.f32 %v167, %v168
    %v170 = vsel %vm156, %v155, 0.0
    %v171 = vadd.f32 %v169, %v170
    %v172 = vrot.slane %v171, 4
    %v173 = vadd.f32 %v171, %v172
    %v174 = vrot.slane %v173, 2
    %v175 = vadd.f32 %v173, %v174
    %v176 = vrot.slane %v175, 1
    %v177 = vadd.f32 %v175, %v176
    %v178 = vrcp.pop 64.0
    %v179 = vmul.f32 %v177, %v178
    %v180 = vld [vmem:[#allocation5] sm:$0xff]
    %v181 = vld [vmem:[#allocation5 + $0x8] sm:$0xff]
    %vm182 = vcmask 523264
    %v184 = vsel %vm182, %v180, 0
    %v187 = vsel %vm182, %v181, 0
    %189 = vmatprep.subr.mxu0 0.0
    %190 = vmatpush1.msra.mxu0 0.0
    %191 = vmatprep.subr.mxu0 0.0
    %192 = vmatpush1.msra.mxu0 0.0
    %193 = vmatprep.subr.mxu0 0.0
    %194 = vmatpush1.msra.mxu0 0.0
    %195 = vmatprep.subr.mxu0 0.0
    %196 = vmatpush1.msra.mxu0 0.0
    %197 = vmatprep.subr.mxu0 0.0
    %198 = vmatpush1.msra.mxu0 0.0
    %199 = vmatprep.subr.mxu0 0.0
    %200 = vmatpush1.msra.mxu0 0.0
    %201 = vmatprep.subr.mxu0 0.0
    %202 = vmatpush1.msra.mxu0 0.0
    %203 = vmatprep.subr.mxu0 0.0
    %204 = vmatpush1.msra.mxu0 0.0
    %205 = vmatprep.subr.mxu0 0.0
    %206 = vmatpush1.msra.mxu0 %v155
    %207 = vmatprep.subr.mxu0 0.0
    %208 = vmatpush1.msra.mxu0 %v154
    %209 = vmatprep.subr.mxu0 0.0
    %210 = vmatpush1.msra.mxu0 %v153
    %211 = vmatprep.subr.mxu0 0.0
    %212 = vmatpush1.msra.mxu0 %v152
    %213 = vmatprep.subr.mxu0 0.0
    %214 = vmatpush1.msra.mxu0 %v151
    %215 = vmatprep.subr.mxu0 0.0
    %216 = vmatpush1.msra.mxu0 %v150
    %217 = vmatprep.subr.mxu0 0.0
    %218 = vmatpush1.msra.mxu0 %v149
    %219 = vmatprep.subr.mxu0 0.0
    %220 = vmatpush1.msra.mxu0 %v148
    %221 = vmatprep.subr.mxu0 0.0
    %222 = vmatpush2.msra.mxu0 0.0
    %223 = vmatprep.subr.mxu0 0.0
    %224 = vmatpush2.msra.mxu0 0.0
    %225 = vmatprep.subr.mxu0 0.0
    %226 = vmatpush2.msra.mxu0 0.0
    %227 = vmatprep.subr.mxu0 0.0
    %228 = vmatpush2.msra.mxu0 0.0
    %229 = vmatprep.subr.mxu0 0.0
    %230 = vmatpush2.msra.mxu0 0.0
    %231 = vmatprep.subr.mxu0 0.0
    %232 = vmatpush2.msra.mxu0 0.0
    %233 = vmatprep.subr.mxu0 0.0
    %234 = vmatpush2.msra.mxu0 0.0
    %235 = vmatprep.subr.mxu0 0.0
    %236 = vmatpush2.msra.mxu0 0.0
    %237 = vmatprep.subr.mxu0 0.0
    %238 = vmatpush2.msra.mxu0 0.0
    %239 = vmatprep.subr.mxu0 0.0
    %240 = vmatpush2.msra.mxu0 0.0
    %241 = vmatprep.subr.mxu0 0.0
    %242 = vmatpush2.msra.mxu0 0.0
    %243 = vmatprep.subr.mxu0 0.0
    %244 = vmatpush2.msra.mxu0 0.0
    %245 = vmatprep.subr.mxu0 0.0
    %246 = vmatpush2.msra.mxu0 0.0
    %247 = vmatprep.subr.mxu0 0.0
    %248 = vmatpush2.msra.mxu0 0.0
    %249 = vmatprep.subr.mxu0 0.0
    %250 = vmatpush2.msra.mxu0 0.0
    %251 = vmatprep.subr.mxu0 0.0
    %252 = vmatpush2.msra.mxu0 0.0
    %253 = vmatprep.mubr.f32.mxu0 0.0
    %254 = vmatmul.mubr.f32.gmra.mxu0 %v184
    %v255 = vpop.f32.mrf.mxu0
    %v256 = vadd.f32 0.0, %v255
    %v257 = vpop.f32.mrf.mxu0
    %258 = vmatprep.mubr.f32.mxu0 0.0
    %259 = vmatmul.mubr.f32.gmra.mxu0 %v187
    %v260 = vpop.f32.mrf.mxu0
    %v261 = vadd.f32 0.0, %v260
    %v262 = vpop.f32.mrf.mxu0
    %263 = vdwg.mxu0
    %v264 = vld [vmem:[#allocation7] sm:$0xff]
    %v265 = vld [vmem:[#allocation7 + $0x8] sm:$0xff]
    %s266 = scalar_lea.vmem [#allocation5], 16
    %v267 = vld [vmem:[%s266] sm:$0xff]
    %v268 = vld [vmem:[%s266 + $0x8] sm:$0xff]
    %v270 = vsel %vm182, %v267, 0
    %v273 = vsel %vm182, %v268, 0
    %275 = vmatprep.subr.mxu0 0.0
    %276 = vmatpush1.msra.mxu0 0.0
    %277 = vmatprep.subr.mxu0 0.0
    %278 = vmatpush1.msra.mxu0 0.0
    %279 = vmatprep.subr.mxu0 0.0
    %280 = vmatpush1.msra.mxu0 0.0
    %281 = vmatprep.subr.mxu0 0.0
    %282 = vmatpush1.msra.mxu0 0.0
    %283 = vmatprep.subr.mxu0 0.0
    %284 = vmatpush1.msra.mxu0 0.0
    %285 = vmatprep.subr.mxu0 0.0
    %286 = vmatpush1.msra.mxu0 0.0
    %287 = vmatprep.subr.mxu0 0.0
    %288 = vmatpush1.msra.mxu0 0.0
    %289 = vmatprep.subr.mxu0 0.0
    %290 = vmatpush1.msra.mxu0 0.0
    %291 = vmatprep.subr.mxu0 0.0
    %292 = vmatpush1.msra.mxu0 %v155
    %293 = vmatprep.subr.mxu0 0.0
    %294 = vmatpush1.msra.mxu0 %v154
    %295 = vmatprep.subr.mxu0 0.0
    %296 = vmatpush1.msra.mxu0 %v153
    %297 = vmatprep.subr.mxu0 0.0
    %298 = vmatpush1.msra.mxu0 %v152
    %299 = vmatprep.subr.mxu0 0.0
    %300 = vmatpush1.msra.mxu0 %v151
    %301 = vmatprep.subr.mxu0 0.0
    %302 = vmatpush1.msra.mxu0 %v150
    %303 = vmatprep.subr.mxu0 0.0
    %304 = vmatpush1.msra.mxu0 %v149
    %305 = vmatprep.subr.mxu0 0.0
    %306 = vmatpush1.msra.mxu0 %v148
    %307 = vmatprep.subr.mxu0 0.0
    %308 = vmatpush2.msra.mxu0 0.0
    %309 = vmatprep.subr.mxu0 0.0
    %310 = vmatpush2.msra.mxu0 0.0
    %311 = vmatprep.subr.mxu0 0.0
    %312 = vmatpush2.msra.mxu0 0.0
    %313 = vmatprep.subr.mxu0 0.0
    %314 = vmatpush2.msra.mxu0 0.0
    %315 = vmatprep.subr.mxu0 0.0
    %316 = vmatpush2.msra.mxu0 0.0
    %317 = vmatprep.subr.mxu0 0.0
    %318 = vmatpush2.msra.mxu0 0.0
    %319 = vmatprep.subr.mxu0 0.0
    %320 = vmatpush2.msra.mxu0 0.0
    %321 = vmatprep.subr.mxu0 0.0
    %322 = vmatpush2.msra.mxu0 0.0
    %323 = vmatprep.subr.mxu0 0.0
    %324 = vmatpush2.msra.mxu0 0.0
    %325 = vmatprep.subr.mxu0 0.0
    %326 = vmatpush2.msra.mxu0 0.0
    %327 = vmatprep.subr.mxu0 0.0
    %328 = vmatpush2.msra.mxu0 0.0
    %329 = vmatprep.subr.mxu0 0.0
    %330 = vmatpush2.msra.mxu0 0.0
    %331 = vmatprep.subr.mxu0 0.0
    %332 = vmatpush2.msra.mxu0 0.0
    %333 = vmatprep.subr.mxu0 0.0
    %334 = vmatpush2.msra.mxu0 0.0
    %335 = vmatprep.subr.mxu0 0.0
    %336 = vmatpush2.msra.mxu0 0.0
    %337 = vmatprep.subr.mxu0 0.0
    %338 = vmatpush2.msra.mxu0 0.0
    %339 = vmatprep.mubr.f32.mxu0 0.0
    %340 = vmatmul.mubr.f32.gmra.mxu0 %v270
    %v341 = vpop.f32.mrf.mxu0
    %v342 = vadd.f32 0.0, %v341
    %v343 = vpop.f32.mrf.mxu0
    %344 = vmatprep.mubr.f32.mxu0 0.0
    %345 = vmatmul.mubr.f32.gmra.mxu0 %v273
    %v346 = vpop.f32.mrf.mxu0
    %v347 = vadd.f32 0.0, %v346
    %v348 = vpop.f32.mrf.mxu0
    %349 = vdwg.mxu0
    %s350 = scalar_lea.vmem [#allocation7], 16
    %v351 = vld [vmem:[%s350] sm:$0xff]
    %v352 = vld [vmem:[%s350 + $0x8] sm:$0xff]
    %v354 = vsel %vm156, %v342, 0
    %v357 = vsel %vm156, %v347, 0
    %359 = vmatprep.subr.mxu0 0.0
    %360 = vmatpush1.msra.mxu0 0.0
    %361 = vmatprep.subr.mxu0 0.0
    %362 = vmatpush1.msra.mxu0 0.0
    %363 = vmatprep.subr.mxu0 0.0
    %364 = vmatpush1.msra.mxu0 0.0
    %365 = vmatprep.subr.mxu0 0.0
    %366 = vmatpush1.msra.mxu0 0.0
    %367 = vmatprep.subr.mxu0 0.0
    %368 = vmatpush1.msra.mxu0 0.0
    %369 = vmatprep.subr.mxu0 0.0
    %370 = vmatpush1.msra.mxu0 0.0
    %371 = vmatprep.subr.mxu0 0.0
    %372 = vmatpush1.msra.mxu0 0.0
    %373 = vmatprep.subr.mxu0 0.0
    %374 = vmatpush1.msra.mxu0 0.0
    %375 = vmatprep.subr.mxu0 0.0
    %376 = vmatpush1.msra.mxu0 0.0
    %377 = vmatprep.subr.mxu0 0.0
    %378 = vmatpush1.msra.mxu0 0.0
    %379 = vmatprep.subr.mxu0 0.0
    %380 = vmatpush1.msra.mxu0 0.0
    %381 = vmatprep.subr.mxu0 0.0
    %382 = vmatpush1.msra.mxu0 0.0
    %383 = vmatprep.subr.mxu0 0.0
    %384 = vmatpush1.msra.mxu0 0.0
    %385 = vmatprep.subr.mxu0 0.0
    %386 = vmatpush1.msra.mxu0 0.0
    %387 = vmatprep.subr.mxu0 0.0
    %388 = vmatpush1.msra.mxu0 %v352
    %389 = vmatprep.subr.mxu0 0.0
    %390 = vmatpush1.msra.mxu0 %v351
    %391 = vmatprep.subr.mxu0 0.0
    %392 = vmatpush2.msra.mxu0 0.0
    %393 = vmatprep.subr.mxu0 0.0
    %394 = vmatpush2.msra.mxu0 0.0
    %395 = vmatprep.subr.mxu0 0.0
    %396 = vmatpush2.msra.mxu0 0.0
    %397 = vmatprep.subr.mxu0 0.0
    %398 = vmatpush2.msra.mxu0 0.0
    %399 = vmatprep.subr.mxu0 0.0
    %400 = vmatpush2.msra.mxu0 0.0
    %401 = vmatprep.subr.mxu0 0.0
    %402 = vmatpush2.msra.mxu0 0.0
    %403 = vmatprep.subr.mxu0 0.0
    %404 = vmatpush2.msra.mxu0 0.0
    %405 = vmatprep.subr.mxu0 0.0
    %406 = vmatpush2.msra.mxu0 0.0
    %407 = vmatprep.subr.mxu0 0.0
    %408 = vmatpush2.msra.mxu0 0.0
    %409 = vmatprep.subr.mxu0 0.0
    %410 = vmatpush2.msra.mxu0 0.0
    %411 = vmatprep.subr.mxu0 0.0
    %412 = vmatpush2.msra.mxu0 0.0
    %413 = vmatprep.subr.mxu0 0.0
    %414 = vmatpush2.msra.mxu0 0.0
    %415 = vmatprep.subr.mxu0 0.0
    %416 = vmatpush2.msra.mxu0 0.0
    %417 = vmatprep.subr.mxu0 0.0
    %418 = vmatpush2.msra.mxu0 0.0
    %419 = vmatprep.subr.mxu0 0.0
    %420 = vmatpush2.msra.mxu0 0.0
    %421 = vmatprep.subr.mxu0 0.0
    %422 = vmatpush2.msra.mxu0 0.0
    %423 = vmatprep.mubr.f32.mxu0 0.0
    %424 = vmatmul.mubr.f32.gmra.mxu0 %v354
    %v425 = vpop.f32.mrf.mxu0
    %v426 = vadd.f32 0.0, %v425
    %v427 = vpop.f32.mrf.mxu0
    %428 = vmatprep.mubr.f32.mxu0 0.0
    %429 = vmatmul.mubr.f32.gmra.mxu0 %v357
    %v430 = vpop.f32.mrf.mxu0
    %v431 = vadd.f32 0.0, %v430
    %v432 = vpop.f32.mrf.mxu0
    %433 = vdwg.mxu0
    %v435 = vsel %vm156, %v256, 0
    %v438 = vsel %vm156, %v261, 0
    %440 = vmatprep.subr.mxu0 0.0
    %441 = vmatpush1.msra.mxu0 0.0
    %442 = vmatprep.subr.mxu0 0.0
    %443 = vmatpush1.msra.mxu0 0.0
    %444 = vmatprep.subr.mxu0 0.0
    %445 = vmatpush1.msra.mxu0 0.0
    %446 = vmatprep.subr.mxu0 0.0
    %447 = vmatpush1.msra.mxu0 0.0
    %448 = vmatprep.subr.mxu0 0.0
    %449 = vmatpush1.msra.mxu0 0.0
    %450 = vmatprep.subr.mxu0 0.0
    %451 = vmatpush1.msra.mxu0 0.0
    %452 = vmatprep.subr.mxu0 0.0
    %453 = vmatpush1.msra.mxu0 0.0
    %454 = vmatprep.subr.mxu0 0.0
    %455 = vmatpush1.msra.mxu0 0.0
    %456 = vmatprep.subr.mxu0 0.0
    %457 = vmatpush1.msra.mxu0 0.0
    %458 = vmatprep.subr.mxu0 0.0
    %459 = vmatpush1.msra.mxu0 0.0
    %460 = vmatprep.subr.mxu0 0.0
    %461 = vmatpush1.msra.mxu0 0.0
    %462 = vmatprep.subr.mxu0 0.0
    %463 = vmatpush1.msra.mxu0 0.0
    %464 = vmatprep.subr.mxu0 0.0
    %465 = vmatpush1.msra.mxu0 0.0
    %466 = vmatprep.subr.mxu0 0.0
    %467 = vmatpush1.msra.mxu0 0.0
    %468 = vmatprep.subr.mxu0 0.0
    %469 = vmatpush1.msra.mxu0 %v265
    %470 = vmatprep.subr.mxu0 0.0
    %471 = vmatpush1.msra.mxu0 %v264
    %472 = vmatprep.subr.mxu0 0.0
    %473 = vmatpush2.msra.mxu0 0.0
    %474 = vmatprep.subr.mxu0 0.0
    %475 = vmatpush2.msra.mxu0 0.0
    %476 = vmatprep.subr.mxu0 0.0
    %477 = vmatpush2.msra.mxu0 0.0
    %478 = vmatprep.subr.mxu0 0.0
    %479 = vmatpush2.msra.mxu0 0.0
    %480 = vmatprep.subr.mxu0 0.0
    %481 = vmatpush2.msra.mxu0 0.0
    %482 = vmatprep.subr.mxu0 0.0
    %483 = vmatpush2.msra.mxu0 0.0
    %484 = vmatprep.subr.mxu0 0.0
    %485 = vmatpush2.msra.mxu0 0.0
    %486 = vmatprep.subr.mxu0 0.0
    %487 = vmatpush2.msra.mxu0 0.0
    %488 = vmatprep.subr.mxu0 0.0
    %489 = vmatpush2.msra.mxu0 0.0
    %490 = vmatprep.subr.mxu0 0.0
    %491 = vmatpush2.msra.mxu0 0.0
    %492 = vmatprep.subr.mxu0 0.0
    %493 = vmatpush2.msra.mxu0 0.0
    %494 = vmatprep.subr.mxu0 0.0
    %495 = vmatpush2.msra.mxu0 0.0
    %496 = vmatprep.subr.mxu0 0.0
    %497 = vmatpush2.msra.mxu0 0.0
    %498 = vmatprep.subr.mxu0 0.0
    %499 = vmatpush2.msra.mxu0 0.0
    %500 = vmatprep.subr.mxu0 0.0
    %501 = vmatpush2.msra.mxu0 0.0
    %502 = vmatprep.subr.mxu0 0.0
    %503 = vmatpush2.msra.mxu0 0.0
    %504 = vmatprep.mubr.f32.mxu0 0.0
    %505 = vmatmul.mubr.f32.gmra.mxu0 %v435
    %v506 = vpop.f32.mrf.mxu0
    %v507 = vadd.f32 %v426, %v506
    %v508 = vpop.f32.mrf.mxu0
    %509 = vmatprep.mubr.f32.mxu0 0.0
    %510 = vmatmul.mubr.f32.gmra.mxu0 %v438
    %v511 = vpop.f32.mrf.mxu0
    %v512 = vadd.f32 %v431, %v511
    %v513 = vpop.f32.mrf.mxu0
    %514 = vdwg.mxu0
    %s515 = scalar_lea.vmem [#allocation5], 32
    %v516 = vld [vmem:[%s515] sm:$0xff]
    %v517 = vld [vmem:[%s515 + $0x8] sm:$0xff]
    %v519 = vsel %vm182, %v516, 0
    %v522 = vsel %vm182, %v517, 0
    %524 = vmatprep.subr.mxu0 0.0
    %525 = vmatpush1.msra.mxu0 0.0
    %526 = vmatprep.subr.mxu0 0.0
    %527 = vmatpush1.msra.mxu0 0.0
    %528 = vmatprep.subr.mxu0 0.0
    %529 = vmatpush1.msra.mxu0 0.0
    %530 = vmatprep.subr.mxu0 0.0
    %531 = vmatpush1.msra.mxu0 0.0
    %532 = vmatprep.subr.mxu0 0.0
    %533 = vmatpush1.msra.mxu0 0.0
    %534 = vmatprep.subr.mxu0 0.0
    %535 = vmatpush1.msra.mxu0 0.0
    %536 = vmatprep.subr.mxu0 0.0
    %537 = vmatpush1.msra.mxu0 0.0
    %538 = vmatprep.subr.mxu0 0.0
    %539 = vmatpush1.msra.mxu0 0.0
    %540 = vmatprep.subr.mxu0 0.0
    %541 = vmatpush1.msra.mxu0 %v155
    %542 = vmatprep.subr.mxu0 0.0
    %543 = vmatpush1.msra.mxu0 %v154
    %544 = vmatprep.subr.mxu0 0.0
    %545 = vmatpush1.msra.mxu0 %v153
    %546 = vmatprep.subr.mxu0 0.0
    %547 = vmatpush1.msra.mxu0 %v152
    %548 = vmatprep.subr.mxu0 0.0
    %549 = vmatpush1.msra.mxu0 %v151
    %550 = vmatprep.subr.mxu0 0.0
    %551 = vmatpush1.msra.mxu0 %v150
    %552 = vmatprep.subr.mxu0 0.0
    %553 = vmatpush1.msra.mxu0 %v149
    %554 = vmatprep.subr.mxu0 0.0
    %555 = vmatpush1.msra.mxu0 %v148
    %556 = vmatprep.subr.mxu0 0.0
    %557 = vmatpush2.msra.mxu0 0.0
    %558 = vmatprep.subr.mxu0 0.0
    %559 = vmatpush2.msra.mxu0 0.0
    %560 = vmatprep.subr.mxu0 0.0
    %561 = vmatpush2.msra.mxu0 0.0
    %562 = vmatprep.subr.mxu0 0.0
    %563 = vmatpush2.msra.mxu0 0.0
    %564 = vmatprep.subr.mxu0 0.0
    %565 = vmatpush2.msra.mxu0 0.0
    %566 = vmatprep.subr.mxu0 0.0
    %567 = vmatpush2.msra.mxu0 0.0
    %568 = vmatprep.subr.mxu0 0.0
    %569 = vmatpush2.msra.mxu0 0.0
    %570 = vmatprep.subr.mxu0 0.0
    %571 = vmatpush2.msra.mxu0 0.0
    %572 = vmatprep.subr.mxu0 0.0
    %573 = vmatpush2.msra.mxu0 0.0
    %574 = vmatprep.subr.mxu0 0.0
    %575 = vmatpush2.msra.mxu0 0.0
    %576 = vmatprep.subr.mxu0 0.0
    %577 = vmatpush2.msra.mxu0 0.0
    %578 = vmatprep.subr.mxu0 0.0
    %579 = vmatpush2.msra.mxu0 0.0
    %580 = vmatprep.subr.mxu0 0.0
    %581 = vmatpush2.msra.mxu0 0.0
    %582 = vmatprep.subr.mxu0 0.0
    %583 = vmatpush2.msra.mxu0 0.0
    %584 = vmatprep.subr.mxu0 0.0
    %585 = vmatpush2.msra.mxu0 0.0
    %586 = vmatprep.subr.mxu0 0.0
    %587 = vmatpush2.msra.mxu0 0.0
    %588 = vmatprep.mubr.f32.mxu0 0.0
    %589 = vmatmul.mubr.f32.gmra.mxu0 %v519
    %v590 = vpop.f32.mrf.mxu0
    %v591 = vadd.f32 0.0, %v590
    %v592 = vpop.f32.mrf.mxu0
    %593 = vmatprep.mubr.f32.mxu0 0.0
    %594 = vmatmul.mubr.f32.gmra.mxu0 %v522
    %v595 = vpop.f32.mrf.mxu0
    %v596 = vadd.f32 0.0, %v595
    %v597 = vpop.f32.mrf.mxu0
    %598 = vdwg.mxu0
    %s599 = scalar_lea.vmem [#allocation7], 32
    %v600 = vld [vmem:[%s599] sm:$0xff]
    %v601 = vld [vmem:[%s599 + $0x8] sm:$0xff]
    %v603 = vsel %vm156, %v591, 0
    %v606 = vsel %vm156, %v596, 0
    %608 = vmatprep.subr.mxu0 0.0
    %609 = vmatpush1.msra.mxu0 0.0
    %610 = vmatprep.subr.mxu0 0.0
    %611 = vmatpush1.msra.mxu0 0.0
    %612 = vmatprep.subr.mxu0 0.0
    %613 = vmatpush1.msra.mxu0 0.0
    %614 = vmatprep.subr.mxu0 0.0
    %615 = vmatpush1.msra.mxu0 0.0
    %616 = vmatprep.subr.mxu0 0.0
    %617 = vmatpush1.msra.mxu0 0.0
    %618 = vmatprep.subr.mxu0 0.0
    %619 = vmatpush1.msra.mxu0 0.0
    %620 = vmatprep.subr.mxu0 0.0
    %621 = vmatpush1.msra.mxu0 0.0
    %622 = vmatprep.subr.mxu0 0.0
    %623 = vmatpush1.msra.mxu0 0.0
    %624 = vmatprep.subr.mxu0 0.0
    %625 = vmatpush1.msra.mxu0 0.0
    %626 = vmatprep.subr.mxu0 0.0
    %627 = vmatpush1.msra.mxu0 0.0
    %628 = vmatprep.subr.mxu0 0.0
    %629 = vmatpush1.msra.mxu0 0.0
    %630 = vmatprep.subr.mxu0 0.0
    %631 = vmatpush1.msra.mxu0 0.0
    %632 = vmatprep.subr.mxu0 0.0
    %633 = vmatpush1.msra.mxu0 0.0
    %634 = vmatprep.subr.mxu0 0.0
    %635 = vmatpush1.msra.mxu0 0.0
    %636 = vmatprep.subr.mxu0 0.0
    %637 = vmatpush1.msra.mxu0 %v601
    %638 = vmatprep.subr.mxu0 0.0
    %639 = vmatpush1.msra.mxu0 %v600
    %640 = vmatprep.subr.mxu0 0.0
    %641 = vmatpush2.msra.mxu0 0.0
    %642 = vmatprep.subr.mxu0 0.0
    %643 = vmatpush2.msra.mxu0 0.0
    %644 = vmatprep.subr.mxu0 0.0
    %645 = vmatpush2.msra.mxu0 0.0
    %646 = vmatprep.subr.mxu0 0.0
    %647 = vmatpush2.msra.mxu0 0.0
    %648 = vmatprep.subr.mxu0 0.0
    %649 = vmatpush2.msra.mxu0 0.0
    %650 = vmatprep.subr.mxu0 0.0
    %651 = vmatpush2.msra.mxu0 0.0
    %652 = vmatprep.subr.mxu0 0.0
    %653 = vmatpush2.msra.mxu0 0.0
    %654 = vmatprep.subr.mxu0 0.0
    %655 = vmatpush2.msra.mxu0 0.0
    %656 = vmatprep.subr.mxu0 0.0
    %657 = vmatpush2.msra.mxu0 0.0
    %658 = vmatprep.subr.mxu0 0.0
    %659 = vmatpush2.msra.mxu0 0.0
    %660 = vmatprep.subr.mxu0 0.0
    %661 = vmatpush2.msra.mxu0 0.0
    %662 = vmatprep.subr.mxu0 0.0
    %663 = vmatpush2.msra.mxu0 0.0
    %664 = vmatprep.subr.mxu0 0.0
    %665 = vmatpush2.msra.mxu0 0.0
    %666 = vmatprep.subr.mxu0 0.0
    %667 = vmatpush2.msra.mxu0 0.0
    %668 = vmatprep.subr.mxu0 0.0
    %669 = vmatpush2.msra.mxu0 0.0
    %670 = vmatprep.subr.mxu0 0.0
    %671 = vmatpush2.msra.mxu0 0.0
    %672 = vmatprep.mubr.f32.mxu0 0.0
    %673 = vmatmul.mubr.f32.gmra.mxu0 %v603
    %v674 = vpop.f32.mrf.mxu0
    %v675 = vadd.f32 0.0, %v674
    %v676 = vpop.f32.mrf.mxu0
    %677 = vmatprep.mubr.f32.mxu0 0.0
    %678 = vmatmul.mubr.f32.gmra.mxu0 %v606
    %v679 = vpop.f32.mrf.mxu0
    %v680 = vadd.f32 0.0, %v679
    %v681 = vpop.f32.mrf.mxu0
    %682 = vdwg.mxu0
    %v683 = vadd.f32 %v507, %v675
    %v684 = vadd.f32 %v512, %v680
    %s685 = scalar_lea.vmem [#allocation5], 48
    %v686 = vld [vmem:[%s685] sm:$0xff]
    %v687 = vld [vmem:[%s685 + $0x8] sm:$0xff]
    %v689 = vsel %vm182, %v686, 0
    %v692 = vsel %vm182, %v687, 0
    %694 = vmatprep.subr.mxu0 0.0
    %695 = vmatpush1.msra.mxu0 0.0
    %696 = vmatprep.subr.mxu0 0.0
    %697 = vmatpush1.msra.mxu0 0.0
    %698 = vmatprep.subr.mxu0 0.0
    %699 = vmatpush1.msra.mxu0 0.0
    %700 = vmatprep.subr.mxu0 0.0
    %701 = vmatpush1.msra.mxu0 0.0
    %702 = vmatprep.subr.mxu0 0.0
    %703 = vmatpush1.msra.mxu0 0.0
    %704 = vmatprep.subr.mxu0 0.0
    %705 = vmatpush1.msra.mxu0 0.0
    %706 = vmatprep.subr.mxu0 0.0
    %707 = vmatpush1.msra.mxu0 0.0
    %708 = vmatprep.subr.mxu0 0.0
    %709 = vmatpush1.msra.mxu0 0.0
    %710 = vmatprep.subr.mxu0 0.0
    %711 = vmatpush1.msra.mxu0 %v155
    %712 = vmatprep.subr.mxu0 0.0
    %713 = vmatpush1.msra.mxu0 %v154
    %714 = vmatprep.subr.mxu0 0.0
    %715 = vmatpush1.msra.mxu0 %v153
    %716 = vmatprep.subr.mxu0 0.0
    %717 = vmatpush1.msra.mxu0 %v152
    %718 = vmatprep.subr.mxu0 0.0
    %719 = vmatpush1.msra.mxu0 %v151
    %720 = vmatprep.subr.mxu0 0.0
    %721 = vmatpush1.msra.mxu0 %v150
    %722 = vmatprep.subr.mxu0 0.0
    %723 = vmatpush1.msra.mxu0 %v149
    %724 = vmatprep.subr.mxu0 0.0
    %725 = vmatpush1.msra.mxu0 %v148
    %726 = vmatprep.subr.mxu0 0.0
    %727 = vmatpush2.msra.mxu0 0.0
    %728 = vmatprep.subr.mxu0 0.0
    %729 = vmatpush2.msra.mxu0 0.0
    %730 = vmatprep.subr.mxu0 0.0
    %731 = vmatpush2.msra.mxu0 0.0
    %732 = vmatprep.subr.mxu0 0.0
    %733 = vmatpush2.msra.mxu0 0.0
    %734 = vmatprep.subr.mxu0 0.0
    %735 = vmatpush2.msra.mxu0 0.0
    %736 = vmatprep.subr.mxu0 0.0
    %737 = vmatpush2.msra.mxu0 0.0
    %738 = vmatprep.subr.mxu0 0.0
    %739 = vmatpush2.msra.mxu0 0.0
    %740 = vmatprep.subr.mxu0 0.0
    %741 = vmatpush2.msra.mxu0 0.0
    %742 = vmatprep.subr.mxu0 0.0
    %743 = vmatpush2.msra.mxu0 0.0
    %744 = vmatprep.subr.mxu0 0.0
    %745 = vmatpush2.msra.mxu0 0.0
    %746 = vmatprep.subr.mxu0 0.0
    %747 = vmatpush2.msra.mxu0 0.0
    %748 = vmatprep.subr.mxu0 0.0
    %749 = vmatpush2.msra.mxu0 0.0
    %750 = vmatprep.subr.mxu0 0.0
    %751 = vmatpush2.msra.mxu0 0.0
    %752 = vmatprep.subr.mxu0 0.0
    %753 = vmatpush2.msra.mxu0 0.0
    %754 = vmatprep.subr.mxu0 0.0
    %755 = vmatpush2.msra.mxu0 0.0
    %756 = vmatprep.subr.mxu0 0.0
    %757 = vmatpush2.msra.mxu0 0.0
    %758 = vmatprep.mubr.f32.mxu0 0.0
    %759 = vmatmul.mubr.f32.gmra.mxu0 %v689
    %v760 = vpop.f32.mrf.mxu0
    %v761 = vadd.f32 0.0, %v760
    %v762 = vpop.f32.mrf.mxu0
    %763 = vmatprep.mubr.f32.mxu0 0.0
    %764 = vmatmul.mubr.f32.gmra.mxu0 %v692
    %v765 = vpop.f32.mrf.mxu0
    %v766 = vadd.f32 0.0, %v765
    %v767 = vpop.f32.mrf.mxu0
    %768 = vdwg.mxu0
    %s769 = scalar_lea.vmem [#allocation7], 48
    %v770 = vld [vmem:[%s769] sm:$0xff]
    %v771 = vld [vmem:[%s769 + $0x8] sm:$0xff]
    %v773 = vsel %vm156, %v761, 0
    %v776 = vsel %vm156, %v766, 0
    %778 = vmatprep.subr.mxu0 0.0
    %779 = vmatpush1.msra.mxu0 0.0
    %780 = vmatprep.subr.mxu0 0.0
    %781 = vmatpush1.msra.mxu0 0.0
    %782 = vmatprep.subr.mxu0 0.0
    %783 = vmatpush1.msra.mxu0 0.0
    %784 = vmatprep.subr.mxu0 0.0
    %785 = vmatpush1.msra.mxu0 0.0
    %786 = vmatprep.subr.mxu0 0.0
    %787 = vmatpush1.msra.mxu0 0.0
    %788 = vmatprep.subr.mxu0 0.0
    %789 = vmatpush1.msra.mxu0 0.0
    %790 = vmatprep.subr.mxu0 0.0
    %791 = vmatpush1.msra.mxu0 0.0
    %792 = vmatprep.subr.mxu0 0.0
    %793 = vmatpush1.msra.mxu0 0.0
    %794 = vmatprep.subr.mxu0 0.0
    %795 = vmatpush1.msra.mxu0 0.0
    %796 = vmatprep.subr.mxu0 0.0
    %797 = vmatpush1.msra.mxu0 0.0
    %798 = vmatprep.subr.mxu0 0.0
    %799 = vmatpush1.msra.mxu0 0.0
    %800 = vmatprep.subr.mxu0 0.0
    %801 = vmatpush1.msra.mxu0 0.0
    %802 = vmatprep.subr.mxu0 0.0
    %803 = vmatpush1.msra.mxu0 0.0
    %804 = vmatprep.subr.mxu0 0.0
    %805 = vmatpush1.msra.mxu0 0.0
    %806 = vmatprep.subr.mxu0 0.0
    %807 = vmatpush1.msra.mxu0 %v771
    %808 = vmatprep.subr.mxu0 0.0
    %809 = vmatpush1.msra.mxu0 %v770
    %810 = vmatprep.subr.mxu0 0.0
    %811 = vmatpush2.msra.mxu0 0.0
    %812 = vmatprep.subr.mxu0 0.0
    %813 = vmatpush2.msra.mxu0 0.0
    %814 = vmatprep.subr.mxu0 0.0
    %815 = vmatpush2.msra.mxu0 0.0
    %816 = vmatprep.subr.mxu0 0.0
    %817 = vmatpush2.msra.mxu0 0.0
    %818 = vmatprep.subr.mxu0 0.0
    %819 = vmatpush2.msra.mxu0 0.0
    %820 = vmatprep.subr.mxu0 0.0
    %821 = vmatpush2.msra.mxu0 0.0
    %822 = vmatprep.subr.mxu0 0.0
    %823 = vmatpush2.msra.mxu0 0.0
    %824 = vmatprep.subr.mxu0 0.0
    %825 = vmatpush2.msra.mxu0 0.0
    %826 = vmatprep.subr.mxu0 0.0
    %827 = vmatpush2.msra.mxu0 0.0
    %828 = vmatprep.subr.mxu0 0.0
    %829 = vmatpush2.msra.mxu0 0.0
    %830 = vmatprep.subr.mxu0 0.0
    %831 = vmatpush2.msra.mxu0 0.0
    %832 = vmatprep.subr.mxu0 0.0
    %833 = vmatpush2.msra.mxu0 0.0
    %834 = vmatprep.subr.mxu0 0.0
    %835 = vmatpush2.msra.mxu0 0.0
    %836 = vmatprep.subr.mxu0 0.0
    %837 = vmatpush2.msra.mxu0 0.0
    %838 = vmatprep.subr.mxu0 0.0
    %839 = vmatpush2.msra.mxu0 0.0
    %840 = vmatprep.subr.mxu0 0.0
    %841 = vmatpush2.msra.mxu0 0.0
    %842 = vmatprep.mubr.f32.mxu0 0.0
    %843 = vmatmul.mubr.f32.gmra.mxu0 %v773
    %v844 = vpop.f32.mrf.mxu0
    %v845 = vadd.f32 0.0, %v844
    %v846 = vpop.f32.mrf.mxu0
    %847 = vmatprep.mubr.f32.mxu0 0.0
    %848 = vmatmul.mubr.f32.gmra.mxu0 %v776
    %v849 = vpop.f32.mrf.mxu0
    %v850 = vadd.f32 0.0, %v849
    %v851 = vpop.f32.mrf.mxu0
    %852 = vdwg.mxu0
    %v853 = vadd.f32 %v683, %v845
    %v854 = vadd.f32 %v684, %v850
    %s855 = scalar_lea.vmem [#allocation5], 64
    %v856 = vld [vmem:[%s855] sm:$0xff]
    %v857 = vld [vmem:[%s855 + $0x8] sm:$0xff]
    %v859 = vsel %vm182, %v856, 0
    %v862 = vsel %vm182, %v857, 0
    %864 = vmatprep.subr.mxu0 0.0
    %865 = vmatpush1.msra.mxu0 0.0
    %866 = vmatprep.subr.mxu0 0.0
    %867 = vmatpush1.msra.mxu0 0.0
    %868 = vmatprep.subr.mxu0 0.0
    %869 = vmatpush1.msra.mxu0 0.0
    %870 = vmatprep.subr.mxu0 0.0
    %871 = vmatpush1.msra.mxu0 0.0
    %872 = vmatprep.subr.mxu0 0.0
    %873 = vmatpush1.msra.mxu0 0.0
    %874 = vmatprep.subr.mxu0 0.0
    %875 = vmatpush1.msra.mxu0 0.0
    %876 = vmatprep.subr.mxu0 0.0
    %877 = vmatpush1.msra.mxu0 0.0
    %878 = vmatprep.subr.mxu0 0.0
    %879 = vmatpush1.msra.mxu0 0.0
    %880 = vmatprep.subr.mxu0 0.0
    %881 = vmatpush1.msra.mxu0 %v155
    %882 = vmatprep.subr.mxu0 0.0
    %883 = vmatpush1.msra.mxu0 %v154
    %884 = vmatprep.subr.mxu0 0.0
    %885 = vmatpush1.msra.mxu0 %v153
    %886 = vmatprep.subr.mxu0 0.0
    %887 = vmatpush1.msra.mxu0 %v152
    %888 = vmatprep.subr.mxu0 0.0
    %889 = vmatpush1.msra.mxu0 %v151
    %890 = vmatprep.subr.mxu0 0.0
    %891 = vmatpush1.msra.mxu0 %v150
    %892 = vmatprep.subr.mxu0 0.0
    %893 = vmatpush1.msra.mxu0 %v149
    %894 = vmatprep.subr.mxu0 0.0
    %895 = vmatpush1.msra.mxu0 %v148
    %896 = vmatprep.subr.mxu0 0.0
    %897 = vmatpush2.msra.mxu0 0.0
    %898 = vmatprep.subr.mxu0 0.0
    %899 = vmatpush2.msra.mxu0 0.0
    %900 = vmatprep.subr.mxu0 0.0
    %901 = vmatpush2.msra.mxu0 0.0
    %902 = vmatprep.subr.mxu0 0.0
    %903 = vmatpush2.msra.mxu0 0.0
    %904 = vmatprep.subr.mxu0 0.0
    %905 = vmatpush2.msra.mxu0 0.0
    %906 = vmatprep.subr.mxu0 0.0
    %907 = vmatpush2.msra.mxu0 0.0
    %908 = vmatprep.subr.mxu0 0.0
    %909 = vmatpush2.msra.mxu0 0.0
    %910 = vmatprep.subr.mxu0 0.0
    %911 = vmatpush2.msra.mxu0 0.0
    %912 = vmatprep.subr.mxu0 0.0
    %913 = vmatpush2.msra.mxu0 0.0
    %914 = vmatprep.subr.mxu0 0.0
    %915 = vmatpush2.msra.mxu0 0.0
    %916 = vmatprep.subr.mxu0 0.0
    %917 = vmatpush2.msra.mxu0 0.0
    %918 = vmatprep.subr.mxu0 0.0
    %919 = vmatpush2.msra.mxu0 0.0
    %920 = vmatprep.subr.mxu0 0.0
    %921 = vmatpush2.msra.mxu0 0.0
    %922 = vmatprep.subr.mxu0 0.0
    %923 = vmatpush2.msra.mxu0 0.0
    %924 = vmatprep.subr.mxu0 0.0
    %925 = vmatpush2.msra.mxu0 0.0
    %926 = vmatprep.subr.mxu0 0.0
    %927 = vmatpush2.msra.mxu0 0.0
    %928 = vmatprep.mubr.f32.mxu0 0.0
    %929 = vmatmul.mubr.f32.gmra.mxu0 %v859
    %v930 = vpop.f32.mrf.mxu0
    %v931 = vadd.f32 0.0, %v930
    %v932 = vpop.f32.mrf.mxu0
    %933 = vmatprep.mubr.f32.mxu0 0.0
    %934 = vmatmul.mubr.f32.gmra.mxu0 %v862
    %v935 = vpop.f32.mrf.mxu0
    %v936 = vadd.f32 0.0, %v935
    %v937 = vpop.f32.mrf.mxu0
    %938 = vdwg.mxu0
    %s939 = scalar_lea.vmem [#allocation7], 64
    %v940 = vld [vmem:[%s939] sm:$0xff]
    %v941 = vld [vmem:[%s939 + $0x8] sm:$0xff]
    %v943 = vsel %vm156, %v931, 0
    %v946 = vsel %vm156, %v936, 0
    %948 = vmatprep.subr.mxu0 0.0
    %949 = vmatpush1.msra.mxu0 0.0
    %950 = vmatprep.subr.mxu0 0.0
    %951 = vmatpush1.msra.mxu0 0.0
    %952 = vmatprep.subr.mxu0 0.0
    %953 = vmatpush1.msra.mxu0 0.0
    %954 = vmatprep.subr.mxu0 0.0
    %955 = vmatpush1.msra.mxu0 0.0
    %956 = vmatprep.subr.mxu0 0.0
    %957 = vmatpush1.msra.mxu0 0.0
    %958 = vmatprep.subr.mxu0 0.0
    %959 = vmatpush1.msra.mxu0 0.0
    %960 = vmatprep.subr.mxu0 0.0
    %961 = vmatpush1.msra.mxu0 0.0
    %962 = vmatprep.subr.mxu0 0.0
    %963 = vmatpush1.msra.mxu0 0.0
    %964 = vmatprep.subr.mxu0 0.0
    %965 = vmatpush1.msra.mxu0 0.0
    %966 = vmatprep.subr.mxu0 0.0
    %967 = vmatpush1.msra.mxu0 0.0
    %968 = vmatprep.subr.mxu0 0.0
    %969 = vmatpush1.msra.mxu0 0.0
    %970 = vmatprep.subr.mxu0 0.0
    %971 = vmatpush1.msra.mxu0 0.0
    %972 = vmatprep.subr.mxu0 0.0
    %973 = vmatpush1.msra.mxu0 0.0
    %974 = vmatprep.subr.mxu0 0.0
    %975 = vmatpush1.msra.mxu0 0.0
    %976 = vmatprep.subr.mxu0 0.0
    %977 = vmatpush1.msra.mxu0 %v941
    %978 = vmatprep.subr.mxu0 0.0
    %979 = vmatpush1.msra.mxu0 %v940
    %980 = vmatprep.subr.mxu0 0.0
    %981 = vmatpush2.msra.mxu0 0.0
    %982 = vmatprep.subr.mxu0 0.0
    %983 = vmatpush2.msra.mxu0 0.0
    %984 = vmatprep.subr.mxu0 0.0
    %985 = vmatpush2.msra.mxu0 0.0
    %986 = vmatprep.subr.mxu0 0.0
    %987 = vmatpush2.msra.mxu0 0.0
    %988 = vmatprep.subr.mxu0 0.0
    %989 = vmatpush2.msra.mxu0 0.0
    %990 = vmatprep.subr.mxu0 0.0
    %991 = vmatpush2.msra.mxu0 0.0
    %992 = vmatprep.subr.mxu0 0.0
    %993 = vmatpush2.msra.mxu0 0.0
    %994 = vmatprep.subr.mxu0 0.0
    %995 = vmatpush2.msra.mxu0 0.0
    %996 = vmatprep.subr.mxu0 0.0
    %997 = vmatpush2.msra.mxu0 0.0
    %998 = vmatprep.subr.mxu0 0.0
    %999 = vmatpush2.msra.mxu0 0.0
    %1000 = vmatprep.subr.mxu0 0.0
    %1001 = vmatpush2.msra.mxu0 0.0
    %1002 = vmatprep.subr.mxu0 0.0
    %1003 = vmatpush2.msra.mxu0 0.0
    %1004 = vmatprep.subr.mxu0 0.0
    %1005 = vmatpush2.msra.mxu0 0.0
    %1006 = vmatprep.subr.mxu0 0.0
    %1007 = vmatpush2.msra.mxu0 0.0
    %1008 = vmatprep.subr.mxu0 0.0
    %1009 = vmatpush2.msra.mxu0 0.0
    %1010 = vmatprep.subr.mxu0 0.0
    %1011 = vmatpush2.msra.mxu0 0.0
    %1012 = vmatprep.mubr.f32.mxu0 0.0
    %1013 = vmatmul.mubr.f32.gmra.mxu0 %v943
    %v1014 = vpop.f32.mrf.mxu0
    %v1015 = vadd.f32 0.0, %v1014
    %v1016 = vpop.f32.mrf.mxu0
    %1017 = vmatprep.mubr.f32.mxu0 0.0
    %1018 = vmatmul.mubr.f32.gmra.mxu0 %v946
    %v1019 = vpop.f32.mrf.mxu0
    %v1020 = vadd.f32 0.0, %v1019
    %v1021 = vpop.f32.mrf.mxu0
    %1022 = vdwg.mxu0
    %v1023 = vadd.f32 %v853, %v1015
    %v1024 = vadd.f32 %v854, %v1020
    %s1025 = scalar_lea.vmem [#allocation5], 80
    %v1026 = vld [vmem:[%s1025] sm:$0xff]
    %v1027 = vld [vmem:[%s1025 + $0x8] sm:$0xff]
    %v1029 = vsel %vm182, %v1026, 0
    %v1032 = vsel %vm182, %v1027, 0
    %1034 = vmatprep.subr.mxu0 0.0
    %1035 = vmatpush1.msra.mxu0 0.0
    %1036 = vmatprep.subr.mxu0 0.0
    %1037 = vmatpush1.msra.mxu0 0.0
    %1038 = vmatprep.subr.mxu0 0.0
    %1039 = vmatpush1.msra.mxu0 0.0
    %1040 = vmatprep.subr.mxu0 0.0
    %1041 = vmatpush1.msra.mxu0 0.0
    %1042 = vmatprep.subr.mxu0 0.0
    %1043 = vmatpush1.msra.mxu0 0.0
    %1044 = vmatprep.subr.mxu0 0.0
    %1045 = vmatpush1.msra.mxu0 0.0
    %1046 = vmatprep.subr.mxu0 0.0
    %1047 = vmatpush1.msra.mxu0 0.0
    %1048 = vmatprep.subr.mxu0 0.0
    %1049 = vmatpush1.msra.mxu0 0.0
    %1050 = vmatprep.subr.mxu0 0.0
    %1051 = vmatpush1.msra.mxu0 %v155
    %1052 = vmatprep.subr.mxu0 0.0
    %1053 = vmatpush1.msra.mxu0 %v154
    %1054 = vmatprep.subr.mxu0 0.0
    %1055 = vmatpush1.msra.mxu0 %v153
    %1056 = vmatprep.subr.mxu0 0.0
    %1057 = vmatpush1.msra.mxu0 %v152
    %1058 = vmatprep.subr.mxu0 0.0
    %1059 = vmatpush1.msra.mxu0 %v151
    %1060 = vmatprep.subr.mxu0 0.0
    %1061 = vmatpush1.msra.mxu0 %v150
    %1062 = vmatprep.subr.mxu0 0.0
    %1063 = vmatpush1.msra.mxu0 %v149
    %1064 = vmatprep.subr.mxu0 0.0
    %1065 = vmatpush1.msra.mxu0 %v148
    %1066 = vmatprep.subr.mxu0 0.0
    %1067 = vmatpush2.msra.mxu0 0.0
    %1068 = vmatprep.subr.mxu0 0.0
    %1069 = vmatpush2.msra.mxu0 0.0
    %1070 = vmatprep.subr.mxu0 0.0
    %1071 = vmatpush2.msra.mxu0 0.0
    %1072 = vmatprep.subr.mxu0 0.0
    %1073 = vmatpush2.msra.mxu0 0.0
    %1074 = vmatprep.subr.mxu0 0.0
    %1075 = vmatpush2.msra.mxu0 0.0
    %1076 = vmatprep.subr.mxu0 0.0
    %1077 = vmatpush2.msra.mxu0 0.0
    %1078 = vmatprep.subr.mxu0 0.0
    %1079 = vmatpush2.msra.mxu0 0.0
    %1080 = vmatprep.subr.mxu0 0.0
    %1081 = vmatpush2.msra.mxu0 0.0
    %1082 = vmatprep.subr.mxu0 0.0
    %1083 = vmatpush2.msra.mxu0 0.0
    %1084 = vmatprep.subr.mxu0 0.0
    %1085 = vmatpush2.msra.mxu0 0.0
    %1086 = vmatprep.subr.mxu0 0.0
    %1087 = vmatpush2.msra.mxu0 0.0
    %1088 = vmatprep.subr.mxu0 0.0
    %1089 = vmatpush2.msra.mxu0 0.0
    %1090 = vmatprep.subr.mxu0 0.0
    %1091 = vmatpush2.msra.mxu0 0.0
    %1092 = vmatprep.subr.mxu0 0.0
    %1093 = vmatpush2.msra.mxu0 0.0
    %1094 = vmatprep.subr.mxu0 0.0
    %1095 = vmatpush2.msra.mxu0 0.0
    %1096 = vmatprep.subr.mxu0 0.0
    %1097 = vmatpush2.msra.mxu0 0.0
    %1098 = vmatprep.mubr.f32.mxu0 0.0
    %1099 = vmatmul.mubr.f32.gmra.mxu0 %v1029
    %v1100 = vpop.f32.mrf.mxu0
    %v1101 = vadd.f32 0.0, %v1100
    %v1102 = vpop.f32.mrf.mxu0
    %1103 = vmatprep.mubr.f32.mxu0 0.0
    %1104 = vmatmul.mubr.f32.gmra.mxu0 %v1032
    %v1105 = vpop.f32.mrf.mxu0
    %v1106 = vadd.f32 0.0, %v1105
    %v1107 = vpop.f32.mrf.mxu0
    %1108 = vdwg.mxu0
    %s1109 = scalar_lea.vmem [#allocation7], 80
    %v1110 = vld [vmem:[%s1109] sm:$0xff]
    %v1111 = vld [vmem:[%s1109 + $0x8] sm:$0xff]
    %v1113 = vsel %vm156, %v1101, 0
    %v1116 = vsel %vm156, %v1106, 0
    %1118 = vmatprep.subr.mxu0 0.0
    %1119 = vmatpush1.msra.mxu0 0.0
    %1120 = vmatprep.subr.mxu0 0.0
    %1121 = vmatpush1.msra.mxu0 0.0
    %1122 = vmatprep.subr.mxu0 0.0
    %1123 = vmatpush1.msra.mxu0 0.0
    %1124 = vmatprep.subr.mxu0 0.0
    %1125 = vmatpush1.msra.mxu0 0.0
    %1126 = vmatprep.subr.mxu0 0.0
    %1127 = vmatpush1.msra.mxu0 0.0
    %1128 = vmatprep.subr.mxu0 0.0
    %1129 = vmatpush1.msra.mxu0 0.0
    %1130 = vmatprep.subr.mxu0 0.0
    %1131 = vmatpush1.msra.mxu0 0.0
    %1132 = vmatprep.subr.mxu0 0.0
    %1133 = vmatpush1.msra.mxu0 0.0
    %1134 = vmatprep.subr.mxu0 0.0
    %1135 = vmatpush1.msra.mxu0 0.0
    %1136 = vmatprep.subr.mxu0 0.0
    %1137 = vmatpush1.msra.mxu0 0.0
    %1138 = vmatprep.subr.mxu0 0.0
    %1139 = vmatpush1.msra.mxu0 0.0
    %1140 = vmatprep.subr.mxu0 0.0
    %1141 = vmatpush1.msra.mxu0 0.0
    %1142 = vmatprep.subr.mxu0 0.0
    %1143 = vmatpush1.msra.mxu0 0.0
    %1144 = vmatprep.subr.mxu0 0.0
    %1145 = vmatpush1.msra.mxu0 0.0
    %1146 = vmatprep.subr.mxu0 0.0
    %1147 = vmatpush1.msra.mxu0 %v1111
    %1148 = vmatprep.subr.mxu0 0.0
    %1149 = vmatpush1.msra.mxu0 %v1110
    %1150 = vmatprep.subr.mxu0 0.0
    %1151 = vmatpush2.msra.mxu0 0.0
    %1152 = vmatprep.subr.mxu0 0.0
    %1153 = vmatpush2.msra.mxu0 0.0
    %1154 = vmatprep.subr.mxu0 0.0
    %1155 = vmatpush2.msra.mxu0 0.0
    %1156 = vmatprep.subr.mxu0 0.0
    %1157 = vmatpush2.msra.mxu0 0.0
    %1158 = vmatprep.subr.mxu0 0.0
    %1159 = vmatpush2.msra.mxu0 0.0
    %1160 = vmatprep.subr.mxu0 0.0
    %1161 = vmatpush2.msra.mxu0 0.0
    %1162 = vmatprep.subr.mxu0 0.0
    %1163 = vmatpush2.msra.mxu0 0.0
    %1164 = vmatprep.subr.mxu0 0.0
    %1165 = vmatpush2.msra.mxu0 0.0
    %1166 = vmatprep.subr.mxu0 0.0
    %1167 = vmatpush2.msra.mxu0 0.0
    %1168 = vmatprep.subr.mxu0 0.0
    %1169 = vmatpush2.msra.mxu0 0.0
    %1170 = vmatprep.subr.mxu0 0.0
    %1171 = vmatpush2.msra.mxu0 0.0
    %1172 = vmatprep.subr.mxu0 0.0
    %1173 = vmatpush2.msra.mxu0 0.0
    %1174 = vmatprep.subr.mxu0 0.0
    %1175 = vmatpush2.msra.mxu0 0.0
    %1176 = vmatprep.subr.mxu0 0.0
    %1177 = vmatpush2.msra.mxu0 0.0
    %1178 = vmatprep.subr.mxu0 0.0
    %1179 = vmatpush2.msra.mxu0 0.0
    %1180 = vmatprep.subr.mxu0 0.0
    %1181 = vmatpush2.msra.mxu0 0.0
    %1182 = vmatprep.mubr.f32.mxu0 0.0
    %1183 = vmatmul.mubr.f32.gmra.mxu0 %v1113
    %v1184 = vpop.f32.mrf.mxu0
    %v1185 = vadd.f32 0.0, %v1184
    %v1186 = vpop.f32.mrf.mxu0
    %1187 = vmatprep.mubr.f32.mxu0 0.0
    %1188 = vmatmul.mubr.f32.gmra.mxu0 %v1116
    %v1189 = vpop.f32.mrf.mxu0
    %v1190 = vadd.f32 0.0, %v1189
    %v1191 = vpop.f32.mrf.mxu0
    %1192 = vdwg.mxu0
    %v1193 = vadd.f32 %v1023, %v1185
    %v1194 = vadd.f32 %v1024, %v1190
    %s1195 = scalar_lea.vmem [#allocation5], 96
    %v1196 = vld [vmem:[%s1195] sm:$0xff]
    %v1197 = vld [vmem:[%s1195 + $0x8] sm:$0xff]
    %v1199 = vsel %vm182, %v1196, 0
    %v1202 = vsel %vm182, %v1197, 0
    %1204 = vmatprep.subr.mxu0 0.0
    %1205 = vmatpush1.msra.mxu0 0.0
    %1206 = vmatprep.subr.mxu0 0.0
    %1207 = vmatpush1.msra.mxu0 0.0
    %1208 = vmatprep.subr.mxu0 0.0
    %1209 = vmatpush1.msra.mxu0 0.0
    %1210 = vmatprep.subr.mxu0 0.0
    %1211 = vmatpush1.msra.mxu0 0.0
    %1212 = vmatprep.subr.mxu0 0.0
    %1213 = vmatpush1.msra.mxu0 0.0
    %1214 = vmatprep.subr.mxu0 0.0
    %1215 = vmatpush1.msra.mxu0 0.0
    %1216 = vmatprep.subr.mxu0 0.0
    %1217 = vmatpush1.msra.mxu0 0.0
    %1218 = vmatprep.subr.mxu0 0.0
    %1219 = vmatpush1.msra.mxu0 0.0
    %1220 = vmatprep.subr.mxu0 0.0
    %1221 = vmatpush1.msra.mxu0 %v155
    %1222 = vmatprep.subr.mxu0 0.0
    %1223 = vmatpush1.msra.mxu0 %v154
    %1224 = vmatprep.subr.mxu0 0.0
    %1225 = vmatpush1.msra.mxu0 %v153
    %1226 = vmatprep.subr.mxu0 0.0
    %1227 = vmatpush1.msra.mxu0 %v152
    %1228 = vmatprep.subr.mxu0 0.0
    %1229 = vmatpush1.msra.mxu0 %v151
    %1230 = vmatprep.subr.mxu0 0.0
    %1231 = vmatpush1.msra.mxu0 %v150
    %1232 = vmatprep.subr.mxu0 0.0
    %1233 = vmatpush1.msra.mxu0 %v149
    %1234 = vmatprep.subr.mxu0 0.0
    %1235 = vmatpush1.msra.mxu0 %v148
    %1236 = vmatprep.subr.mxu0 0.0
    %1237 = vmatpush2.msra.mxu0 0.0
    %1238 = vmatprep.subr.mxu0 0.0
    %1239 = vmatpush2.msra.mxu0 0.0
    %1240 = vmatprep.subr.mxu0 0.0
    %1241 = vmatpush2.msra.mxu0 0.0
    %1242 = vmatprep.subr.mxu0 0.0
    %1243 = vmatpush2.msra.mxu0 0.0
    %1244 = vmatprep.subr.mxu0 0.0
    %1245 = vmatpush2.msra.mxu0 0.0
    %1246 = vmatprep.subr.mxu0 0.0
    %1247 = vmatpush2.msra.mxu0 0.0
    %1248 = vmatprep.subr.mxu0 0.0
    %1249 = vmatpush2.msra.mxu0 0.0
    %1250 = vmatprep.subr.mxu0 0.0
    %1251 = vmatpush2.msra.mxu0 0.0
    %1252 = vmatprep.subr.mxu0 0.0
    %1253 = vmatpush2.msra.mxu0 0.0
    %1254 = vmatprep.subr.mxu0 0.0
    %1255 = vmatpush2.msra.mxu0 0.0
    %1256 = vmatprep.subr.mxu0 0.0
    %1257 = vmatpush2.msra.mxu0 0.0
    %1258 = vmatprep.subr.mxu0 0.0
    %1259 = vmatpush2.msra.mxu0 0.0
    %1260 = vmatprep.subr.mxu0 0.0
    %1261 = vmatpush2.msra.mxu0 0.0
    %1262 = vmatprep.subr.mxu0 0.0
    %1263 = vmatpush2.msra.mxu0 0.0
    %1264 = vmatprep.subr.mxu0 0.0
    %1265 = vmatpush2.msra.mxu0 0.0
    %1266 = vmatprep.subr.mxu0 0.0
    %1267 = vmatpush2.msra.mxu0 0.0
    %1268 = vmatprep.mubr.f32.mxu0 0.0
    %1269 = vmatmul.mubr.f32.gmra.mxu0 %v1199
    %v1270 = vpop.f32.mrf.mxu0
    %v1271 = vadd.f32 0.0, %v1270
    %v1272 = vpop.f32.mrf.mxu0
    %1273 = vmatprep.mubr.f32.mxu0 0.0
    %1274 = vmatmul.mubr.f32.gmra.mxu0 %v1202
    %v1275 = vpop.f32.mrf.mxu0
    %v1276 = vadd.f32 0.0, %v1275
    %v1277 = vpop.f32.mrf.mxu0
    %1278 = vdwg.mxu0
    %s1279 = scalar_lea.vmem [#allocation7], 96
    %v1280 = vld [vmem:[%s1279] sm:$0xff]
    %v1281 = vld [vmem:[%s1279 + $0x8] sm:$0xff]
    %v1283 = vsel %vm156, %v1271, 0
    %v1286 = vsel %vm156, %v1276, 0
    %1288 = vmatprep.subr.mxu0 0.0
    %1289 = vmatpush1.msra.mxu0 0.0
    %1290 = vmatprep.subr.mxu0 0.0
    %1291 = vmatpush1.msra.mxu0 0.0
    %1292 = vmatprep.subr.mxu0 0.0
    %1293 = vmatpush1.msra.mxu0 0.0
    %1294 = vmatprep.subr.mxu0 0.0
    %1295 = vmatpush1.msra.mxu0 0.0
    %1296 = vmatprep.subr.mxu0 0.0
    %1297 = vmatpush1.msra.mxu0 0.0
    %1298 = vmatprep.subr.mxu0 0.0
    %1299 = vmatpush1.msra.mxu0 0.0
    %1300 = vmatprep.subr.mxu0 0.0
    %1301 = vmatpush1.msra.mxu0 0.0
    %1302 = vmatprep.subr.mxu0 0.0
    %1303 = vmatpush1.msra.mxu0 0.0
    %1304 = vmatprep.subr.mxu0 0.0
    %1305 = vmatpush1.msra.mxu0 0.0
    %1306 = vmatprep.subr.mxu0 0.0
    %1307 = vmatpush1.msra.mxu0 0.0
    %1308 = vmatprep.subr.mxu0 0.0
    %1309 = vmatpush1.msra.mxu0 0.0
    %1310 = vmatprep.subr.mxu0 0.0
    %1311 = vmatpush1.msra.mxu0 0.0
    %1312 = vmatprep.subr.mxu0 0.0
    %1313 = vmatpush1.msra.mxu0 0.0
    %1314 = vmatprep.subr.mxu0 0.0
    %1315 = vmatpush1.msra.mxu0 0.0
    %1316 = vmatprep.subr.mxu0 0.0
    %1317 = vmatpush1.msra.mxu0 %v1281
    %1318 = vmatprep.subr.mxu0 0.0
    %1319 = vmatpush1.msra.mxu0 %v1280
    %1320 = vmatprep.subr.mxu0 0.0
    %1321 = vmatpush2.msra.mxu0 0.0
    %1322 = vmatprep.subr.mxu0 0.0
    %1323 = vmatpush2.msra.mxu0 0.0
    %1324 = vmatprep.subr.mxu0 0.0
    %1325 = vmatpush2.msra.mxu0 0.0
    %1326 = vmatprep.subr.mxu0 0.0
    %1327 = vmatpush2.msra.mxu0 0.0
    %1328 = vmatprep.subr.mxu0 0.0
    %1329 = vmatpush2.msra.mxu0 0.0
    %1330 = vmatprep.subr.mxu0 0.0
    %1331 = vmatpush2.msra.mxu0 0.0
    %1332 = vmatprep.subr.mxu0 0.0
    %1333 = vmatpush2.msra.mxu0 0.0
    %1334 = vmatprep.subr.mxu0 0.0
    %1335 = vmatpush2.msra.mxu0 0.0
    %1336 = vmatprep.subr.mxu0 0.0
    %1337 = vmatpush2.msra.mxu0 0.0
    %1338 = vmatprep.subr.mxu0 0.0
    %1339 = vmatpush2.msra.mxu0 0.0
    %1340 = vmatprep.subr.mxu0 0.0
    %1341 = vmatpush2.msra.mxu0 0.0
    %1342 = vmatprep.subr.mxu0 0.0
    %1343 = vmatpush2.msra.mxu0 0.0
    %1344 = vmatprep.subr.mxu0 0.0
    %1345 = vmatpush2.msra.mxu0 0.0
    %1346 = vmatprep.subr.mxu0 0.0
    %1347 = vmatpush2.msra.mxu0 0.0
    %1348 = vmatprep.subr.mxu0 0.0
    %1349 = vmatpush2.msra.mxu0 0.0
    %1350 = vmatprep.subr.mxu0 0.0
    %1351 = vmatpush2.msra.mxu0 0.0
    %1352 = vmatprep.mubr.f32.mxu0 0.0
    %1353 = vmatmul.mubr.f32.gmra.mxu0 %v1283
    %v1354 = vpop.f32.mrf.mxu0
    %v1355 = vadd.f32 0.0, %v1354
    %v1356 = vpop.f32.mrf.mxu0
    %1357 = vmatprep.mubr.f32.mxu0 0.0
    %1358 = vmatmul.mubr.f32.gmra.mxu0 %v1286
    %v1359 = vpop.f32.mrf.mxu0
    %v1360 = vadd.f32 0.0, %v1359
    %v1361 = vpop.f32.mrf.mxu0
    %1362 = vdwg.mxu0
    %v1363 = vadd.f32 %v1193, %v1355
    %v1364 = vadd.f32 %v1194, %v1360
    %s1365 = scalar_lea.vmem [#allocation5], 112
    %v1366 = vld [vmem:[%s1365] sm:$0xff]
    %v1367 = vld [vmem:[%s1365 + $0x8] sm:$0xff]
    %v1369 = vsel %vm182, %v1366, 0
    %v1372 = vsel %vm182, %v1367, 0
    %1374 = vmatprep.subr.mxu0 0.0
    %1375 = vmatpush1.msra.mxu0 0.0
    %1376 = vmatprep.subr.mxu0 0.0
    %1377 = vmatpush1.msra.mxu0 0.0
    %1378 = vmatprep.subr.mxu0 0.0
    %1379 = vmatpush1.msra.mxu0 0.0
    %1380 = vmatprep.subr.mxu0 0.0
    %1381 = vmatpush1.msra.mxu0 0.0
    %1382 = vmatprep.subr.mxu0 0.0
    %1383 = vmatpush1.msra.mxu0 0.0
    %1384 = vmatprep.subr.mxu0 0.0
    %1385 = vmatpush1.msra.mxu0 0.0
    %1386 = vmatprep.subr.mxu0 0.0
    %1387 = vmatpush1.msra.mxu0 0.0
    %1388 = vmatprep.subr.mxu0 0.0
    %1389 = vmatpush1.msra.mxu0 0.0
    %1390 = vmatprep.subr.mxu0 0.0
    %1391 = vmatpush1.msra.mxu0 %v155
    %1392 = vmatprep.subr.mxu0 0.0
    %1393 = vmatpush1.msra.mxu0 %v154
    %1394 = vmatprep.subr.mxu0 0.0
    %1395 = vmatpush1.msra.mxu0 %v153
    %1396 = vmatprep.subr.mxu0 0.0
    %1397 = vmatpush1.msra.mxu0 %v152
    %1398 = vmatprep.subr.mxu0 0.0
    %1399 = vmatpush1.msra.mxu0 %v151
    %1400 = vmatprep.subr.mxu0 0.0
    %1401 = vmatpush1.msra.mxu0 %v150
    %1402 = vmatprep.subr.mxu0 0.0
    %1403 = vmatpush1.msra.mxu0 %v149
    %1404 = vmatprep.subr.mxu0 0.0
    %1405 = vmatpush1.msra.mxu0 %v148
    %1406 = vmatprep.subr.mxu0 0.0
    %1407 = vmatpush2.msra.mxu0 0.0
    %1408 = vmatprep.subr.mxu0 0.0
    %1409 = vmatpush2.msra.mxu0 0.0
    %1410 = vmatprep.subr.mxu0 0.0
    %1411 = vmatpush2.msra.mxu0 0.0
    %1412 = vmatprep.subr.mxu0 0.0
    %1413 = vmatpush2.msra.mxu0 0.0
    %1414 = vmatprep.subr.mxu0 0.0
    %1415 = vmatpush2.msra.mxu0 0.0
    %1416 = vmatprep.subr.mxu0 0.0
    %1417 = vmatpush2.msra.mxu0 0.0
    %1418 = vmatprep.subr.mxu0 0.0
    %1419 = vmatpush2.msra.mxu0 0.0
    %1420 = vmatprep.subr.mxu0 0.0
    %1421 = vmatpush2.msra.mxu0 0.0
    %1422 = vmatprep.subr.mxu0 0.0
    %1423 = vmatpush2.msra.mxu0 0.0
    %1424 = vmatprep.subr.mxu0 0.0
    %1425 = vmatpush2.msra.mxu0 0.0
    %1426 = vmatprep.subr.mxu0 0.0
    %1427 = vmatpush2.msra.mxu0 0.0
    %1428 = vmatprep.subr.mxu0 0.0
    %1429 = vmatpush2.msra.mxu0 0.0
    %1430 = vmatprep.subr.mxu0 0.0
    %1431 = vmatpush2.msra.mxu0 0.0
    %1432 = vmatprep.subr.mxu0 0.0
    %1433 = vmatpush2.msra.mxu0 0.0
    %1434 = vmatprep.subr.mxu0 0.0
    %1435 = vmatpush2.msra.mxu0 0.0
    %1436 = vmatprep.subr.mxu0 0.0
    %1437 = vmatpush2.msra.mxu0 0.0
    %1438 = vmatprep.mubr.f32.mxu0 0.0
    %1439 = vmatmul.mubr.f32.gmra.mxu0 %v1369
    %v1440 = vpop.f32.mrf.mxu0
    %v1441 = vadd.f32 0.0, %v1440
    %v1442 = vpop.f32.mrf.mxu0
    %1443 = vmatprep.mubr.f32.mxu0 0.0
    %1444 = vmatmul.mubr.f32.gmra.mxu0 %v1372
    %v1445 = vpop.f32.mrf.mxu0
    %v1446 = vadd.f32 0.0, %v1445
    %v1447 = vpop.f32.mrf.mxu0
    %1448 = vdwg.mxu0
    %s1449 = scalar_lea.vmem [#allocation7], 112
    %v1450 = vld [vmem:[%s1449] sm:$0xff]
    %v1451 = vld [vmem:[%s1449 + $0x8] sm:$0xff]
    %v1453 = vsel %vm156, %v1441, 0
    %v1456 = vsel %vm156, %v1446, 0
    %1458 = vmatprep.subr.mxu0 0.0
    %1459 = vmatpush1.msra.mxu0 0.0
    %1460 = vmatprep.subr.mxu0 0.0
    %1461 = vmatpush1.msra.mxu0 0.0
    %1462 = vmatprep.subr.mxu0 0.0
    %1463 = vmatpush1.msra.mxu0 0.0
    %1464 = vmatprep.subr.mxu0 0.0
    %1465 = vmatpush1.msra.mxu0 0.0
    %1466 = vmatprep.subr.mxu0 0.0
    %1467 = vmatpush1.msra.mxu0 0.0
    %1468 = vmatprep.subr.mxu0 0.0
    %1469 = vmatpush1.msra.mxu0 0.0
    %1470 = vmatprep.subr.mxu0 0.0
    %1471 = vmatpush1.msra.mxu0 0.0
    %1472 = vmatprep.subr.mxu0 0.0
    %1473 = vmatpush1.msra.mxu0 0.0
    %1474 = vmatprep.subr.mxu0 0.0
    %1475 = vmatpush1.msra.mxu0 0.0
    %1476 = vmatprep.subr.mxu0 0.0
    %1477 = vmatpush1.msra.mxu0 0.0
    %1478 = vmatprep.subr.mxu0 0.0
    %1479 = vmatpush1.msra.mxu0 0.0
    %1480 = vmatprep.subr.mxu0 0.0
    %1481 = vmatpush1.msra.mxu0 0.0
    %1482 = vmatprep.subr.mxu0 0.0
    %1483 = vmatpush1.msra.mxu0 0.0
    %1484 = vmatprep.subr.mxu0 0.0
    %1485 = vmatpush1.msra.mxu0 0.0
    %1486 = vmatprep.subr.mxu0 0.0
    %1487 = vmatpush1.msra.mxu0 %v1451
    %1488 = vmatprep.subr.mxu0 0.0
    %1489 = vmatpush1.msra.mxu0 %v1450
    %1490 = vmatprep.subr.mxu0 0.0
    %1491 = vmatpush2.msra.mxu0 0.0
    %1492 = vmatprep.subr.mxu0 0.0
    %1493 = vmatpush2.msra.mxu0 0.0
    %1494 = vmatprep.subr.mxu0 0.0
    %1495 = vmatpush2.msra.mxu0 0.0
    %1496 = vmatprep.subr.mxu0 0.0
    %1497 = vmatpush2.msra.mxu0 0.0
    %1498 = vmatprep.subr.mxu0 0.0
    %1499 = vmatpush2.msra.mxu0 0.0
    %1500 = vmatprep.subr.mxu0 0.0
    %1501 = vmatpush2.msra.mxu0 0.0
    %1502 = vmatprep.subr.mxu0 0.0
    %1503 = vmatpush2.msra.mxu0 0.0
    %1504 = vmatprep.subr.mxu0 0.0
    %1505 = vmatpush2.msra.mxu0 0.0
    %1506 = vmatprep.subr.mxu0 0.0
    %1507 = vmatpush2.msra.mxu0 0.0
    %1508 = vmatprep.subr.mxu0 0.0
    %1509 = vmatpush2.msra.mxu0 0.0
    %1510 = vmatprep.subr.mxu0 0.0
    %1511 = vmatpush2.msra.mxu0 0.0
    %1512 = vmatprep.subr.mxu0 0.0
    %1513 = vmatpush2.msra.mxu0 0.0
    %1514 = vmatprep.subr.mxu0 0.0
    %1515 = vmatpush2.msra.mxu0 0.0
    %1516 = vmatprep.subr.mxu0 0.0
    %1517 = vmatpush2.msra.mxu0 0.0
    %1518 = vmatprep.subr.mxu0 0.0
    %1519 = vmatpush2.msra.mxu0 0.0
    %1520 = vmatprep.subr.mxu0 0.0
    %1521 = vmatpush2.msra.mxu0 0.0
    %1522 = vmatprep.mubr.f32.mxu0 0.0
    %1523 = vmatmul.mubr.f32.gmra.mxu0 %v1453
    %v1524 = vpop.f32.mrf.mxu0
    %v1525 = vadd.f32 0.0, %v1524
    %v1526 = vpop.f32.mrf.mxu0
    %1527 = vmatprep.mubr.f32.mxu0 0.0
    %1528 = vmatmul.mubr.f32.gmra.mxu0 %v1456
    %v1529 = vpop.f32.mrf.mxu0
    %v1530 = vadd.f32 0.0, %v1529
    %v1531 = vpop.f32.mrf.mxu0
    %1532 = vdwg.mxu0
    %v1533 = vadd.f32 %v1363, %v1525
    %v1534 = vadd.f32 %v1364, %v1530
    %s1535 = scalar_lea.vmem [#allocation5], 128
    %v1536 = vld [vmem:[%s1535] sm:$0xff]
    %v1537 = vld [vmem:[%s1535 + $0x8] sm:$0xff]
    %v1539 = vsel %vm182, %v1536, 0
    %v1542 = vsel %vm182, %v1537, 0
    %1544 = vmatprep.subr.mxu0 0.0
    %1545 = vmatpush1.msra.mxu0 0.0
    %1546 = vmatprep.subr.mxu0 0.0
    %1547 = vmatpush1.msra.mxu0 0.0
    %1548 = vmatprep.subr.mxu0 0.0
    %1549 = vmatpush1.msra.mxu0 0.0
    %1550 = vmatprep.subr.mxu0 0.0
    %1551 = vmatpush1.msra.mxu0 0.0
    %1552 = vmatprep.subr.mxu0 0.0
    %1553 = vmatpush1.msra.mxu0 0.0
    %1554 = vmatprep.subr.mxu0 0.0
    %1555 = vmatpush1.msra.mxu0 0.0
    %1556 = vmatprep.subr.mxu0 0.0
    %1557 = vmatpush1.msra.mxu0 0.0
    %1558 = vmatprep.subr.mxu0 0.0
    %1559 = vmatpush1.msra.mxu0 0.0
    %1560 = vmatprep.subr.mxu0 0.0
    %1561 = vmatpush1.msra.mxu0 %v155
    %1562 = vmatprep.subr.mxu0 0.0
    %1563 = vmatpush1.msra.mxu0 %v154
    %1564 = vmatprep.subr.mxu0 0.0
    %1565 = vmatpush1.msra.mxu0 %v153
    %1566 = vmatprep.subr.mxu0 0.0
    %1567 = vmatpush1.msra.mxu0 %v152
    %1568 = vmatprep.subr.mxu0 0.0
    %1569 = vmatpush1.msra.mxu0 %v151
    %1570 = vmatprep.subr.mxu0 0.0
    %1571 = vmatpush1.msra.mxu0 %v150
    %1572 = vmatprep.subr.mxu0 0.0
    %1573 = vmatpush1.msra.mxu0 %v149
    %1574 = vmatprep.subr.mxu0 0.0
    %1575 = vmatpush1.msra.mxu0 %v148
    %1576 = vmatprep.subr.mxu0 0.0
    %1577 = vmatpush2.msra.mxu0 0.0
    %1578 = vmatprep.subr.mxu0 0.0
    %1579 = vmatpush2.msra.mxu0 0.0
    %1580 = vmatprep.subr.mxu0 0.0
    %1581 = vmatpush2.msra.mxu0 0.0
    %1582 = vmatprep.subr.mxu0 0.0
    %1583 = vmatpush2.msra.mxu0 0.0
    %1584 = vmatprep.subr.mxu0 0.0
    %1585 = vmatpush2.msra.mxu0 0.0
    %1586 = vmatprep.subr.mxu0 0.0
    %1587 = vmatpush2.msra.mxu0 0.0
    %1588 = vmatprep.subr.mxu0 0.0
    %1589 = vmatpush2.msra.mxu0 0.0
    %1590 = vmatprep.subr.mxu0 0.0
    %1591 = vmatpush2.msra.mxu0 0.0
    %1592 = vmatprep.subr.mxu0 0.0
    %1593 = vmatpush2.msra.mxu0 0.0
    %1594 = vmatprep.subr.mxu0 0.0
    %1595 = vmatpush2.msra.mxu0 0.0
    %1596 = vmatprep.subr.mxu0 0.0
    %1597 = vmatpush2.msra.mxu0 0.0
    %1598 = vmatprep.subr.mxu0 0.0
    %1599 = vmatpush2.msra.mxu0 0.0
    %1600 = vmatprep.subr.mxu0 0.0
    %1601 = vmatpush2.msra.mxu0 0.0
    %1602 = vmatprep.subr.mxu0 0.0
    %1603 = vmatpush2.msra.mxu0 0.0
    %1604 = vmatprep.subr.mxu0 0.0
    %1605 = vmatpush2.msra.mxu0 0.0
    %1606 = vmatprep.subr.mxu0 0.0
    %1607 = vmatpush2.msra.mxu0 0.0
    %1608 = vmatprep.mubr.f32.mxu0 0.0
    %1609 = vmatmul.mubr.f32.gmra.mxu0 %v1539
    %v1610 = vpop.f32.mrf.mxu0
    %v1611 = vadd.f32 0.0, %v1610
    %v1612 = vpop.f32.mrf.mxu0
    %1613 = vmatprep.mubr.f32.mxu0 0.0
    %1614 = vmatmul.mubr.f32.gmra.mxu0 %v1542
    %v1615 = vpop.f32.mrf.mxu0
    %v1616 = vadd.f32 0.0, %v1615
    %v1617 = vpop.f32.mrf.mxu0
    %1618 = vdwg.mxu0
    %s1619 = scalar_lea.vmem [#allocation7], 128
    %v1620 = vld [vmem:[%s1619] sm:$0xff]
    %v1621 = vld [vmem:[%s1619 + $0x8] sm:$0xff]
    %v1623 = vsel %vm156, %v1611, 0
    %v1626 = vsel %vm156, %v1616, 0
    %1628 = vmatprep.subr.mxu0 0.0
    %1629 = vmatpush1.msra.mxu0 0.0
    %1630 = vmatprep.subr.mxu0 0.0
    %1631 = vmatpush1.msra.mxu0 0.0
    %1632 = vmatprep.subr.mxu0 0.0
    %1633 = vmatpush1.msra.mxu0 0.0
    %1634 = vmatprep.subr.mxu0 0.0
    %1635 = vmatpush1.msra.mxu0 0.0
    %1636 = vmatprep.subr.mxu0 0.0
    %1637 = vmatpush1.msra.mxu0 0.0
    %1638 = vmatprep.subr.mxu0 0.0
    %1639 = vmatpush1.msra.mxu0 0.0
    %1640 = vmatprep.subr.mxu0 0.0
    %1641 = vmatpush1.msra.mxu0 0.0
    %1642 = vmatprep.subr.mxu0 0.0
    %1643 = vmatpush1.msra.mxu0 0.0
    %1644 = vmatprep.subr.mxu0 0.0
    %1645 = vmatpush1.msra.mxu0 0.0
    %1646 = vmatprep.subr.mxu0 0.0
    %1647 = vmatpush1.msra.mxu0 0.0
    %1648 = vmatprep.subr.mxu0 0.0
    %1649 = vmatpush1.msra.mxu0 0.0
    %1650 = vmatprep.subr.mxu0 0.0
    %1651 = vmatpush1.msra.mxu0 0.0
    %1652 = vmatprep.subr.mxu0 0.0
    %1653 = vmatpush1.msra.mxu0 0.0
    %1654 = vmatprep.subr.mxu0 0.0
    %1655 = vmatpush1.msra.mxu0 0.0
    %1656 = vmatprep.subr.mxu0 0.0
    %1657 = vmatpush1.msra.mxu0 %v1621
    %1658 = vmatprep.subr.mxu0 0.0
    %1659 = vmatpush1.msra.mxu0 %v1620
    %1660 = vmatprep.subr.mxu0 0.0
    %1661 = vmatpush2.msra.mxu0 0.0
    %1662 = vmatprep.subr.mxu0 0.0
    %1663 = vmatpush2.msra.mxu0 0.0
    %1664 = vmatprep.subr.mxu0 0.0
    %1665 = vmatpush2.msra.mxu0 0.0
    %1666 = vmatprep.subr.mxu0 0.0
    %1667 = vmatpush2.msra.mxu0 0.0
    %1668 = vmatprep.subr.mxu0 0.0
    %1669 = vmatpush2.msra.mxu0 0.0
    %1670 = vmatprep.subr.mxu0 0.0
    %1671 = vmatpush2.msra.mxu0 0.0
    %1672 = vmatprep.subr.mxu0 0.0
    %1673 = vmatpush2.msra.mxu0 0.0
    %1674 = vmatprep.subr.mxu0 0.0
    %1675 = vmatpush2.msra.mxu0 0.0
    %1676 = vmatprep.subr.mxu0 0.0
    %1677 = vmatpush2.msra.mxu0 0.0
    %1678 = vmatprep.subr.mxu0 0.0
    %1679 = vmatpush2.msra.mxu0 0.0
    %1680 = vmatprep.subr.mxu0 0.0
    %1681 = vmatpush2.msra.mxu0 0.0
    %1682 = vmatprep.subr.mxu0 0.0
    %1683 = vmatpush2.msra.mxu0 0.0
    %1684 = vmatprep.subr.mxu0 0.0
    %1685 = vmatpush2.msra.mxu0 0.0
    %1686 = vmatprep.subr.mxu0 0.0
    %1687 = vmatpush2.msra.mxu0 0.0
    %1688 = vmatprep.subr.mxu0 0.0
    %1689 = vmatpush2.msra.mxu0 0.0
    %1690 = vmatprep.subr.mxu0 0.0
    %1691 = vmatpush2.msra.mxu0 0.0
    %1692 = vmatprep.mubr.f32.mxu0 0.0
    %1693 = vmatmul.mubr.f32.gmra.mxu0 %v1623
    %v1694 = vpop.f32.mrf.mxu0
    %v1695 = vadd.f32 0.0, %v1694
    %v1696 = vpop.f32.mrf.mxu0
    %1697 = vmatprep.mubr.f32.mxu0 0.0
    %1698 = vmatmul.mubr.f32.gmra.mxu0 %v1626
    %v1699 = vpop.f32.mrf.mxu0
    %v1700 = vadd.f32 0.0, %v1699
    %v1701 = vpop.f32.mrf.mxu0
    %1702 = vdwg.mxu0
    %v1703 = vadd.f32 %v1533, %v1695
    %v1704 = vadd.f32 %v1534, %v1700
    %v1705 = vld [vmem:[%s3] sm:$0x1]
    %v1707 = vlaneseq
    %v1708 = vshrl.u32 %v1707, 7
    %v1709 = vsub.s32 0, %v1708
    %v1710 = vrot.slane %v1705, %v1709
    %v1712 = vadd.f32 %v1703, %v1710
    %v1713 = vadd.f32 %v1704, %v1710
    %v1714 = vmax.f32 %v1712, 0.0
    %v1715 = vmax.f32 %v1713, 0.0
    %vm1716 = vcmask 261120
    %v1717 = vsel %vm1716, %v1714, 0.0
    %v1718 = vsel %vm1716, %v1715, 0.0
    %v1719 = vadd.f32 %v1717, %v1718
    %v1720 = vrot.slane %v1719, 4
    %v1721 = vadd.f32 %v1719, %v1720
    %v1722 = vrot.slane %v1721, 2
    %v1723 = vadd.f32 %v1721, %v1722
    %v1724 = vrot.slane %v1723, 1
    %v1725 = vadd.f32 %v1723, %v1724
    %v1726 = vrcp.pop 16.0
    %v1727 = vmul.f32 %v1725, %v1726
    %v1728 = vld [vmem:[#allocation8] sm:$0xff]
    %v1729 = vld [vmem:[#allocation8 + $0x8] sm:$0x1]
    %v1731 = vsel %vm156, %v1728, 0
    %v1734 = vsel %vm156, %v1729, 0
    %1736 = vmatprep.subr.mxu0 0.0
    %1737 = vmatpush1.msra.mxu0 0.0
    %1738 = vmatprep.subr.mxu0 0.0
    %1739 = vmatpush1.msra.mxu0 0.0
    %1740 = vmatprep.subr.mxu0 0.0
    %1741 = vmatpush1.msra.mxu0 0.0
    %1742 = vmatprep.subr.mxu0 0.0
    %1743 = vmatpush1.msra.mxu0 0.0
    %1744 = vmatprep.subr.mxu0 0.0
    %1745 = vmatpush1.msra.mxu0 0.0
    %1746 = vmatprep.subr.mxu0 0.0
    %1747 = vmatpush1.msra.mxu0 0.0
    %1748 = vmatprep.subr.mxu0 0.0
    %1749 = vmatpush1.msra.mxu0 0.0
    %1750 = vmatprep.subr.mxu0 0.0
    %1751 = vmatpush1.msra.mxu0 0.0
    %1752 = vmatprep.subr.mxu0 0.0
    %1753 = vmatpush1.msra.mxu0 0.0
    %1754 = vmatprep.subr.mxu0 0.0
    %1755 = vmatpush1.msra.mxu0 0.0
    %1756 = vmatprep.subr.mxu0 0.0
    %1757 = vmatpush1.msra.mxu0 0.0
    %1758 = vmatprep.subr.mxu0 0.0
    %1759 = vmatpush1.msra.mxu0 0.0
    %1760 = vmatprep.subr.mxu0 0.0
    %1761 = vmatpush1.msra.mxu0 0.0
    %1762 = vmatprep.subr.mxu0 0.0
    %1763 = vmatpush1.msra.mxu0 0.0
    %1764 = vmatprep.subr.mxu0 0.0
    %1765 = vmatpush1.msra.mxu0 %v1715
    %1766 = vmatprep.subr.mxu0 0.0
    %1767 = vmatpush1.msra.mxu0 %v1714
    %1768 = vmatprep.subr.mxu0 0.0
    %1769 = vmatpush2.msra.mxu0 0.0
    %1770 = vmatprep.subr.mxu0 0.0
    %1771 = vmatpush2.msra.mxu0 0.0
    %1772 = vmatprep.subr.mxu0 0.0
    %1773 = vmatpush2.msra.mxu0 0.0
    %1774 = vmatprep.subr.mxu0 0.0
    %1775 = vmatpush2.msra.mxu0 0.0
    %1776 = vmatprep.subr.mxu0 0.0
    %1777 = vmatpush2.msra.mxu0 0.0
    %1778 = vmatprep.subr.mxu0 0.0
    %1779 = vmatpush2.msra.mxu0 0.0
    %1780 = vmatprep.subr.mxu0 0.0
    %1781 = vmatpush2.msra.mxu0 0.0
    %1782 = vmatprep.subr.mxu0 0.0
    %1783 = vmatpush2.msra.mxu0 0.0
    %1784 = vmatprep.subr.mxu0 0.0
    %1785 = vmatpush2.msra.mxu0 0.0
    %1786 = vmatprep.subr.mxu0 0.0
    %1787 = vmatpush2.msra.mxu0 0.0
    %1788 = vmatprep.subr.mxu0 0.0
    %1789 = vmatpush2.msra.mxu0 0.0
    %1790 = vmatprep.subr.mxu0 0.0
    %1791 = vmatpush2.msra.mxu0 0.0
    %1792 = vmatprep.subr.mxu0 0.0
    %1793 = vmatpush2.msra.mxu0 0.0
    %1794 = vmatprep.subr.mxu0 0.0
    %1795 = vmatpush2.msra.mxu0 0.0
    %1796 = vmatprep.subr.mxu0 0.0
    %1797 = vmatpush2.msra.mxu0 0.0
    %1798 = vmatprep.subr.mxu0 0.0
    %1799 = vmatpush2.msra.mxu0 0.0
    %1800 = vmatprep.mubr.f32.mxu0 0.0
    %1801 = vmatmul.mubr.f32.gmra.mxu0 %v1731
    %v1802 = vpop.f32.mrf.mxu0
    %v1803 = vadd.f32 0.0, %v1802
    %v1804 = vpop.f32.mrf.mxu0
    %1805 = vmatprep.mubr.f32.mxu0 0.0
    %1806 = vmatmul.mubr.f32.gmra.mxu0 %v1734
    %v1807 = vpop.f32.mrf.mxu0
    %v1808 = vadd.f32 0.0, %v1807
    %v1809 = vpop.f32.mrf.mxu0
    %1810 = vdwg.mxu0
    %v1811 = vld [vmem:[#allocation10] sm:$0xff]
    %v1812 = vld [vmem:[#allocation10 + $0x8] sm:$0xff]
    %v1813 = vld [vmem:[#allocation10 + $0x10] sm:$0xff]
    %v1814 = vld [vmem:[#allocation10 + $0x18] sm:$0xff]
    %s1815 = scalar_lea.vmem [#allocation8], 16
    %v1816 = vld [vmem:[%s1815] sm:$0xff]
    %v1817 = vld [vmem:[%s1815 + $0x8] sm:$0x1]
    %v1819 = vsel %vm156, %v1816, 0
    %v1822 = vsel %vm156, %v1817, 0
    %1824 = vmatprep.subr.mxu0 0.0
    %1825 = vmatpush1.msra.mxu0 0.0
    %1826 = vmatprep.subr.mxu0 0.0
    %1827 = vmatpush1.msra.mxu0 0.0
    %1828 = vmatprep.subr.mxu0 0.0
    %1829 = vmatpush1.msra.mxu0 0.0
    %1830 = vmatprep.subr.mxu0 0.0
    %1831 = vmatpush1.msra.mxu0 0.0
    %1832 = vmatprep.subr.mxu0 0.0
    %1833 = vmatpush1.msra.mxu0 0.0
    %1834 = vmatprep.subr.mxu0 0.0
    %1835 = vmatpush1.msra.mxu0 0.0
    %1836 = vmatprep.subr.mxu0 0.0
    %1837 = vmatpush1.msra.mxu0 0.0
    %1838 = vmatprep.subr.mxu0 0.0
    %1839 = vmatpush1.msra.mxu0 0.0
    %1840 = vmatprep.subr.mxu0 0.0
    %1841 = vmatpush1.msra.mxu0 0.0
    %1842 = vmatprep.subr.mxu0 0.0
    %1843 = vmatpush1.msra.mxu0 0.0
    %1844 = vmatprep.subr.mxu0 0.0
    %1845 = vmatpush1.msra.mxu0 0.0
    %1846 = vmatprep.subr.mxu0 0.0
    %1847 = vmatpush1.msra.mxu0 0.0
    %1848 = vmatprep.subr.mxu0 0.0
    %1849 = vmatpush1.msra.mxu0 0.0
    %1850 = vmatprep.subr.mxu0 0.0
    %1851 = vmatpush1.msra.mxu0 0.0
    %1852 = vmatprep.subr.mxu0 0.0
    %1853 = vmatpush1.msra.mxu0 %v1715
    %1854 = vmatprep.subr.mxu0 0.0
    %1855 = vmatpush1.msra.mxu0 %v1714
    %1856 = vmatprep.subr.mxu0 0.0
    %1857 = vmatpush2.msra.mxu0 0.0
    %1858 = vmatprep.subr.mxu0 0.0
    %1859 = vmatpush2.msra.mxu0 0.0
    %1860 = vmatprep.subr.mxu0 0.0
    %1861 = vmatpush2.msra.mxu0 0.0
    %1862 = vmatprep.subr.mxu0 0.0
    %1863 = vmatpush2.msra.mxu0 0.0
    %1864 = vmatprep.subr.mxu0 0.0
    %1865 = vmatpush2.msra.mxu0 0.0
    %1866 = vmatprep.subr.mxu0 0.0
    %1867 = vmatpush2.msra.mxu0 0.0
    %1868 = vmatprep.subr.mxu0 0.0
    %1869 = vmatpush2.msra.mxu0 0.0
    %1870 = vmatprep.subr.mxu0 0.0
    %1871 = vmatpush2.msra.mxu0 0.0
    %1872 = vmatprep.subr.mxu0 0.0
    %1873 = vmatpush2.msra.mxu0 0.0
    %1874 = vmatprep.subr.mxu0 0.0
    %1875 = vmatpush2.msra.mxu0 0.0
    %1876 = vmatprep.subr.mxu0 0.0
    %1877 = vmatpush2.msra.mxu0 0.0
    %1878 = vmatprep.subr.mxu0 0.0
    %1879 = vmatpush2.msra.mxu0 0.0
    %1880 = vmatprep.subr.mxu0 0.0
    %1881 = vmatpush2.msra.mxu0 0.0
    %1882 = vmatprep.subr.mxu0 0.0
    %1883 = vmatpush2.msra.mxu0 0.0
    %1884 = vmatprep.subr.mxu0 0.0
    %1885 = vmatpush2.msra.mxu0 0.0
    %1886 = vmatprep.subr.mxu0 0.0
    %1887 = vmatpush2.msra.mxu0 0.0
    %1888 = vmatprep.mubr.f32.mxu0 0.0
    %1889 = vmatmul.mubr.f32.gmra.mxu0 %v1819
    %v1890 = vpop.f32.mrf.mxu0
    %v1891 = vadd.f32 0.0, %v1890
    %v1892 = vpop.f32.mrf.mxu0
    %1893 = vmatprep.mubr.f32.mxu0 0.0
    %1894 = vmatmul.mubr.f32.gmra.mxu0 %v1822
    %v1895 = vpop.f32.mrf.mxu0
    %v1896 = vadd.f32 0.0, %v1895
    %v1897 = vpop.f32.mrf.mxu0
    %1898 = vdwg.mxu0
    %s1899 = scalar_lea.vmem [#allocation10], 32
    %v1900 = vld [vmem:[%s1899] sm:$0xff]
    %v1901 = vld [vmem:[%s1899 + $0x8] sm:$0xff]
    %v1902 = vld [vmem:[%s1899 + $0x10] sm:$0xff]
    %v1903 = vld [vmem:[%s1899 + $0x18] sm:$0xff]
    %v1905 = vsel %vm1716, %v1891, 0
    %v1908 = vsel %vm1716, %v1896, 0
    %1910 = vmatprep.subr.mxu0 0.0
    %1911 = vmatpush1.msra.mxu0 0.0
    %1912 = vmatprep.subr.mxu0 0.0
    %1913 = vmatpush1.msra.mxu0 0.0
    %1914 = vmatprep.subr.mxu0 0.0
    %1915 = vmatpush1.msra.mxu0 0.0
    %1916 = vmatprep.subr.mxu0 0.0
    %1917 = vmatpush1.msra.mxu0 0.0
    %1918 = vmatprep.subr.mxu0 0.0
    %1919 = vmatpush1.msra.mxu0 0.0
    %1920 = vmatprep.subr.mxu0 0.0
    %1921 = vmatpush1.msra.mxu0 0.0
    %1922 = vmatprep.subr.mxu0 0.0
    %1923 = vmatpush1.msra.mxu0 0.0
    %1924 = vmatprep.subr.mxu0 0.0
    %1925 = vmatpush1.msra.mxu0 0.0
    %1926 = vmatprep.subr.mxu0 0.0
    %1927 = vmatpush1.msra.mxu0 0.0
    %1928 = vmatprep.subr.mxu0 0.0
    %1929 = vmatpush1.msra.mxu0 0.0
    %1930 = vmatprep.subr.mxu0 0.0
    %1931 = vmatpush1.msra.mxu0 0.0
    %1932 = vmatprep.subr.mxu0 0.0
    %1933 = vmatpush1.msra.mxu0 0.0
    %1934 = vmatprep.subr.mxu0 0.0
    %1935 = vmatpush1.msra.mxu0 %v1903
    %1936 = vmatprep.subr.mxu0 0.0
    %1937 = vmatpush1.msra.mxu0 %v1902
    %1938 = vmatprep.subr.mxu0 0.0
    %1939 = vmatpush1.msra.mxu0 %v1901
    %1940 = vmatprep.subr.mxu0 0.0
    %1941 = vmatpush1.msra.mxu0 %v1900
    %1942 = vmatprep.subr.mxu0 0.0
    %1943 = vmatpush2.msra.mxu0 0.0
    %1944 = vmatprep.subr.mxu0 0.0
    %1945 = vmatpush2.msra.mxu0 0.0
    %1946 = vmatprep.subr.mxu0 0.0
    %1947 = vmatpush2.msra.mxu0 0.0
    %1948 = vmatprep.subr.mxu0 0.0
    %1949 = vmatpush2.msra.mxu0 0.0
    %1950 = vmatprep.subr.mxu0 0.0
    %1951 = vmatpush2.msra.mxu0 0.0
    %1952 = vmatprep.subr.mxu0 0.0
    %1953 = vmatpush2.msra.mxu0 0.0
    %1954 = vmatprep.subr.mxu0 0.0
    %1955 = vmatpush2.msra.mxu0 0.0
    %1956 = vmatprep.subr.mxu0 0.0
    %1957 = vmatpush2.msra.mxu0 0.0
    %1958 = vmatprep.subr.mxu0 0.0
    %1959 = vmatpush2.msra.mxu0 0.0
    %1960 = vmatprep.subr.mxu0 0.0
    %1961 = vmatpush2.msra.mxu0 0.0
    %1962 = vmatprep.subr.mxu0 0.0
    %1963 = vmatpush2.msra.mxu0 0.0
    %1964 = vmatprep.subr.mxu0 0.0
    %1965 = vmatpush2.msra.mxu0 0.0
    %1966 = vmatprep.subr.mxu0 0.0
    %1967 = vmatpush2.msra.mxu0 0.0
    %1968 = vmatprep.subr.mxu0 0.0
    %1969 = vmatpush2.msra.mxu0 0.0
    %1970 = vmatprep.subr.mxu0 0.0
    %1971 = vmatpush2.msra.mxu0 0.0
    %1972 = vmatprep.subr.mxu0 0.0
    %1973 = vmatpush2.msra.mxu0 0.0
    %1974 = vmatprep.mubr.f32.mxu0 0.0
    %1975 = vmatmul.mubr.f32.gmra.mxu0 %v1905
    %v1976 = vpop.f32.mrf.mxu0
    %v1977 = vadd.f32 0.0, %v1976
    %v1978 = vpop.f32.mrf.mxu0
    %1979 = vmatprep.mubr.f32.mxu0 0.0
    %1980 = vmatmul.mubr.f32.gmra.mxu0 %v1908
    %v1981 = vpop.f32.mrf.mxu0
    %v1982 = vadd.f32 0.0, %v1981
    %v1983 = vpop.f32.mrf.mxu0
    %1984 = vdwg.mxu0
    %v1986 = vsel %vm1716, %v1803, 0
    %v1989 = vsel %vm1716, %v1808, 0
    %1991 = vmatprep.subr.mxu0 0.0
    %1992 = vmatpush1.msra.mxu0 0.0
    %1993 = vmatprep.subr.mxu0 0.0
    %1994 = vmatpush1.msra.mxu0 0.0
    %1995 = vmatprep.subr.mxu0 0.0
    %1996 = vmatpush1.msra.mxu0 0.0
    %1997 = vmatprep.subr.mxu0 0.0
    %1998 = vmatpush1.msra.mxu0 0.0
    %1999 = vmatprep.subr.mxu0 0.0
    %2000 = vmatpush1.msra.mxu0 0.0
    %2001 = vmatprep.subr.mxu0 0.0
    %2002 = vmatpush1.msra.mxu0 0.0
    %2003 = vmatprep.subr.mxu0 0.0
    %2004 = vmatpush1.msra.mxu0 0.0
    %2005 = vmatprep.subr.mxu0 0.0
    %2006 = vmatpush1.msra.mxu0 0.0
    %2007 = vmatprep.subr.mxu0 0.0
    %2008 = vmatpush1.msra.mxu0 0.0
    %2009 = vmatprep.subr.mxu0 0.0
    %2010 = vmatpush1.msra.mxu0 0.0
    %2011 = vmatprep.subr.mxu0 0.0
    %2012 = vmatpush1.msra.mxu0 0.0
    %2013 = vmatprep.subr.mxu0 0.0
    %2014 = vmatpush1.msra.mxu0 0.0
    %2015 = vmatprep.subr.mxu0 0.0
    %2016 = vmatpush1.msra.mxu0 %v1814
    %2017 = vmatprep.subr.mxu0 0.0
    %2018 = vmatpush1.msra.mxu0 %v1813
    %2019 = vmatprep.subr.mxu0 0.0
    %2020 = vmatpush1.msra.mxu0 %v1812
    %2021 = vmatprep.subr.mxu0 0.0
    %2022 = vmatpush1.msra.mxu0 %v1811
    %2023 = vmatprep.subr.mxu0 0.0
    %2024 = vmatpush2.msra.mxu0 0.0
    %2025 = vmatprep.subr.mxu0 0.0
    %2026 = vmatpush2.msra.mxu0 0.0
    %2027 = vmatprep.subr.mxu0 0.0
    %2028 = vmatpush2.msra.mxu0 0.0
    %2029 = vmatprep.subr.mxu0 0.0
    %2030 = vmatpush2.msra.mxu0 0.0
    %2031 = vmatprep.subr.mxu0 0.0
    %2032 = vmatpush2.msra.mxu0 0.0
    %2033 = vmatprep.subr.mxu0 0.0
    %2034 = vmatpush2.msra.mxu0 0.0
    %2035 = vmatprep.subr.mxu0 0.0
    %2036 = vmatpush2.msra.mxu0 0.0
    %2037 = vmatprep.subr.mxu0 0.0
    %2038 = vmatpush2.msra.mxu0 0.0
    %2039 = vmatprep.subr.mxu0 0.0
    %2040 = vmatpush2.msra.mxu0 0.0
    %2041 = vmatprep.subr.mxu0 0.0
    %2042 = vmatpush2.msra.mxu0 0.0
    %2043 = vmatprep.subr.mxu0 0.0
    %2044 = vmatpush2.msra.mxu0 0.0
    %2045 = vmatprep.subr.mxu0 0.0
    %2046 = vmatpush2.msra.mxu0 0.0
    %2047 = vmatprep.subr.mxu0 0.0
    %2048 = vmatpush2.msra.mxu0 0.0
    %2049 = vmatprep.subr.mxu0 0.0
    %2050 = vmatpush2.msra.mxu0 0.0
    %2051 = vmatprep.subr.mxu0 0.0
    %2052 = vmatpush2.msra.mxu0 0.0
    %2053 = vmatprep.subr.mxu0 0.0
    %2054 = vmatpush2.msra.mxu0 0.0
    %2055 = vmatprep.mubr.f32.mxu0 0.0
    %2056 = vmatmul.mubr.f32.gmra.mxu0 %v1986
    %v2057 = vpop.f32.mrf.mxu0
    %v2058 = vadd.f32 %v1977, %v2057
    %v2059 = vpop.f32.mrf.mxu0
    %2060 = vmatprep.mubr.f32.mxu0 0.0
    %2061 = vmatmul.mubr.f32.gmra.mxu0 %v1989
    %v2062 = vpop.f32.mrf.mxu0
    %v2063 = vadd.f32 %v1982, %v2062
    %v2064 = vpop.f32.mrf.mxu0
    %2065 = vdwg.mxu0
    %s2066 = scalar_lea.vmem [#allocation8], 32
    %v2067 = vld [vmem:[%s2066] sm:$0xff]
    %v2068 = vld [vmem:[%s2066 + $0x8] sm:$0x1]
    %v2070 = vsel %vm156, %v2067, 0
    %v2073 = vsel %vm156, %v2068, 0
    %2075 = vmatprep.subr.mxu0 0.0
    %2076 = vmatpush1.msra.mxu0 0.0
    %2077 = vmatprep.subr.mxu0 0.0
    %2078 = vmatpush1.msra.mxu0 0.0
    %2079 = vmatprep.subr.mxu0 0.0
    %2080 = vmatpush1.msra.mxu0 0.0
    %2081 = vmatprep.subr.mxu0 0.0
    %2082 = vmatpush1.msra.mxu0 0.0
    %2083 = vmatprep.subr.mxu0 0.0
    %2084 = vmatpush1.msra.mxu0 0.0
    %2085 = vmatprep.subr.mxu0 0.0
    %2086 = vmatpush1.msra.mxu0 0.0
    %2087 = vmatprep.subr.mxu0 0.0
    %2088 = vmatpush1.msra.mxu0 0.0
    %2089 = vmatprep.subr.mxu0 0.0
    %2090 = vmatpush1.msra.mxu0 0.0
    %2091 = vmatprep.subr.mxu0 0.0
    %2092 = vmatpush1.msra.mxu0 0.0
    %2093 = vmatprep.subr.mxu0 0.0
    %2094 = vmatpush1.msra.mxu0 0.0
    %2095 = vmatprep.subr.mxu0 0.0
    %2096 = vmatpush1.msra.mxu0 0.0
    %2097 = vmatprep.subr.mxu0 0.0
    %2098 = vmatpush1.msra.mxu0 0.0
    %2099 = vmatprep.subr.mxu0 0.0
    %2100 = vmatpush1.msra.mxu0 0.0
    %2101 = vmatprep.subr.mxu0 0.0
    %2102 = vmatpush1.msra.mxu0 0.0
    %2103 = vmatprep.subr.mxu0 0.0
    %2104 = vmatpush1.msra.mxu0 %v1715
    %2105 = vmatprep.subr.mxu0 0.0
    %2106 = vmatpush1.msra.mxu0 %v1714
    %2107 = vmatprep.subr.mxu0 0.0
    %2108 = vmatpush2.msra.mxu0 0.0
    %2109 = vmatprep.subr.mxu0 0.0
    %2110 = vmatpush2.msra.mxu0 0.0
    %2111 = vmatprep.subr.mxu0 0.0
    %2112 = vmatpush2.msra.mxu0 0.0
    %2113 = vmatprep.subr.mxu0 0.0
    %2114 = vmatpush2.msra.mxu0 0.0
    %2115 = vmatprep.subr.mxu0 0.0
    %2116 = vmatpush2.msra.mxu0 0.0
    %2117 = vmatprep.subr.mxu0 0.0
    %2118 = vmatpush2.msra.mxu0 0.0
    %2119 = vmatprep.subr.mxu0 0.0
    %2120 = vmatpush2.msra.mxu0 0.0
    %2121 = vmatprep.subr.mxu0 0.0
    %2122 = vmatpush2.msra.mxu0 0.0
    %2123 = vmatprep.subr.mxu0 0.0
    %2124 = vmatpush2.msra.mxu0 0.0
    %2125 = vmatprep.subr.mxu0 0.0
    %2126 = vmatpush2.msra.mxu0 0.0
    %2127 = vmatprep.subr.mxu0 0.0
    %2128 = vmatpush2.msra.mxu0 0.0
    %2129 = vmatprep.subr.mxu0 0.0
    %2130 = vmatpush2.msra.mxu0 0.0
    %2131 = vmatprep.subr.mxu0 0.0
    %2132 = vmatpush2.msra.mxu0 0.0
    %2133 = vmatprep.subr.mxu0 0.0
    %2134 = vmatpush2.msra.mxu0 0.0
    %2135 = vmatprep.subr.mxu0 0.0
    %2136 = vmatpush2.msra.mxu0 0.0
    %2137 = vmatprep.subr.mxu0 0.0
    %2138 = vmatpush2.msra.mxu0 0.0
    %2139 = vmatprep.mubr.f32.mxu0 0.0
    %2140 = vmatmul.mubr.f32.gmra.mxu0 %v2070
    %v2141 = vpop.f32.mrf.mxu0
    %v2142 = vadd.f32 0.0, %v2141
    %v2143 = vpop.f32.mrf.mxu0
    %2144 = vmatprep.mubr.f32.mxu0 0.0
    %2145 = vmatmul.mubr.f32.gmra.mxu0 %v2073
    %v2146 = vpop.f32.mrf.mxu0
    %v2147 = vadd.f32 0.0, %v2146
    %v2148 = vpop.f32.mrf.mxu0
    %2149 = vdwg.mxu0
    %s2150 = scalar_lea.vmem [#allocation10], 64
    %v2151 = vld [vmem:[%s2150] sm:$0xff]
    %v2152 = vld [vmem:[%s2150 + $0x8] sm:$0xff]
    %v2153 = vld [vmem:[%s2150 + $0x10] sm:$0xff]
    %v2154 = vld [vmem:[%s2150 + $0x18] sm:$0xff]
    %v2156 = vsel %vm1716, %v2142, 0
    %v2159 = vsel %vm1716, %v2147, 0
    %2161 = vmatprep.subr.mxu0 0.0
    %2162 = vmatpush1.msra.mxu0 0.0
    %2163 = vmatprep.subr.mxu0 0.0
    %2164 = vmatpush1.msra.mxu0 0.0
    %2165 = vmatprep.subr.mxu0 0.0
    %2166 = vmatpush1.msra.mxu0 0.0
    %2167 = vmatprep.subr.mxu0 0.0
    %2168 = vmatpush1.msra.mxu0 0.0
    %2169 = vmatprep.subr.mxu0 0.0
    %2170 = vmatpush1.msra.mxu0 0.0
    %2171 = vmatprep.subr.mxu0 0.0
    %2172 = vmatpush1.msra.mxu0 0.0
    %2173 = vmatprep.subr.mxu0 0.0
    %2174 = vmatpush1.msra.mxu0 0.0
    %2175 = vmatprep.subr.mxu0 0.0
    %2176 = vmatpush1.msra.mxu0 0.0
    %2177 = vmatprep.subr.mxu0 0.0
    %2178 = vmatpush1.msra.mxu0 0.0
    %2179 = vmatprep.subr.mxu0 0.0
    %2180 = vmatpush1.msra.mxu0 0.0
    %2181 = vmatprep.subr.mxu0 0.0
    %2182 = vmatpush1.msra.mxu0 0.0
    %2183 = vmatprep.subr.mxu0 0.0
    %2184 = vmatpush1.msra.mxu0 0.0
    %2185 = vmatprep.subr.mxu0 0.0
    %2186 = vmatpush1.msra.mxu0 %v2154
    %2187 = vmatprep.subr.mxu0 0.0
    %2188 = vmatpush1.msra.mxu0 %v2153
    %2189 = vmatprep.subr.mxu0 0.0
    %2190 = vmatpush1.msra.mxu0 %v2152
    %2191 = vmatprep.subr.mxu0 0.0
    %2192 = vmatpush1.msra.mxu0 %v2151
    %2193 = vmatprep.subr.mxu0 0.0
    %2194 = vmatpush2.msra.mxu0 0.0
    %2195 = vmatprep.subr.mxu0 0.0
    %2196 = vmatpush2.msra.mxu0 0.0
    %2197 = vmatprep.subr.mxu0 0.0
    %2198 = vmatpush2.msra.mxu0 0.0
    %2199 = vmatprep.subr.mxu0 0.0
    %2200 = vmatpush2.msra.mxu0 0.0
    %2201 = vmatprep.subr.mxu0 0.0
    %2202 = vmatpush2.msra.mxu0 0.0
    %2203 = vmatprep.subr.mxu0 0.0
    %2204 = vmatpush2.msra.mxu0 0.0
    %2205 = vmatprep.subr.mxu0 0.0
    %2206 = vmatpush2.msra.mxu0 0.0
    %2207 = vmatprep.subr.mxu0 0.0
    %2208 = vmatpush2.msra.mxu0 0.0
    %2209 = vmatprep.subr.mxu0 0.0
    %2210 = vmatpush2.msra.mxu0 0.0
    %2211 = vmatprep.subr.mxu0 0.0
    %2212 = vmatpush2.msra.mxu0 0.0
    %2213 = vmatprep.subr.mxu0 0.0
    %2214 = vmatpush2.msra.mxu0 0.0
    %2215 = vmatprep.subr.mxu0 0.0
    %2216 = vmatpush2.msra.mxu0 0.0
    %2217 = vmatprep.subr.mxu0 0.0
    %2218 = vmatpush2.msra.mxu0 0.0
    %2219 = vmatprep.subr.mxu0 0.0
    %2220 = vmatpush2.msra.mxu0 0.0
    %2221 = vmatprep.subr.mxu0 0.0
    %2222 = vmatpush2.msra.mxu0 0.0
    %2223 = vmatprep.subr.mxu0 0.0
    %2224 = vmatpush2.msra.mxu0 0.0
    %2225 = vmatprep.mubr.f32.mxu0 0.0
    %2226 = vmatmul.mubr.f32.gmra.mxu0 %v2156
    %v2227 = vpop.f32.mrf.mxu0
    %v2228 = vadd.f32 0.0, %v2227
    %v2229 = vpop.f32.mrf.mxu0
    %2230 = vmatprep.mubr.f32.mxu0 0.0
    %2231 = vmatmul.mubr.f32.gmra.mxu0 %v2159
    %v2232 = vpop.f32.mrf.mxu0
    %v2233 = vadd.f32 0.0, %v2232
    %v2234 = vpop.f32.mrf.mxu0
    %2235 = vdwg.mxu0
    %v2236 = vadd.f32 %v2058, %v2228
    %v2237 = vadd.f32 %v2063, %v2233
    %s2238 = scalar_lea.vmem [#allocation8], 48
    %v2239 = vld [vmem:[%s2238] sm:$0xff]
    %v2240 = vld [vmem:[%s2238 + $0x8] sm:$0x1]
    %v2242 = vsel %vm156, %v2239, 0
    %v2245 = vsel %vm156, %v2240, 0
    %2247 = vmatprep.subr.mxu0 0.0
    %2248 = vmatpush1.msra.mxu0 0.0
    %2249 = vmatprep.subr.mxu0 0.0
    %2250 = vmatpush1.msra.mxu0 0.0
    %2251 = vmatprep.subr.mxu0 0.0
    %2252 = vmatpush1.msra.mxu0 0.0
    %2253 = vmatprep.subr.mxu0 0.0
    %2254 = vmatpush1.msra.mxu0 0.0
    %2255 = vmatprep.subr.mxu0 0.0
    %2256 = vmatpush1.msra.mxu0 0.0
    %2257 = vmatprep.subr.mxu0 0.0
    %2258 = vmatpush1.msra.mxu0 0.0
    %2259 = vmatprep.subr.mxu0 0.0
    %2260 = vmatpush1.msra.mxu0 0.0
    %2261 = vmatprep.subr.mxu0 0.0
    %2262 = vmatpush1.msra.mxu0 0.0
    %2263 = vmatprep.subr.mxu0 0.0
    %2264 = vmatpush1.msra.mxu0 0.0
    %2265 = vmatprep.subr.mxu0 0.0
    %2266 = vmatpush1.msra.mxu0 0.0
    %2267 = vmatprep.subr.mxu0 0.0
    %2268 = vmatpush1.msra.mxu0 0.0
    %2269 = vmatprep.subr.mxu0 0.0
    %2270 = vmatpush1.msra.mxu0 0.0
    %2271 = vmatprep.subr.mxu0 0.0
    %2272 = vmatpush1.msra.mxu0 0.0
    %2273 = vmatprep.subr.mxu0 0.0
    %2274 = vmatpush1.msra.mxu0 0.0
    %2275 = vmatprep.subr.mxu0 0.0
    %2276 = vmatpush1.msra.mxu0 %v1715
    %2277 = vmatprep.subr.mxu0 0.0
    %2278 = vmatpush1.msra.mxu0 %v1714
    %2279 = vmatprep.subr.mxu0 0.0
    %2280 = vmatpush2.msra.mxu0 0.0
    %2281 = vmatprep.subr.mxu0 0.0
    %2282 = vmatpush2.msra.mxu0 0.0
    %2283 = vmatprep.subr.mxu0 0.0
    %2284 = vmatpush2.msra.mxu0 0.0
    %2285 = vmatprep.subr.mxu0 0.0
    %2286 = vmatpush2.msra.mxu0 0.0
    %2287 = vmatprep.subr.mxu0 0.0
    %2288 = vmatpush2.msra.mxu0 0.0
    %2289 = vmatprep.subr.mxu0 0.0
    %2290 = vmatpush2.msra.mxu0 0.0
    %2291 = vmatprep.subr.mxu0 0.0
    %2292 = vmatpush2.msra.mxu0 0.0
    %2293 = vmatprep.subr.mxu0 0.0
    %2294 = vmatpush2.msra.mxu0 0.0
    %2295 = vmatprep.subr.mxu0 0.0
    %2296 = vmatpush2.msra.mxu0 0.0
    %2297 = vmatprep.subr.mxu0 0.0
    %2298 = vmatpush2.msra.mxu0 0.0
    %2299 = vmatprep.subr.mxu0 0.0
    %2300 = vmatpush2.msra.mxu0 0.0
    %2301 = vmatprep.subr.mxu0 0.0
    %2302 = vmatpush2.msra.mxu0 0.0
    %2303 = vmatprep.subr.mxu0 0.0
    %2304 = vmatpush2.msra.mxu0 0.0
    %2305 = vmatprep.subr.mxu0 0.0
    %2306 = vmatpush2.msra.mxu0 0.0
    %2307 = vmatprep.subr.mxu0 0.0
    %2308 = vmatpush2.msra.mxu0 0.0
    %2309 = vmatprep.subr.mxu0 0.0
    %2310 = vmatpush2.msra.mxu0 0.0
    %2311 = vmatprep.mubr.f32.mxu0 0.0
    %2312 = vmatmul.mubr.f32.gmra.mxu0 %v2242
    %v2313 = vpop.f32.mrf.mxu0
    %v2314 = vadd.f32 0.0, %v2313
    %v2315 = vpop.f32.mrf.mxu0
    %2316 = vmatprep.mubr.f32.mxu0 0.0
    %2317 = vmatmul.mubr.f32.gmra.mxu0 %v2245
    %v2318 = vpop.f32.mrf.mxu0
    %v2319 = vadd.f32 0.0, %v2318
    %v2320 = vpop.f32.mrf.mxu0
    %2321 = vdwg.mxu0
    %s2322 = scalar_lea.vmem [#allocation10], 96
    %v2323 = vld [vmem:[%s2322] sm:$0xff]
    %v2324 = vld [vmem:[%s2322 + $0x8] sm:$0xff]
    %v2325 = vld [vmem:[%s2322 + $0x10] sm:$0xff]
    %v2326 = vld [vmem:[%s2322 + $0x18] sm:$0xff]
    %v2328 = vsel %vm1716, %v2314, 0
    %v2331 = vsel %vm1716, %v2319, 0
    %2333 = vmatprep.subr.mxu0 0.0
    %2334 = vmatpush1.msra.mxu0 0.0
    %2335 = vmatprep.subr.mxu0 0.0
    %2336 = vmatpush1.msra.mxu0 0.0
    %2337 = vmatprep.subr.mxu0 0.0
    %2338 = vmatpush1.msra.mxu0 0.0
    %2339 = vmatprep.subr.mxu0 0.0
    %2340 = vmatpush1.msra.mxu0 0.0
    %2341 = vmatprep.subr.mxu0 0.0
    %2342 = vmatpush1.msra.mxu0 0.0
    %2343 = vmatprep.subr.mxu0 0.0
    %2344 = vmatpush1.msra.mxu0 0.0
    %2345 = vmatprep.subr.mxu0 0.0
    %2346 = vmatpush1.msra.mxu0 0.0
    %2347 = vmatprep.subr.mxu0 0.0
    %2348 = vmatpush1.msra.mxu0 0.0
    %2349 = vmatprep.subr.mxu0 0.0
    %2350 = vmatpush1.msra.mxu0 0.0
    %2351 = vmatprep.subr.mxu0 0.0
    %2352 = vmatpush1.msra.mxu0 0.0
    %2353 = vmatprep.subr.mxu0 0.0
    %2354 = vmatpush1.msra.mxu0 0.0
    %2355 = vmatprep.subr.mxu0 0.0
    %2356 = vmatpush1.msra.mxu0 0.0
    %2357 = vmatprep.subr.mxu0 0.0
    %2358 = vmatpush1.msra.mxu0 %v2326
    %2359 = vmatprep.subr.mxu0 0.0
    %2360 = vmatpush1.msra.mxu0 %v2325
    %2361 = vmatprep.subr.mxu0 0.0
    %2362 = vmatpush1.msra.mxu0 %v2324
    %2363 = vmatprep.subr.mxu0 0.0
    %2364 = vmatpush1.msra.mxu0 %v2323
    %2365 = vmatprep.subr.mxu0 0.0
    %2366 = vmatpush2.msra.mxu0 0.0
    %2367 = vmatprep.subr.mxu0 0.0
    %2368 = vmatpush2.msra.mxu0 0.0
    %2369 = vmatprep.subr.mxu0 0.0
    %2370 = vmatpush2.msra.mxu0 0.0
    %2371 = vmatprep.subr.mxu0 0.0
    %2372 = vmatpush2.msra.mxu0 0.0
    %2373 = vmatprep.subr.mxu0 0.0
    %2374 = vmatpush2.msra.mxu0 0.0
    %2375 = vmatprep.subr.mxu0 0.0
    %2376 = vmatpush2.msra.mxu0 0.0
    %2377 = vmatprep.subr.mxu0 0.0
    %2378 = vmatpush2.msra.mxu0 0.0
    %2379 = vmatprep.subr.mxu0 0.0
    %2380 = vmatpush2.msra.mxu0 0.0
    %2381 = vmatprep.subr.mxu0 0.0
    %2382 = vmatpush2.msra.mxu0 0.0
    %2383 = vmatprep.subr.mxu0 0.0
    %2384 = vmatpush2.msra.mxu0 0.0
    %2385 = vmatprep.subr.mxu0 0.0
    %2386 = vmatpush2.msra.mxu0 0.0
    %2387 = vmatprep.subr.mxu0 0.0
    %2388 = vmatpush2.msra.mxu0 0.0
    %2389 = vmatprep.subr.mxu0 0.0
    %2390 = vmatpush2.msra.mxu0 0.0
    %2391 = vmatprep.subr.mxu0 0.0
    %2392 = vmatpush2.msra.mxu0 0.0
    %2393 = vmatprep.subr.mxu0 0.0
    %2394 = vmatpush2.msra.mxu0 0.0
    %2395 = vmatprep.subr.mxu0 0.0
    %2396 = vmatpush2.msra.mxu0 0.0
    %2397 = vmatprep.mubr.f32.mxu0 0.0
    %2398 = vmatmul.mubr.f32.gmra.mxu0 %v2328
    %v2399 = vpop.f32.mrf.mxu0
    %v2400 = vadd.f32 0.0, %v2399
    %v2401 = vpop.f32.mrf.mxu0
    %2402 = vmatprep.mubr.f32.mxu0 0.0
    %2403 = vmatmul.mubr.f32.gmra.mxu0 %v2331
    %v2404 = vpop.f32.mrf.mxu0
    %v2405 = vadd.f32 0.0, %v2404
    %v2406 = vpop.f32.mrf.mxu0
    %2407 = vdwg.mxu0
    %v2408 = vadd.f32 %v2236, %v2400
    %v2409 = vadd.f32 %v2237, %v2405
    %v2410 = vld [vmem:[%s6] sm:$0x1]
    %v2412 = vlaneseq
    %v2413 = vshrl.u32 %v2412, 7
    %v2414 = vsub.s32 0, %v2413
    %v2415 = vrot.slane %v2410, %v2414
    %v2417 = vadd.f32 %v2408, %v2415
    %v2418 = vadd.f32 %v2409, %v2415
    %v2419 = vmax.f32 %v2417, 0.0
    %v2420 = vmax.f32 %v2418, 0.0
    %v2421 = vsel %vm1716, %v2419, 0.0
    %vm2422 = vcmask 253952
    %v2423 = vsel %vm2422, %v2420, 0.0
    %v2424 = vadd.f32 %v2421, %v2423
    %v2425 = vrot.slane %v2424, 4
    %v2426 = vadd.f32 %v2424, %v2425
    %v2427 = vrot.slane %v2426, 2
    %v2428 = vadd.f32 %v2426, %v2427
    %v2429 = vrot.slane %v2428, 1
    %v2430 = vadd.f32 %v2428, %v2429
    %v2431 = vrcp.pop 9.0
    %v2432 = vmul.f32 %v2430, %v2431
    %v2433 = vld [vmem:[#allocation11] sm:$0xff]
    %v2434 = vld [vmem:[#allocation11 + $0x8] sm:$0xff]
    %v2435 = vld [vmem:[#allocation13] sm:$0xff]
    %v2436 = vld [vmem:[#allocation13 + $0x8] sm:$0xff]
    %v2437 = vld [vmem:[#allocation13 + $0x10] sm:$0xff]
    %v2438 = vld [vmem:[#allocation13 + $0x18] sm:$0xff]
    %v2440 = vsel %vm1716, %v1727, 0
    %2442 = vmatprep.subr.mxu0 0.0
    %2443 = vmatpush1.msra.mxu0 0.0
    %2444 = vmatprep.subr.mxu0 0.0
    %2445 = vmatpush1.msra.mxu0 0.0
    %2446 = vmatprep.subr.mxu0 0.0
    %2447 = vmatpush1.msra.mxu0 0.0
    %2448 = vmatprep.subr.mxu0 0.0
    %2449 = vmatpush1.msra.mxu0 0.0
    %2450 = vmatprep.subr.mxu0 0.0
    %2451 = vmatpush1.msra.mxu0 0.0
    %2452 = vmatprep.subr.mxu0 0.0
    %2453 = vmatpush1.msra.mxu0 0.0
    %2454 = vmatprep.subr.mxu0 0.0
    %2455 = vmatpush1.msra.mxu0 0.0
    %2456 = vmatprep.subr.mxu0 0.0
    %2457 = vmatpush1.msra.mxu0 0.0
    %2458 = vmatprep.subr.mxu0 0.0
    %2459 = vmatpush1.msra.mxu0 0.0
    %2460 = vmatprep.subr.mxu0 0.0
    %2461 = vmatpush1.msra.mxu0 0.0
    %2462 = vmatprep.subr.mxu0 0.0
    %2463 = vmatpush1.msra.mxu0 0.0
    %2464 = vmatprep.subr.mxu0 0.0
    %2465 = vmatpush1.msra.mxu0 0.0
    %2466 = vmatprep.subr.mxu0 0.0
    %2467 = vmatpush1.msra.mxu0 %v2438
    %2468 = vmatprep.subr.mxu0 0.0
    %2469 = vmatpush1.msra.mxu0 %v2437
    %2470 = vmatprep.subr.mxu0 0.0
    %2471 = vmatpush1.msra.mxu0 %v2436
    %2472 = vmatprep.subr.mxu0 0.0
    %2473 = vmatpush1.msra.mxu0 %v2435
    %2474 = vmatprep.subr.mxu0 0.0
    %2475 = vmatpush2.msra.mxu0 0.0
    %2476 = vmatprep.subr.mxu0 0.0
    %2477 = vmatpush2.msra.mxu0 0.0
    %2478 = vmatprep.subr.mxu0 0.0
    %2479 = vmatpush2.msra.mxu0 0.0
    %2480 = vmatprep.subr.mxu0 0.0
    %2481 = vmatpush2.msra.mxu0 0.0
    %2482 = vmatprep.subr.mxu0 0.0
    %2483 = vmatpush2.msra.mxu0 0.0
    %2484 = vmatprep.subr.mxu0 0.0
    %2485 = vmatpush2.msra.mxu0 0.0
    %2486 = vmatprep.subr.mxu0 0.0
    %2487 = vmatpush2.msra.mxu0 0.0
    %2488 = vmatprep.subr.mxu0 0.0
    %2489 = vmatpush2.msra.mxu0 0.0
    %2490 = vmatprep.subr.mxu0 0.0
    %2491 = vmatpush2.msra.mxu0 0.0
    %2492 = vmatprep.subr.mxu0 0.0
    %2493 = vmatpush2.msra.mxu0 0.0
    %2494 = vmatprep.subr.mxu0 0.0
    %2495 = vmatpush2.msra.mxu0 0.0
    %2496 = vmatprep.subr.mxu0 0.0
    %2497 = vmatpush2.msra.mxu0 0.0
    %2498 = vmatprep.subr.mxu0 0.0
    %2499 = vmatpush2.msra.mxu0 0.0
    %2500 = vmatprep.subr.mxu0 0.0
    %2501 = vmatpush2.msra.mxu0 0.0
    %2502 = vmatprep.subr.mxu0 0.0
    %2503 = vmatpush2.msra.mxu0 0.0
    %2504 = vmatprep.subr.mxu0 0.0
    %2505 = vmatpush2.msra.mxu0 0.0
    %2506 = vmatprep.mubr.f32.mxu0 0.0
    %2507 = vmatmul.mubr.f32.gmra.mxu0 %v2440
    %v2508 = vpop.f32.mrf.mxu0
    %v2509 = vadd.f32 0.0, %v2508
    %v2510 = vpop.f32.mrf.mxu0
    %2511 = vdwg.mxu0
    %v2513 = vsel %vm156, %v179, 0
    %2515 = vmatprep.subr.mxu0 0.0
    %2516 = vmatpush1.msra.mxu0 0.0
    %2517 = vmatprep.subr.mxu0 0.0
    %2518 = vmatpush1.msra.mxu0 0.0
    %2519 = vmatprep.subr.mxu0 0.0
    %2520 = vmatpush1.msra.mxu0 0.0
    %2521 = vmatprep.subr.mxu0 0.0
    %2522 = vmatpush1.msra.mxu0 0.0
    %2523 = vmatprep.subr.mxu0 0.0
    %2524 = vmatpush1.msra.mxu0 0.0
    %2525 = vmatprep.subr.mxu0 0.0
    %2526 = vmatpush1.msra.mxu0 0.0
    %2527 = vmatprep.subr.mxu0 0.0
    %2528 = vmatpush1.msra.mxu0 0.0
    %2529 = vmatprep.subr.mxu0 0.0
    %2530 = vmatpush1.msra.mxu0 0.0
    %2531 = vmatprep.subr.mxu0 0.0
    %2532 = vmatpush1.msra.mxu0 0.0
    %2533 = vmatprep.subr.mxu0 0.0
    %2534 = vmatpush1.msra.mxu0 0.0
    %2535 = vmatprep.subr.mxu0 0.0
    %2536 = vmatpush1.msra.mxu0 0.0
    %2537 = vmatprep.subr.mxu0 0.0
    %2538 = vmatpush1.msra.mxu0 0.0
    %2539 = vmatprep.subr.mxu0 0.0
    %2540 = vmatpush1.msra.mxu0 0.0
    %2541 = vmatprep.subr.mxu0 0.0
    %2542 = vmatpush1.msra.mxu0 0.0
    %2543 = vmatprep.subr.mxu0 0.0
    %2544 = vmatpush1.msra.mxu0 %v2434
    %2545 = vmatprep.subr.mxu0 0.0
    %2546 = vmatpush1.msra.mxu0 %v2433
    %2547 = vmatprep.subr.mxu0 0.0
    %2548 = vmatpush2.msra.mxu0 0.0
    %2549 = vmatprep.subr.mxu0 0.0
    %2550 = vmatpush2.msra.mxu0 0.0
    %2551 = vmatprep.subr.mxu0 0.0
    %2552 = vmatpush2.msra.mxu0 0.0
    %2553 = vmatprep.subr.mxu0 0.0
    %2554 = vmatpush2.msra.mxu0 0.0
    %2555 = vmatprep.subr.mxu0 0.0
    %2556 = vmatpush2.msra.mxu0 0.0
    %2557 = vmatprep.subr.mxu0 0.0
    %2558 = vmatpush2.msra.mxu0 0.0
    %2559 = vmatprep.subr.mxu0 0.0
    %2560 = vmatpush2.msra.mxu0 0.0
    %2561 = vmatprep.subr.mxu0 0.0
    %2562 = vmatpush2.msra.mxu0 0.0
    %2563 = vmatprep.subr.mxu0 0.0
    %2564 = vmatpush2.msra.mxu0 0.0
    %2565 = vmatprep.subr.mxu0 0.0
    %2566 = vmatpush2.msra.mxu0 0.0
    %2567 = vmatprep.subr.mxu0 0.0
    %2568 = vmatpush2.msra.mxu0 0.0
    %2569 = vmatprep.subr.mxu0 0.0
    %2570 = vmatpush2.msra.mxu0 0.0
    %2571 = vmatprep.subr.mxu0 0.0
    %2572 = vmatpush2.msra.mxu0 0.0
    %2573 = vmatprep.subr.mxu0 0.0
    %2574 = vmatpush2.msra.mxu0 0.0
    %2575 = vmatprep.subr.mxu0 0.0
    %2576 = vmatpush2.msra.mxu0 0.0
    %2577 = vmatprep.subr.mxu0 0.0
    %2578 = vmatpush2.msra.mxu0 0.0
    %2579 = vmatprep.mubr.f32.mxu0 0.0
    %2580 = vmatmul.mubr.f32.gmra.mxu0 %v2513
    %v2581 = vpop.f32.mrf.mxu0
    %v2582 = vadd.f32 %v2509, %v2581
    %v2583 = vpop.f32.mrf.mxu0
    %2584 = vdwg.mxu0
    %v2585 = vld [vmem:[#allocation14] sm:$0xff]
    %v2586 = vld [vmem:[#allocation14 + $0x8] sm:$0xff]
    %v2587 = vld [vmem:[#allocation14 + $0x10] sm:$0xff]
    %v2588 = vld [vmem:[#allocation14 + $0x18] sm:$0xff]
    %v2590 = vsel %vm1716, %v2432, 0
    %2592 = vmatprep.subr.mxu0 0.0
    %2593 = vmatpush1.msra.mxu0 0.0
    %2594 = vmatprep.subr.mxu0 0.0
    %2595 = vmatpush1.msra.mxu0 0.0
    %2596 = vmatprep.subr.mxu0 0.0
    %2597 = vmatpush1.msra.mxu0 0.0
    %2598 = vmatprep.subr.mxu0 0.0
    %2599 = vmatpush1.msra.mxu0 0.0
    %2600 = vmatprep.subr.mxu0 0.0
    %2601 = vmatpush1.msra.mxu0 0.0
    %2602 = vmatprep.subr.mxu0 0.0
    %2603 = vmatpush1.msra.mxu0 0.0
    %2604 = vmatprep.subr.mxu0 0.0
    %2605 = vmatpush1.msra.mxu0 0.0
    %2606 = vmatprep.subr.mxu0 0.0
    %2607 = vmatpush1.msra.mxu0 0.0
    %2608 = vmatprep.subr.mxu0 0.0
    %2609 = vmatpush1.msra.mxu0 0.0
    %2610 = vmatprep.subr.mxu0 0.0
    %2611 = vmatpush1.msra.mxu0 0.0
    %2612 = vmatprep.subr.mxu0 0.0
    %2613 = vmatpush1.msra.mxu0 0.0
    %2614 = vmatprep.subr.mxu0 0.0
    %2615 = vmatpush1.msra.mxu0 0.0
    %2616 = vmatprep.subr.mxu0 0.0
    %2617 = vmatpush1.msra.mxu0 %v2588
    %2618 = vmatprep.subr.mxu0 0.0
    %2619 = vmatpush1.msra.mxu0 %v2587
    %2620 = vmatprep.subr.mxu0 0.0
    %2621 = vmatpush1.msra.mxu0 %v2586
    %2622 = vmatprep.subr.mxu0 0.0
    %2623 = vmatpush1.msra.mxu0 %v2585
    %2624 = vmatprep.subr.mxu0 0.0
    %2625 = vmatpush2.msra.mxu0 0.0
    %2626 = vmatprep.subr.mxu0 0.0
    %2627 = vmatpush2.msra.mxu0 0.0
    %2628 = vmatprep.subr.mxu0 0.0
    %2629 = vmatpush2.msra.mxu0 0.0
    %2630 = vmatprep.subr.mxu0 0.0
    %2631 = vmatpush2.msra.mxu0 0.0
    %2632 = vmatprep.subr.mxu0 0.0
    %2633 = vmatpush2.msra.mxu0 0.0
    %2634 = vmatprep.subr.mxu0 0.0
    %2635 = vmatpush2.msra.mxu0 0.0
    %2636 = vmatprep.subr.mxu0 0.0
    %2637 = vmatpush2.msra.mxu0 0.0
    %2638 = vmatprep.subr.mxu0 0.0
    %2639 = vmatpush2.msra.mxu0 0.0
    %2640 = vmatprep.subr.mxu0 0.0
    %2641 = vmatpush2.msra.mxu0 0.0
    %2642 = vmatprep.subr.mxu0 0.0
    %2643 = vmatpush2.msra.mxu0 0.0
    %2644 = vmatprep.subr.mxu0 0.0
    %2645 = vmatpush2.msra.mxu0 0.0
    %2646 = vmatprep.subr.mxu0 0.0
    %2647 = vmatpush2.msra.mxu0 0.0
    %2648 = vmatprep.subr.mxu0 0.0
    %2649 = vmatpush2.msra.mxu0 0.0
    %2650 = vmatprep.subr.mxu0 0.0
    %2651 = vmatpush2.msra.mxu0 0.0
    %2652 = vmatprep.subr.mxu0 0.0
    %2653 = vmatpush2.msra.mxu0 0.0
    %2654 = vmatprep.subr.mxu0 0.0
    %2655 = vmatpush2.msra.mxu0 0.0
    %2656 = vmatprep.mubr.f32.mxu0 0.0
    %2657 = vmatmul.mubr.f32.gmra.mxu0 %v2590
    %v2658 = vpop.f32.mrf.mxu0
    %v2659 = vadd.f32 0.0, %v2658
    %v2660 = vpop.f32.mrf.mxu0
    %2661 = vdwg.mxu0
    %v2662 = vadd.f32 %v2582, %v2659
    %v2663 = vld [vmem:[%s10] sm:$0x1]
    %v2664 = vadd.f32 %v2662, %v2663
    %2665 = vst [vmem:[#allocation16] sm:$0x1] %v2664
    %s2666 = scalar_lea.vmem [#allocation2], 64
    %v2667 = vld [vmem:[%s2666] sm:$0xff]
    %v2668 = vld [vmem:[%s2666 + $0x8] sm:$0xff]
    %v2669 = vld [vmem:[%s2666 + $0x10] sm:$0xff]
    %v2670 = vld [vmem:[%s2666 + $0x18] sm:$0xff]
    %v2671 = vld [vmem:[%s2666 + $0x20] sm:$0xff]
    %v2672 = vld [vmem:[%s2666 + $0x28] sm:$0xff]
    %v2673 = vld [vmem:[%s2666 + $0x30] sm:$0xff]
    %v2674 = vld [vmem:[%s2666 + $0x38] sm:$0xff]
    %v2675 = vsel %vm156, %v2667, 0.0
    %v2676 = vsel %vm156, %v2668, 0.0
    %v2677 = vadd.f32 %v2675, %v2676
    %v2678 = vsel %vm156, %v2669, 0.0
    %v2679 = vadd.f32 %v2677, %v2678
    %v2680 = vsel %vm156, %v2670, 0.0
    %v2681 = vadd.f32 %v2679, %v2680
    %v2682 = vsel %vm156, %v2671, 0.0
    %v2683 = vadd.f32 %v2681, %v2682
    %v2684 = vsel %vm156, %v2672, 0.0
    %v2685 = vadd.f32 %v2683, %v2684
    %v2686 = vsel %vm156, %v2673, 0.0
    %v2687 = vadd.f32 %v2685, %v2686
    %v2688 = vsel %vm156, %v2674, 0.0
    %v2689 = vadd.f32 %v2687, %v2688
    %v2690 = vrot.slane %v2689, 4
    %v2691 = vadd.f32 %v2689, %v2690
    %v2692 = vrot.slane %v2691, 2
    %v2693 = vadd.f32 %v2691, %v2692
    %v2694 = vrot.slane %v2693, 1
    %v2695 = vadd.f32 %v2693, %v2694
    %v2696 = vmul.f32 %v2695, %v178
    %v2697 = vld [vmem:[#allocation5] sm:$0xff]
    %v2698 = vld [vmem:[#allocation5 + $0x8] sm:$0xff]
    %v2700 = vsel %vm182, %v2697, 0
    %v2703 = vsel %vm182, %v2698, 0
    %2705 = vmatprep.subr.mxu0 0.0
    %2706 = vmatpush1.msra.mxu0 0.0
    %2707 = vmatprep.subr.mxu0 0.0
    %2708 = vmatpush1.msra.mxu0 0.0
    %2709 = vmatprep.subr.mxu0 0.0
    %2710 = vmatpush1.msra.mxu0 0.0
    %2711 = vmatprep.subr.mxu0 0.0
    %2712 = vmatpush1.msra.mxu0 0.0
    %2713 = vmatprep.subr.mxu0 0.0
    %2714 = vmatpush1.msra.mxu0 0.0
    %2715 = vmatprep.subr.mxu0 0.0
    %2716 = vmatpush1.msra.mxu0 0.0
    %2717 = vmatprep.subr.mxu0 0.0
    %2718 = vmatpush1.msra.mxu0 0.0
    %2719 = vmatprep.subr.mxu0 0.0
    %2720 = vmatpush1.msra.mxu0 0.0
    %2721 = vmatprep.subr.mxu0 0.0
    %2722 = vmatpush1.msra.mxu0 %v2674
    %2723 = vmatprep.subr.mxu0 0.0
    %2724 = vmatpush1.msra.mxu0 %v2673
    %2725 = vmatprep.subr.mxu0 0.0
    %2726 = vmatpush1.msra.mxu0 %v2672
    %2727 = vmatprep.subr.mxu0 0.0
    %2728 = vmatpush1.msra.mxu0 %v2671
    %2729 = vmatprep.subr.mxu0 0.0
    %2730 = vmatpush1.msra.mxu0 %v2670
    %2731 = vmatprep.subr.mxu0 0.0
    %2732 = vmatpush1.msra.mxu0 %v2669
    %2733 = vmatprep.subr.mxu0 0.0
    %2734 = vmatpush1.msra.mxu0 %v2668
    %2735 = vmatprep.subr.mxu0 0.0
    %2736 = vmatpush1.msra.mxu0 %v2667
    %2737 = vmatprep.subr.mxu0 0.0
    %2738 = vmatpush2.msra.mxu0 0.0
    %2739 = vmatprep.subr.mxu0 0.0
    %2740 = vmatpush2.msra.mxu0 0.0
    %2741 = vmatprep.subr.mxu0 0.0
    %2742 = vmatpush2.msra.mxu0 0.0
    %2743 = vmatprep.subr.mxu0 0.0
    %2744 = vmatpush2.msra.mxu0 0.0
    %2745 = vmatprep.subr.mxu0 0.0
    %2746 = vmatpush2.msra.mxu0 0.0
    %2747 = vmatprep.subr.mxu0 0.0
    %2748 = vmatpush2.msra.mxu0 0.0
    %2749 = vmatprep.subr.mxu0 0.0
    %2750 = vmatpush2.msra.mxu0 0.0
    %2751 = vmatprep.subr.mxu0 0.0
    %2752 = vmatpush2.msra.mxu0 0.0
    %2753 = vmatprep.subr.mxu0 0.0
    %2754 = vmatpush2.msra.mxu0 0.0
    %2755 = vmatprep.subr.mxu0 0.0
    %2756 = vmatpush2.msra.mxu0 0.0
    %2757 = vmatprep.subr.mxu0 0.0
    %2758 = vmatpush2.msra.mxu0 0.0
    %2759 = vmatprep.subr.mxu0 0.0
    %2760 = vmatpush2.msra.mxu0 0.0
    %2761 = vmatprep.subr.mxu0 0.0
    %2762 = vmatpush2.msra.mxu0 0.0
    %2763 = vmatprep.subr.mxu0 0.0
    %2764 = vmatpush2.msra.mxu0 0.0
    %2765 = vmatprep.subr.mxu0 0.0
    %2766 = vmatpush2.msra.mxu0 0.0
    %2767 = vmatprep.subr.mxu0 0.0
    %2768 = vmatpush2.msra.mxu0 0.0
    %2769 = vmatprep.mubr.f32.mxu0 0.0
    %2770 = vmatmul.mubr.f32.gmra.mxu0 %v2700
    %v2771 = vpop.f32.mrf.mxu0
    %v2772 = vadd.f32 0.0, %v2771
    %v2773 = vpop.f32.mrf.mxu0
    %2774 = vmatprep.mubr.f32.mxu0 0.0
    %2775 = vmatmul.mubr.f32.gmra.mxu0 %v2703
    %v2776 = vpop.f32.mrf.mxu0
    %v2777 = vadd.f32 0.0, %v2776
    %v2778 = vpop.f32.mrf.mxu0
    %2779 = vdwg.mxu0
    %v2780 = vld [vmem:[#allocation7] sm:$0xff]
    %v2781 = vld [vmem:[#allocation7 + $0x8] sm:$0xff]
    %v2782 = vld [vmem:[%s266] sm:$0xff]
    %v2783 = vld [vmem:[%s266 + $0x8] sm:$0xff]
    %v2785 = vsel %vm182, %v2782, 0
    %v2788 = vsel %vm182, %v2783, 0
    %2790 = vmatprep.subr.mxu0 0.0
    %2791 = vmatpush1.msra.mxu0 0.0
    %2792 = vmatprep.subr.mxu0 0.0
    %2793 = vmatpush1.msra.mxu0 0.0
    %2794 = vmatprep.subr.mxu0 0.0
    %2795 = vmatpush1.msra.mxu0 0.0
    %2796 = vmatprep.subr.mxu0 0.0
    %2797 = vmatpush1.msra.mxu0 0.0
    %2798 = vmatprep.subr.mxu0 0.0
    %2799 = vmatpush1.msra.mxu0 0.0
    %2800 = vmatprep.subr.mxu0 0.0
    %2801 = vmatpush1.msra.mxu0 0.0
    %2802 = vmatprep.subr.mxu0 0.0
    %2803 = vmatpush1.msra.mxu0 0.0
    %2804 = vmatprep.subr.mxu0 0.0
    %2805 = vmatpush1.msra.mxu0 0.0
    %2806 = vmatprep.subr.mxu0 0.0
    %2807 = vmatpush1.msra.mxu0 %v2674
    %2808 = vmatprep.subr.mxu0 0.0
    %2809 = vmatpush1.msra.mxu0 %v2673
    %2810 = vmatprep.subr.mxu0 0.0
    %2811 = vmatpush1.msra.mxu0 %v2672
    %2812 = vmatprep.subr.mxu0 0.0
    %2813 = vmatpush1.msra.mxu0 %v2671
    %2814 = vmatprep.subr.mxu0 0.0
    %2815 = vmatpush1.msra.mxu0 %v2670
    %2816 = vmatprep.subr.mxu0 0.0
    %2817 = vmatpush1.msra.mxu0 %v2669
    %2818 = vmatprep.subr.mxu0 0.0
    %2819 = vmatpush1.msra.mxu0 %v2668
    %2820 = vmatprep.subr.mxu0 0.0
    %2821 = vmatpush1.msra.mxu0 %v2667
    %2822 = vmatprep.subr.mxu0 0.0
    %2823 = vmatpush2.msra.mxu0 0.0
    %2824 = vmatprep.subr.mxu0 0.0
    %2825 = vmatpush2.msra.mxu0 0.0
    %2826 = vmatprep.subr.mxu0 0.0
    %2827 = vmatpush2.msra.mxu0 0.0
    %2828 = vmatprep.subr.mxu0 0.0
    %2829 = vmatpush2.msra.mxu0 0.0
    %2830 = vmatprep.subr.mxu0 0.0
    %2831 = vmatpush2.msra.mxu0 0.0
    %2832 = vmatprep.subr.mxu0 0.0
    %2833 = vmatpush2.msra.mxu0 0.0
    %2834 = vmatprep.subr.mxu0 0.0
    %2835 = vmatpush2.msra.mxu0 0.0
    %2836 = vmatprep.subr.mxu0 0.0
    %2837 = vmatpush2.msra.mxu0 0.0
    %2838 = vmatprep.subr.mxu0 0.0
    %2839 = vmatpush2.msra.mxu0 0.0
    %2840 = vmatprep.subr.mxu0 0.0
    %2841 = vmatpush2.msra.mxu0 0.0
    %2842 = vmatprep.subr.mxu0 0.0
    %2843 = vmatpush2.msra.mxu0 0.0
    %2844 = vmatprep.subr.mxu0 0.0
    %2845 = vmatpush2.msra.mxu0 0.0
    %2846 = vmatprep.subr.mxu0 0.0
    %2847 = vmatpush2.msra.mxu0 0.0
    %2848 = vmatprep.subr.mxu0 0.0
    %2849 = vmatpush2.msra.mxu0 0.0
    %2850 = vmatprep.subr.mxu0 0.0
    %2851 = vmatpush2.msra.mxu0 0.0
    %2852 = vmatprep.subr.mxu0 0.0
    %2853 = vmatpush2.msra.mxu0 0.0
    %2854 = vmatprep.mubr.f32.mxu0 0.0
    %2855 = vmatmul.mubr.f32.gmra.mxu0 %v2785
    %v2856 = vpop.f32.mrf.mxu0
    %v2857 = vadd.f32 0.0, %v2856
    %v2858 = vpop.f32.mrf.mxu0
    %2859 = vmatprep.mubr.f32.mxu0 0.0
    %2860 = vmatmul.mubr.f32.gmra.mxu0 %v2788
    %v2861 = vpop.f32.mrf.mxu0
    %v2862 = vadd.f32 0.0, %v2861
    %v2863 = vpop.f32.mrf.mxu0
    %2864 = vdwg.mxu0
    %v2865 = vld [vmem:[%s350] sm:$0xff]
    %v2866 = vld [vmem:[%s350 + $0x8] sm:$0xff]
    %v2868 = vsel %vm156, %v2857, 0
    %v2871 = vsel %vm156, %v2862, 0
    %2873 = vmatprep.subr.mxu0 0.0
    %2874 = vmatpush1.msra.mxu0 0.0
    %2875 = vmatprep.subr.mxu0 0.0
    %2876 = vmatpush1.msra.mxu0 0.0
    %2877 = vmatprep.subr.mxu0 0.0
    %2878 = vmatpush1.msra.mxu0 0.0
    %2879 = vmatprep.subr.mxu0 0.0
    %2880 = vmatpush1.msra.mxu0 0.0
    %2881 = vmatprep.subr.mxu0 0.0
    %2882 = vmatpush1.msra.mxu0 0.0
    %2883 = vmatprep.subr.mxu0 0.0
    %2884 = vmatpush1.msra.mxu0 0.0
    %2885 = vmatprep.subr.mxu0 0.0
    %2886 = vmatpush1.msra.mxu0 0.0
    %2887 = vmatprep.subr.mxu0 0.0
    %2888 = vmatpush1.msra.mxu0 0.0
    %2889 = vmatprep.subr.mxu0 0.0
    %2890 = vmatpush1.msra.mxu0 0.0
    %2891 = vmatprep.subr.mxu0 0.0
    %2892 = vmatpush1.msra.mxu0 0.0
    %2893 = vmatprep.subr.mxu0 0.0
    %2894 = vmatpush1.msra.mxu0 0.0
    %2895 = vmatprep.subr.mxu0 0.0
    %2896 = vmatpush1.msra.mxu0 0.0
    %2897 = vmatprep.subr.mxu0 0.0
    %2898 = vmatpush1.msra.mxu0 0.0
    %2899 = vmatprep.subr.mxu0 0.0
    %2900 = vmatpush1.msra.mxu0 0.0
    %2901 = vmatprep.subr.mxu0 0.0
    %2902 = vmatpush1.msra.mxu0 %v2866
    %2903 = vmatprep.subr.mxu0 0.0
    %2904 = vmatpush1.msra.mxu0 %v2865
    %2905 = vmatprep.subr.mxu0 0.0
    %2906 = vmatpush2.msra.mxu0 0.0
    %2907 = vmatprep.subr.mxu0 0.0
    %2908 = vmatpush2.msra.mxu0 0.0
    %2909 = vmatprep.subr.mxu0 0.0
    %2910 = vmatpush2.msra.mxu0 0.0
    %2911 = vmatprep.subr.mxu0 0.0
    %2912 = vmatpush2.msra.mxu0 0.0
    %2913 = vmatprep.subr.mxu0 0.0
    %2914 = vmatpush2.msra.mxu0 0.0
    %2915 = vmatprep.subr.mxu0 0.0
    %2916 = vmatpush2.msra.mxu0 0.0
    %2917 = vmatprep.subr.mxu0 0.0
    %2918 = vmatpush2.msra.mxu0 0.0
    %2919 = vmatprep.subr.mxu0 0.0
    %2920 = vmatpush2.msra.mxu0 0.0
    %2921 = vmatprep.subr.mxu0 0.0
    %2922 = vmatpush2.msra.mxu0 0.0
    %2923 = vmatprep.subr.mxu0 0.0
    %2924 = vmatpush2.msra.mxu0 0.0
    %2925 = vmatprep.subr.mxu0 0.0
    %2926 = vmatpush2.msra.mxu0 0.0
    %2927 = vmatprep.subr.mxu0 0.0
    %2928 = vmatpush2.msra.mxu0 0.0
    %2929 = vmatprep.subr.mxu0 0.0
    %2930 = vmatpush2.msra.mxu0 0.0
    %2931 = vmatprep.subr.mxu0 0.0
    %2932 = vmatpush2.msra.mxu0 0.0
    %2933 = vmatprep.subr.mxu0 0.0
    %2934 = vmatpush2.msra.mxu0 0.0
    %2935 = vmatprep.subr.mxu0 0.0
    %2936 = vmatpush2.msra.mxu0 0.0
    %2937 = vmatprep.mubr.f32.mxu0 0.0
    %2938 = vmatmul.mubr.f32.gmra.mxu0 %v2868
    %v2939 = vpop.f32.mrf.mxu0
    %v2940 = vadd.f32 0.0, %v2939
    %v2941 = vpop.f32.mrf.mxu0
    %2942 = vmatprep.mubr.f32.mxu0 0.0
    %2943 = vmatmul.mubr.f32.gmra.mxu0 %v2871
    %v2944 = vpop.f32.mrf.mxu0
    %v2945 = vadd.f32 0.0, %v2944
    %v2946 = vpop.f32.mrf.mxu0
    %2947 = vdwg.mxu0
    %v2949 = vsel %vm156, %v2772, 0
    %v2952 = vsel %vm156, %v2777, 0
    %2954 = vmatprep.subr.mxu0 0.0
    %2955 = vmatpush1.msra.mxu0 0.0
    %2956 = vmatprep.subr.mxu0 0.0
    %2957 = vmatpush1.msra.mxu0 0.0
    %2958 = vmatprep.subr.mxu0 0.0
    %2959 = vmatpush1.msra.mxu0 0.0
    %2960 = vmatprep.subr.mxu0 0.0
    %2961 = vmatpush1.msra.mxu0 0.0
    %2962 = vmatprep.subr.mxu0 0.0
    %2963 = vmatpush1.msra.mxu0 0.0
    %2964 = vmatprep.subr.mxu0 0.0
    %2965 = vmatpush1.msra.mxu0 0.0
    %2966 = vmatprep.subr.mxu0 0.0
    %2967 = vmatpush1.msra.mxu0 0.0
    %2968 = vmatprep.subr.mxu0 0.0
    %2969 = vmatpush1.msra.mxu0 0.0
    %2970 = vmatprep.subr.mxu0 0.0
    %2971 = vmatpush1.msra.mxu0 0.0
    %2972 = vmatprep.subr.mxu0 0.0
    %2973 = vmatpush1.msra.mxu0 0.0
    %2974 = vmatprep.subr.mxu0 0.0
    %2975 = vmatpush1.msra.mxu0 0.0
    %2976 = vmatprep.subr.mxu0 0.0
    %2977 = vmatpush1.msra.mxu0 0.0
    %2978 = vmatprep.subr.mxu0 0.0
    %2979 = vmatpush1.msra.mxu0 0.0
    %2980 = vmatprep.subr.mxu0 0.0
    %2981 = vmatpush1.msra.mxu0 0.0
    %2982 = vmatprep.subr.mxu0 0.0
    %2983 = vmatpush1.msra.mxu0 %v2781
    %2984 = vmatprep.subr.mxu0 0.0
    %2985 = vmatpush1.msra.mxu0 %v2780
    %2986 = vmatprep.subr.mxu0 0.0
    %2987 = vmatpush2.msra.mxu0 0.0
    %2988 = vmatprep.subr.mxu0 0.0
    %2989 = vmatpush2.msra.mxu0 0.0
    %2990 = vmatprep.subr.mxu0 0.0
    %2991 = vmatpush2.msra.mxu0 0.0
    %2992 = vmatprep.subr.mxu0 0.0
    %2993 = vmatpush2.msra.mxu0 0.0
    %2994 = vmatprep.subr.mxu0 0.0
    %2995 = vmatpush2.msra.mxu0 0.0
    %2996 = vmatprep.subr.mxu0 0.0
    %2997 = vmatpush2.msra.mxu0 0.0
    %2998 = vmatprep.subr.mxu0 0.0
    %2999 = vmatpush2.msra.mxu0 0.0
    %3000 = vmatprep.subr.mxu0 0.0
    %3001 = vmatpush2.msra.mxu0 0.0
    %3002 = vmatprep.subr.mxu0 0.0
    %3003 = vmatpush2.msra.mxu0 0.0
    %3004 = vmatprep.subr.mxu0 0.0
    %3005 = vmatpush2.msra.mxu0 0.0
    %3006 = vmatprep.subr.mxu0 0.0
    %3007 = vmatpush2.msra.mxu0 0.0
    %3008 = vmatprep.subr.mxu0 0.0
    %3009 = vmatpush2.msra.mxu0 0.0
    %3010 = vmatprep.subr.mxu0 0.0
    %3011 = vmatpush2.msra.mxu0 0.0
    %3012 = vmatprep.subr.mxu0 0.0
    %3013 = vmatpush2.msra.mxu0 0.0
    %3014 = vmatprep.subr.mxu0 0.0
    %3015 = vmatpush2.msra.mxu0 0.0
    %3016 = vmatprep.subr.mxu0 0.0
    %3017 = vmatpush2.msra.mxu0 0.0
    %3018 = vmatprep.mubr.f32.mxu0 0.0
    %3019 = vmatmul.mubr.f32.gmra.mxu0 %v2949
    %v3020 = vpop.f32.mrf.mxu0
    %v3021 = vadd.f32 %v2940, %v3020
    %v3022 = vpop.f32.mrf.mxu0
    %3023 = vmatprep.mubr.f32.mxu0 0.0
    %3024 = vmatmul.mubr.f32.gmra.mxu0 %v2952
    %v3025 = vpop.f32.mrf.mxu0
    %v3026 = vadd.f32 %v2945, %v3025
    %v3027 = vpop.f32.mrf.mxu0
    %3028 = vdwg.mxu0
    %v3029 = vld [vmem:[%s515] sm:$0xff]
    %v3030 = vld [vmem:[%s515 + $0x8] sm:$0xff]
    %v3032 = vsel %vm182, %v3029, 0
    %v3035 = vsel %vm182, %v3030, 0
    %3037 = vmatprep.subr.mxu0 0.0
    %3038 = vmatpush1.msra.mxu0 0.0
    %3039 = vmatprep.subr.mxu0 0.0
    %3040 = vmatpush1.msra.mxu0 0.0
    %3041 = vmatprep.subr.mxu0 0.0
    %3042 = vmatpush1.msra.mxu0 0.0
    %3043 = vmatprep.subr.mxu0 0.0
    %3044 = vmatpush1.msra.mxu0 0.0
    %3045 = vmatprep.subr.mxu0 0.0
    %3046 = vmatpush1.msra.mxu0 0.0
    %3047 = vmatprep.subr.mxu0 0.0
    %3048 = vmatpush1.msra.mxu0 0.0
    %3049 = vmatprep.subr.mxu0 0.0
    %3050 = vmatpush1.msra.mxu0 0.0
    %3051 = vmatprep.subr.mxu0 0.0
    %3052 = vmatpush1.msra.mxu0 0.0
    %3053 = vmatprep.subr.mxu0 0.0
    %3054 = vmatpush1.msra.mxu0 %v2674
    %3055 = vmatprep.subr.mxu0 0.0
    %3056 = vmatpush1.msra.mxu0 %v2673
    %3057 = vmatprep.subr.mxu0 0.0
    %3058 = vmatpush1.msra.mxu0 %v2672
    %3059 = vmatprep.subr.mxu0 0.0
    %3060 = vmatpush1.msra.mxu0 %v2671
    %3061 = vmatprep.subr.mxu0 0.0
    %3062 = vmatpush1.msra.mxu0 %v2670
    %3063 = vmatprep.subr.mxu0 0.0
    %3064 = vmatpush1.msra.mxu0 %v2669
    %3065 = vmatprep.subr.mxu0 0.0
    %3066 = vmatpush1.msra.mxu0 %v2668
    %3067 = vmatprep.subr.mxu0 0.0
    %3068 = vmatpush1.msra.mxu0 %v2667
    %3069 = vmatprep.subr.mxu0 0.0
    %3070 = vmatpush2.msra.mxu0 0.0
    %3071 = vmatprep.subr.mxu0 0.0
    %3072 = vmatpush2.msra.mxu0 0.0
    %3073 = vmatprep.subr.mxu0 0.0
    %3074 = vmatpush2.msra.mxu0 0.0
    %3075 = vmatprep.subr.mxu0 0.0
    %3076 = vmatpush2.msra.mxu0 0.0
    %3077 = vmatprep.subr.mxu0 0.0
    %3078 = vmatpush2.msra.mxu0 0.0
    %3079 = vmatprep.subr.mxu0 0.0
    %3080 = vmatpush2.msra.mxu0 0.0
    %3081 = vmatprep.subr.mxu0 0.0
    %3082 = vmatpush2.msra.mxu0 0.0
    %3083 = vmatprep.subr.mxu0 0.0
    %3084 = vmatpush2.msra.mxu0 0.0
    %3085 = vmatprep.subr.mxu0 0.0
    %3086 = vmatpush2.msra.mxu0 0.0
    %3087 = vmatprep.subr.mxu0 0.0
    %3088 = vmatpush2.msra.mxu0 0.0
    %3089 = vmatprep.subr.mxu0 0.0
    %3090 = vmatpush2.msra.mxu0 0.0
    %3091 = vmatprep.subr.mxu0 0.0
    %3092 = vmatpush2.msra.mxu0 0.0
    %3093 = vmatprep.subr.mxu0 0.0
    %3094 = vmatpush2.msra.mxu0 0.0
    %3095 = vmatprep.subr.mxu0 0.0
    %3096 = vmatpush2.msra.mxu0 0.0
    %3097 = vmatprep.subr.mxu0 0.0
    %3098 = vmatpush2.msra.mxu0 0.0
    %3099 = vmatprep.subr.mxu0 0.0
    %3100 = vmatpush2.msra.mxu0 0.0
    %3101 = vmatprep.mubr.f32.mxu0 0.0
    %3102 = vmatmul.mubr.f32.gmra.mxu0 %v3032
    %v3103 = vpop.f32.mrf.mxu0
    %v3104 = vadd.f32 0.0, %v3103
    %v3105 = vpop.f32.mrf.mxu0
    %3106 = vmatprep.mubr.f32.mxu0 0.0
    %3107 = vmatmul.mubr.f32.gmra.mxu0 %v3035
    %v3108 = vpop.f32.mrf.mxu0
    %v3109 = vadd.f32 0.0, %v3108
    %v3110 = vpop.f32.mrf.mxu0
    %3111 = vdwg.mxu0
    %v3112 = vld [vmem:[%s599] sm:$0xff]
    %v3113 = vld [vmem:[%s599 + $0x8] sm:$0xff]
    %v3115 = vsel %vm156, %v3104, 0
    %v3118 = vsel %vm156, %v3109, 0
    %3120 = vmatprep.subr.mxu0 0.0
    %3121 = vmatpush1.msra.mxu0 0.0
    %3122 = vmatprep.subr.mxu0 0.0
    %3123 = vmatpush1.msra.mxu0 0.0
    %3124 = vmatprep.subr.mxu0 0.0
    %3125 = vmatpush1.msra.mxu0 0.0
    %3126 = vmatprep.subr.mxu0 0.0
    %3127 = vmatpush1.msra.mxu0 0.0
    %3128 = vmatprep.subr.mxu0 0.0
    %3129 = vmatpush1.msra.mxu0 0.0
    %3130 = vmatprep.subr.mxu0 0.0
    %3131 = vmatpush1.msra.mxu0 0.0
    %3132 = vmatprep.subr.mxu0 0.0
    %3133 = vmatpush1.msra.mxu0 0.0
    %3134 = vmatprep.subr.mxu0 0.0
    %3135 = vmatpush1.msra.mxu0 0.0
    %3136 = vmatprep.subr.mxu0 0.0
    %3137 = vmatpush1.msra.mxu0 0.0
    %3138 = vmatprep.subr.mxu0 0.0
    %3139 = vmatpush1.msra.mxu0 0.0
    %3140 = vmatprep.subr.mxu0 0.0
    %3141 = vmatpush1.msra.mxu0 0.0
    %3142 = vmatprep.subr.mxu0 0.0
    %3143 = vmatpush1.msra.mxu0 0.0
    %3144 = vmatprep.subr.mxu0 0.0
    %3145 = vmatpush1.msra.mxu0 0.0
    %3146 = vmatprep.subr.mxu0 0.0
    %3147 = vmatpush1.msra.mxu0 0.0
    %3148 = vmatprep.subr.mxu0 0.0
    %3149 = vmatpush1.msra.mxu0 %v3113
    %3150 = vmatprep.subr.mxu0 0.0
    %3151 = vmatpush1.msra.mxu0 %v3112
    %3152 = vmatprep.subr.mxu0 0.0
    %3153 = vmatpush2.msra.mxu0 0.0
    %3154 = vmatprep.subr.mxu0 0.0
    %3155 = vmatpush2.msra.mxu0 0.0
    %3156 = vmatprep.subr.mxu0 0.0
    %3157 = vmatpush2.msra.mxu0 0.0
    %3158 = vmatprep.subr.mxu0 0.0
    %3159 = vmatpush2.msra.mxu0 0.0
    %3160 = vmatprep.subr.mxu0 0.0
    %3161 = vmatpush2.msra.mxu0 0.0
    %3162 = vmatprep.subr.mxu0 0.0
    %3163 = vmatpush2.msra.mxu0 0.0
    %3164 = vmatprep.subr.mxu0 0.0
    %3165 = vmatpush2.msra.mxu0 0.0
    %3166 = vmatprep.subr.mxu0 0.0
    %3167 = vmatpush2.msra.mxu0 0.0
    %3168 = vmatprep.subr.mxu0 0.0
    %3169 = vmatpush2.msra.mxu0 0.0
    %3170 = vmatprep.subr.mxu0 0.0
    %3171 = vmatpush2.msra.mxu0 0.0
    %3172 = vmatprep.subr.mxu0 0.0
    %3173 = vmatpush2.msra.mxu0 0.0
    %3174 = vmatprep.subr.mxu0 0.0
    %3175 = vmatpush2.msra.mxu0 0.0
    %3176 = vmatprep.subr.mxu0 0.0
    %3177 = vmatpush2.msra.mxu0 0.0
    %3178 = vmatprep.subr.mxu0 0.0
    %3179 = vmatpush2.msra.mxu0 0.0
    %3180 = vmatprep.subr.mxu0 0.0
    %3181 = vmatpush2.msra.mxu0 0.0
    %3182 = vmatprep.subr.mxu0 0.0
    %3183 = vmatpush2.msra.mxu0 0.0
    %3184 = vmatprep.mubr.f32.mxu0 0.0
    %3185 = vmatmul.mubr.f32.gmra.mxu0 %v3115
    %v3186 = vpop.f32.mrf.mxu0
    %v3187 = vadd.f32 0.0, %v3186
    %v3188 = vpop.f32.mrf.mxu0
    %3189 = vmatprep.mubr.f32.mxu0 0.0
    %3190 = vmatmul.mubr.f32.gmra.mxu0 %v3118
    %v3191 = vpop.f32.mrf.mxu0
    %v3192 = vadd.f32 0.0, %v3191
    %v3193 = vpop.f32.mrf.mxu0
    %3194 = vdwg.mxu0
    %v3195 = vadd.f32 %v3021, %v3187
    %v3196 = vadd.f32 %v3026, %v3192
    %v3197 = vld [vmem:[%s685] sm:$0xff]
    %v3198 = vld [vmem:[%s685 + $0x8] sm:$0xff]
    %v3200 = vsel %vm182, %v3197, 0
    %v3203 = vsel %vm182, %v3198, 0
    %3205 = vmatprep.subr.mxu0 0.0
    %3206 = vmatpush1.msra.mxu0 0.0
    %3207 = vmatprep.subr.mxu0 0.0
    %3208 = vmatpush1.msra.mxu0 0.0
    %3209 = vmatprep.subr.mxu0 0.0
    %3210 = vmatpush1.msra.mxu0 0.0
    %3211 = vmatprep.subr.mxu0 0.0
    %3212 = vmatpush1.msra.mxu0 0.0
    %3213 = vmatprep.subr.mxu0 0.0
    %3214 = vmatpush1.msra.mxu0 0.0
    %3215 = vmatprep.subr.mxu0 0.0
    %3216 = vmatpush1.msra.mxu0 0.0
    %3217 = vmatprep.subr.mxu0 0.0
    %3218 = vmatpush1.msra.mxu0 0.0
    %3219 = vmatprep.subr.mxu0 0.0
    %3220 = vmatpush1.msra.mxu0 0.0
    %3221 = vmatprep.subr.mxu0 0.0
    %3222 = vmatpush1.msra.mxu0 %v2674
    %3223 = vmatprep.subr.mxu0 0.0
    %3224 = vmatpush1.msra.mxu0 %v2673
    %3225 = vmatprep.subr.mxu0 0.0
    %3226 = vmatpush1.msra.mxu0 %v2672
    %3227 = vmatprep.subr.mxu0 0.0
    %3228 = vmatpush1.msra.mxu0 %v2671
    %3229 = vmatprep.subr.mxu0 0.0
    %3230 = vmatpush1.msra.mxu0 %v2670
    %3231 = vmatprep.subr.mxu0 0.0
    %3232 = vmatpush1.msra.mxu0 %v2669
    %3233 = vmatprep.subr.mxu0 0.0
    %3234 = vmatpush1.msra.mxu0 %v2668
    %3235 = vmatprep.subr.mxu0 0.0
    %3236 = vmatpush1.msra.mxu0 %v2667
    %3237 = vmatprep.subr.mxu0 0.0
    %3238 = vmatpush2.msra.mxu0 0.0
    %3239 = vmatprep.subr.mxu0 0.0
    %3240 = vmatpush2.msra.mxu0 0.0
    %3241 = vmatprep.subr.mxu0 0.0
    %3242 = vmatpush2.msra.mxu0 0.0
    %3243 = vmatprep.subr.mxu0 0.0
    %3244 = vmatpush2.msra.mxu0 0.0
    %3245 = vmatprep.subr.mxu0 0.0
    %3246 = vmatpush2.msra.mxu0 0.0
    %3247 = vmatprep.subr.mxu0 0.0
    %3248 = vmatpush2.msra.mxu0 0.0
    %3249 = vmatprep.subr.mxu0 0.0
    %3250 = vmatpush2.msra.mxu0 0.0
    %3251 = vmatprep.subr.mxu0 0.0
    %3252 = vmatpush2.msra.mxu0 0.0
    %3253 = vmatprep.subr.mxu0 0.0
    %3254 = vmatpush2.msra.mxu0 0.0
    %3255 = vmatprep.subr.mxu0 0.0
    %3256 = vmatpush2.msra.mxu0 0.0
    %3257 = vmatprep.subr.mxu0 0.0
    %3258 = vmatpush2.msra.mxu0 0.0
    %3259 = vmatprep.subr.mxu0 0.0
    %3260 = vmatpush2.msra.mxu0 0.0
    %3261 = vmatprep.subr.mxu0 0.0
    %3262 = vmatpush2.msra.mxu0 0.0
    %3263 = vmatprep.subr.mxu0 0.0
    %3264 = vmatpush2.msra.mxu0 0.0
    %3265 = vmatprep.subr.mxu0 0.0
    %3266 = vmatpush2.msra.mxu0 0.0
    %3267 = vmatprep.subr.mxu0 0.0
    %3268 = vmatpush2.msra.mxu0 0.0
    %3269 = vmatprep.mubr.f32.mxu0 0.0
    %3270 = vmatmul.mubr.f32.gmra.mxu0 %v3200
    %v3271 = vpop.f32.mrf.mxu0
    %v3272 = vadd.f32 0.0, %v3271
    %v3273 = vpop.f32.mrf.mxu0
    %3274 = vmatprep.mubr.f32.mxu0 0.0
    %3275 = vmatmul.mubr.f32.gmra.mxu0 %v3203
    %v3276 = vpop.f32.mrf.mxu0
    %v3277 = vadd.f32 0.0, %v3276
    %v3278 = vpop.f32.mrf.mxu0
    %3279 = vdwg.mxu0
    %v3280 = vld [vmem:[%s769] sm:$0xff]
    %v3281 = vld [vmem:[%s769 + $0x8] sm:$0xff]
    %v3283 = vsel %vm156, %v3272, 0
    %v3286 = vsel %vm156, %v3277, 0
    %3288 = vmatprep.subr.mxu0 0.0
    %3289 = vmatpush1.msra.mxu0 0.0
    %3290 = vmatprep.subr.mxu0 0.0
    %3291 = vmatpush1.msra.mxu0 0.0
    %3292 = vmatprep.subr.mxu0 0.0
    %3293 = vmatpush1.msra.mxu0 0.0
    %3294 = vmatprep.subr.mxu0 0.0
    %3295 = vmatpush1.msra.mxu0 0.0
    %3296 = vmatprep.subr.mxu0 0.0
    %3297 = vmatpush1.msra.mxu0 0.0
    %3298 = vmatprep.subr.mxu0 0.0
    %3299 = vmatpush1.msra.mxu0 0.0
    %3300 = vmatprep.subr.mxu0 0.0
    %3301 = vmatpush1.msra.mxu0 0.0
    %3302 = vmatprep.subr.mxu0 0.0
    %3303 = vmatpush1.msra.mxu0 0.0
    %3304 = vmatprep.subr.mxu0 0.0
    %3305 = vmatpush1.msra.mxu0 0.0
    %3306 = vmatprep.subr.mxu0 0.0
    %3307 = vmatpush1.msra.mxu0 0.0
    %3308 = vmatprep.subr.mxu0 0.0
    %3309 = vmatpush1.msra.mxu0 0.0
    %3310 = vmatprep.subr.mxu0 0.0
    %3311 = vmatpush1.msra.mxu0 0.0
    %3312 = vmatprep.subr.mxu0 0.0
    %3313 = vmatpush1.msra.mxu0 0.0
    %3314 = vmatprep.subr.mxu0 0.0
    %3315 = vmatpush1.msra.mxu0 0.0
    %3316 = vmatprep.subr.mxu0 0.0
    %3317 = vmatpush1.msra.mxu0 %v3281
    %3318 = vmatprep.subr.mxu0 0.0
    %3319 = vmatpush1.msra.mxu0 %v3280
    %3320 = vmatprep.subr.mxu0 0.0
    %3321 = vmatpush2.msra.mxu0 0.0
    %3322 = vmatprep.subr.mxu0 0.0
    %3323 = vmatpush2.msra.mxu0 0.0
    %3324 = vmatprep.subr.mxu0 0.0
    %3325 = vmatpush2.msra.mxu0 0.0
    %3326 = vmatprep.subr.mxu0 0.0
    %3327 = vmatpush2.msra.mxu0 0.0
    %3328 = vmatprep.subr.mxu0 0.0
    %3329 = vmatpush2.msra.mxu0 0.0
    %3330 = vmatprep.subr.mxu0 0.0
    %3331 = vmatpush2.msra.mxu0 0.0
    %3332 = vmatprep.subr.mxu0 0.0
    %3333 = vmatpush2.msra.mxu0 0.0
    %3334 = vmatprep.subr.mxu0 0.0
    %3335 = vmatpush2.msra.mxu0 0.0
    %3336 = vmatprep.subr.mxu0 0.0
    %3337 = vmatpush2.msra.mxu0 0.0
    %3338 = vmatprep.subr.mxu0 0.0
    %3339 = vmatpush2.msra.mxu0 0.0
    %3340 = vmatprep.subr.mxu0 0.0
    %3341 = vmatpush2.msra.mxu0 0.0
    %3342 = vmatprep.subr.mxu0 0.0
    %3343 = vmatpush2.msra.mxu0 0.0
    %3344 = vmatprep.subr.mxu0 0.0
    %3345 = vmatpush2.msra.mxu0 0.0
    %3346 = vmatprep.subr.mxu0 0.0
    %3347 = vmatpush2.msra.mxu0 0.0
    %3348 = vmatprep.subr.mxu0 0.0
    %3349 = vmatpush2.msra.mxu0 0.0
    %3350 = vmatprep.subr.mxu0 0.0
    %3351 = vmatpush2.msra.mxu0 0.0
    %3352 = vmatprep.mubr.f32.mxu0 0.0
    %3353 = vmatmul.mubr.f32.gmra.mxu0 %v3283
    %v3354 = vpop.f32.mrf.mxu0
    %v3355 = vadd.f32 0.0, %v3354
    %v3356 = vpop.f32.mrf.mxu0
    %3357 = vmatprep.mubr.f32.mxu0 0.0
    %3358 = vmatmul.mubr.f32.gmra.mxu0 %v3286
    %v3359 = vpop.f32.mrf.mxu0
    %v3360 = vadd.f32 0.0, %v3359
    %v3361 = vpop.f32.mrf.mxu0
    %3362 = vdwg.mxu0
    %v3363 = vadd.f32 %v3195, %v3355
    %v3364 = vadd.f32 %v3196, %v3360
    %v3365 = vld [vmem:[%s855] sm:$0xff]
    %v3366 = vld [vmem:[%s855 + $0x8] sm:$0xff]
    %v3368 = vsel %vm182, %v3365, 0
    %v3371 = vsel %vm182, %v3366, 0
    %3373 = vmatprep.subr.mxu0 0.0
    %3374 = vmatpush1.msra.mxu0 0.0
    %3375 = vmatprep.subr.mxu0 0.0
    %3376 = vmatpush1.msra.mxu0 0.0
    %3377 = vmatprep.subr.mxu0 0.0
    %3378 = vmatpush1.msra.mxu0 0.0
    %3379 = vmatprep.subr.mxu0 0.0
    %3380 = vmatpush1.msra.mxu0 0.0
    %3381 = vmatprep.subr.mxu0 0.0
    %3382 = vmatpush1.msra.mxu0 0.0
    %3383 = vmatprep.subr.mxu0 0.0
    %3384 = vmatpush1.msra.mxu0 0.0
    %3385 = vmatprep.subr.mxu0 0.0
    %3386 = vmatpush1.msra.mxu0 0.0
    %3387 = vmatprep.subr.mxu0 0.0
    %3388 = vmatpush1.msra.mxu0 0.0
    %3389 = vmatprep.subr.mxu0 0.0
    %3390 = vmatpush1.msra.mxu0 %v2674
    %3391 = vmatprep.subr.mxu0 0.0
    %3392 = vmatpush1.msra.mxu0 %v2673
    %3393 = vmatprep.subr.mxu0 0.0
    %3394 = vmatpush1.msra.mxu0 %v2672
    %3395 = vmatprep.subr.mxu0 0.0
    %3396 = vmatpush1.msra.mxu0 %v2671
    %3397 = vmatprep.subr.mxu0 0.0
    %3398 = vmatpush1.msra.mxu0 %v2670
    %3399 = vmatprep.subr.mxu0 0.0
    %3400 = vmatpush1.msra.mxu0 %v2669
    %3401 = vmatprep.subr.mxu0 0.0
    %3402 = vmatpush1.msra.mxu0 %v2668
    %3403 = vmatprep.subr.mxu0 0.0
    %3404 = vmatpush1.msra.mxu0 %v2667
    %3405 = vmatprep.subr.mxu0 0.0
    %3406 = vmatpush2.msra.mxu0 0.0
    %3407 = vmatprep.subr.mxu0 0.0
    %3408 = vmatpush2.msra.mxu0 0.0
    %3409 = vmatprep.subr.mxu0 0.0
    %3410 = vmatpush2.msra.mxu0 0.0
    %3411 = vmatprep.subr.mxu0 0.0
    %3412 = vmatpush2.msra.mxu0 0.0
    %3413 = vmatprep.subr.mxu0 0.0
    %3414 = vmatpush2.msra.mxu0 0.0
    %3415 = vmatprep.subr.mxu0 0.0
    %3416 = vmatpush2.msra.mxu0 0.0
    %3417 = vmatprep.subr.mxu0 0.0
    %3418 = vmatpush2.msra.mxu0 0.0
    %3419 = vmatprep.subr.mxu0 0.0
    %3420 = vmatpush2.msra.mxu0 0.0
    %3421 = vmatprep.subr.mxu0 0.0
    %3422 = vmatpush2.msra.mxu0 0.0
    %3423 = vmatprep.subr.mxu0 0.0
    %3424 = vmatpush2.msra.mxu0 0.0
    %3425 = vmatprep.subr.mxu0 0.0
    %3426 = vmatpush2.msra.mxu0 0.0
    %3427 = vmatprep.subr.mxu0 0.0
    %3428 = vmatpush2.msra.mxu0 0.0
    %3429 = vmatprep.subr.mxu0 0.0
    %3430 = vmatpush2.msra.mxu0 0.0
    %3431 = vmatprep.subr.mxu0 0.0
    %3432 = vmatpush2.msra.mxu0 0.0
    %3433 = vmatprep.subr.mxu0 0.0
    %3434 = vmatpush2.msra.mxu0 0.0
    %3435 = vmatprep.subr.mxu0 0.0
    %3436 = vmatpush2.msra.mxu0 0.0
    %3437 = vmatprep.mubr.f32.mxu0 0.0
    %3438 = vmatmul.mubr.f32.gmra.mxu0 %v3368
    %v3439 = vpop.f32.mrf.mxu0
    %v3440 = vadd.f32 0.0, %v3439
    %v3441 = vpop.f32.mrf.mxu0
    %3442 = vmatprep.mubr.f32.mxu0 0.0
    %3443 = vmatmul.mubr.f32.gmra.mxu0 %v3371
    %v3444 = vpop.f32.mrf.mxu0
    %v3445 = vadd.f32 0.0, %v3444
    %v3446 = vpop.f32.mrf.mxu0
    %3447 = vdwg.mxu0
    %v3448 = vld [vmem:[%s939] sm:$0xff]
    %v3449 = vld [vmem:[%s939 + $0x8] sm:$0xff]
    %v3451 = vsel %vm156, %v3440, 0
    %v3454 = vsel %vm156, %v3445, 0
    %3456 = vmatprep.subr.mxu0 0.0
    %3457 = vmatpush1.msra.mxu0 0.0
    %3458 = vmatprep.subr.mxu0 0.0
    %3459 = vmatpush1.msra.mxu0 0.0
    %3460 = vmatprep.subr.mxu0 0.0
    %3461 = vmatpush1.msra.mxu0 0.0
    %3462 = vmatprep.subr.mxu0 0.0
    %3463 = vmatpush1.msra.mxu0 0.0
    %3464 = vmatprep.subr.mxu0 0.0
    %3465 = vmatpush1.msra.mxu0 0.0
    %3466 = vmatprep.subr.mxu0 0.0
    %3467 = vmatpush1.msra.mxu0 0.0
    %3468 = vmatprep.subr.mxu0 0.0
    %3469 = vmatpush1.msra.mxu0 0.0
    %3470 = vmatprep.subr.mxu0 0.0
    %3471 = vmatpush1.msra.mxu0 0.0
    %3472 = vmatprep.subr.mxu0 0.0
    %3473 = vmatpush1.msra.mxu0 0.0
    %3474 = vmatprep.subr.mxu0 0.0
    %3475 = vmatpush1.msra.mxu0 0.0
    %3476 = vmatprep.subr.mxu0 0.0
    %3477 = vmatpush1.msra.mxu0 0.0
    %3478 = vmatprep.subr.mxu0 0.0
    %3479 = vmatpush1.msra.mxu0 0.0
    %3480 = vmatprep.subr.mxu0 0.0
    %3481 = vmatpush1.msra.mxu0 0.0
    %3482 = vmatprep.subr.mxu0 0.0
    %3483 = vmatpush1.msra.mxu0 0.0
    %3484 = vmatprep.subr.mxu0 0.0
    %3485 = vmatpush1.msra.mxu0 %v3449
    %3486 = vmatprep.subr.mxu0 0.0
    %3487 = vmatpush1.msra.mxu0 %v3448
    %3488 = vmatprep.subr.mxu0 0.0
    %3489 = vmatpush2.msra.mxu0 0.0
    %3490 = vmatprep.subr.mxu0 0.0
    %3491 = vmatpush2.msra.mxu0 0.0
    %3492 = vmatprep.subr.mxu0 0.0
    %3493 = vmatpush2.msra.mxu0 0.0
    %3494 = vmatprep.subr.mxu0 0.0
    %3495 = vmatpush2.msra.mxu0 0.0
    %3496 = vmatprep.subr.mxu0 0.0
    %3497 = vmatpush2.msra.mxu0 0.0
    %3498 = vmatprep.subr.mxu0 0.0
    %3499 = vmatpush2.msra.mxu0 0.0
    %3500 = vmatprep.subr.mxu0 0.0
    %3501 = vmatpush2.msra.mxu0 0.0
    %3502 = vmatprep.subr.mxu0 0.0
    %3503 = vmatpush2.msra.mxu0 0.0
    %3504 = vmatprep.subr.mxu0 0.0
    %3505 = vmatpush2.msra.mxu0 0.0
    %3506 = vmatprep.subr.mxu0 0.0
    %3507 = vmatpush2.msra.mxu0 0.0
    %3508 = vmatprep.subr.mxu0 0.0
    %3509 = vmatpush2.msra.mxu0 0.0
    %3510 = vmatprep.subr.mxu0 0.0
    %3511 = vmatpush2.msra.mxu0 0.0
    %3512 = vmatprep.subr.mxu0 0.0
    %3513 = vmatpush2.msra.mxu0 0.0
    %3514 = vmatprep.subr.mxu0 0.0
    %3515 = vmatpush2.msra.mxu0 0.0
    %3516 = vmatprep.subr.mxu0 0.0
    %3517 = vmatpush2.msra.mxu0 0.0
    %3518 = vmatprep.subr.mxu0 0.0
    %3519 = vmatpush2.msra.mxu0 0.0
    %3520 = vmatprep.mubr.f32.mxu0 0.0
    %3521 = vmatmul.mubr.f32.gmra.mxu0 %v3451
    %v3522 = vpop.f32.mrf.mxu0
    %v3523 = vadd.f32 0.0, %v3522
    %v3524 = vpop.f32.mrf.mxu0
    %3525 = vmatprep.mubr.f32.mxu0 0.0
    %3526 = vmatmul.mubr.f32.gmra.mxu0 %v3454
    %v3527 = vpop.f32.mrf.mxu0
    %v3528 = vadd.f32 0.0, %v3527
    %v3529 = vpop.f32.mrf.mxu0
    %3530 = vdwg.mxu0
    %v3531 = vadd.f32 %v3363, %v3523
    %v3532 = vadd.f32 %v3364, %v3528
    %v3533 = vld [vmem:[%s1025] sm:$0xff]
    %v3534 = vld [vmem:[%s1025 + $0x8] sm:$0xff]
    %v3536 = vsel %vm182, %v3533, 0
    %v3539 = vsel %vm182, %v3534, 0
    %3541 = vmatprep.subr.mxu0 0.0
    %3542 = vmatpush1.msra.mxu0 0.0
    %3543 = vmatprep.subr.mxu0 0.0
    %3544 = vmatpush1.msra.mxu0 0.0
    %3545 = vmatprep.subr.mxu0 0.0
    %3546 = vmatpush1.msra.mxu0 0.0
    %3547 = vmatprep.subr.mxu0 0.0
    %3548 = vmatpush1.msra.mxu0 0.0
    %3549 = vmatprep.subr.mxu0 0.0
    %3550 = vmatpush1.msra.mxu0 0.0
    %3551 = vmatprep.subr.mxu0 0.0
    %3552 = vmatpush1.msra.mxu0 0.0
    %3553 = vmatprep.subr.mxu0 0.0
    %3554 = vmatpush1.msra.mxu0 0.0
    %3555 = vmatprep.subr.mxu0 0.0
    %3556 = vmatpush1.msra.mxu0 0.0
    %3557 = vmatprep.subr.mxu0 0.0
    %3558 = vmatpush1.msra.mxu0 %v2674
    %3559 = vmatprep.subr.mxu0 0.0
    %3560 = vmatpush1.msra.mxu0 %v2673
    %3561 = vmatprep.subr.mxu0 0.0
    %3562 = vmatpush1.msra.mxu0 %v2672
    %3563 = vmatprep.subr.mxu0 0.0
    %3564 = vmatpush1.msra.mxu0 %v2671
    %3565 = vmatprep.subr.mxu0 0.0
    %3566 = vmatpush1.msra.mxu0 %v2670
    %3567 = vmatprep.subr.mxu0 0.0
    %3568 = vmatpush1.msra.mxu0 %v2669
    %3569 = vmatprep.subr.mxu0 0.0
    %3570 = vmatpush1.msra.mxu0 %v2668
    %3571 = vmatprep.subr.mxu0 0.0
    %3572 = vmatpush1.msra.mxu0 %v2667
    %3573 = vmatprep.subr.mxu0 0.0
    %3574 = vmatpush2.msra.mxu0 0.0
    %3575 = vmatprep.subr.mxu0 0.0
    %3576 = vmatpush2.msra.mxu0 0.0
    %3577 = vmatprep.subr.mxu0 0.0
    %3578 = vmatpush2.msra.mxu0 0.0
    %3579 = vmatprep.subr.mxu0 0.0
    %3580 = vmatpush2.msra.mxu0 0.0
    %3581 = vmatprep.subr.mxu0 0.0
    %3582 = vmatpush2.msra.mxu0 0.0
    %3583 = vmatprep.subr.mxu0 0.0
    %3584 = vmatpush2.msra.mxu0 0.0
    %3585 = vmatprep.subr.mxu0 0.0
    %3586 = vmatpush2.msra.mxu0 0.0
    %3587 = vmatprep.subr.mxu0 0.0
    %3588 = vmatpush2.msra.mxu0 0.0
    %3589 = vmatprep.subr.mxu0 0.0
    %3590 = vmatpush2.msra.mxu0 0.0
    %3591 = vmatprep.subr.mxu0 0.0
    %3592 = vmatpush2.msra.mxu0 0.0
    %3593 = vmatprep.subr.mxu0 0.0
    %3594 = vmatpush2.msra.mxu0 0.0
    %3595 = vmatprep.subr.mxu0 0.0
    %3596 = vmatpush2.msra.mxu0 0.0
    %3597 = vmatprep.subr.mxu0 0.0
    %3598 = vmatpush2.msra.mxu0 0.0
    %3599 = vmatprep.subr.mxu0 0.0
    %3600 = vmatpush2.msra.mxu0 0.0
    %3601 = vmatprep.subr.mxu0 0.0
    %3602 = vmatpush2.msra.mxu0 0.0
    %3603 = vmatprep.subr.mxu0 0.0
    %3604 = vmatpush2.msra.mxu0 0.0
    %3605 = vmatprep.mubr.f32.mxu0 0.0
    %3606 = vmatmul.mubr.f32.gmra.mxu0 %v3536
    %v3607 = vpop.f32.mrf.mxu0
    %v3608 = vadd.f32 0.0, %v3607
    %v3609 = vpop.f32.mrf.mxu0
    %3610 = vmatprep.mubr.f32.mxu0 0.0
    %3611 = vmatmul.mubr.f32.gmra.mxu0 %v3539
    %v3612 = vpop.f32.mrf.mxu0
    %v3613 = vadd.f32 0.0, %v3612
    %v3614 = vpop.f32.mrf.mxu0
    %3615 = vdwg.mxu0
    %v3616 = vld [vmem:[%s1109] sm:$0xff]
    %v3617 = vld [vmem:[%s1109 + $0x8] sm:$0xff]
    %v3619 = vsel %vm156, %v3608, 0
    %v3622 = vsel %vm156, %v3613, 0
    %3624 = vmatprep.subr.mxu0 0.0
    %3625 = vmatpush1.msra.mxu0 0.0
    %3626 = vmatprep.subr.mxu0 0.0
    %3627 = vmatpush1.msra.mxu0 0.0
    %3628 = vmatprep.subr.mxu0 0.0
    %3629 = vmatpush1.msra.mxu0 0.0
    %3630 = vmatprep.subr.mxu0 0.0
    %3631 = vmatpush1.msra.mxu0 0.0
    %3632 = vmatprep.subr.mxu0 0.0
    %3633 = vmatpush1.msra.mxu0 0.0
    %3634 = vmatprep.subr.mxu0 0.0
    %3635 = vmatpush1.msra.mxu0 0.0
    %3636 = vmatprep.subr.mxu0 0.0
    %3637 = vmatpush1.msra.mxu0 0.0
    %3638 = vmatprep.subr.mxu0 0.0
    %3639 = vmatpush1.msra.mxu0 0.0
    %3640 = vmatprep.subr.mxu0 0.0
    %3641 = vmatpush1.msra.mxu0 0.0
    %3642 = vmatprep.subr.mxu0 0.0
    %3643 = vmatpush1.msra.mxu0 0.0
    %3644 = vmatprep.subr.mxu0 0.0
    %3645 = vmatpush1.msra.mxu0 0.0
    %3646 = vmatprep.subr.mxu0 0.0
    %3647 = vmatpush1.msra.mxu0 0.0
    %3648 = vmatprep.subr.mxu0 0.0
    %3649 = vmatpush1.msra.mxu0 0.0
    %3650 = vmatprep.subr.mxu0 0.0
    %3651 = vmatpush1.msra.mxu0 0.0
    %3652 = vmatprep.subr.mxu0 0.0
    %3653 = vmatpush1.msra.mxu0 %v3617
    %3654 = vmatprep.subr.mxu0 0.0
    %3655 = vmatpush1.msra.mxu0 %v3616
    %3656 = vmatprep.subr.mxu0 0.0
    %3657 = vmatpush2.msra.mxu0 0.0
    %3658 = vmatprep.subr.mxu0 0.0
    %3659 = vmatpush2.msra.mxu0 0.0
    %3660 = vmatprep.subr.mxu0 0.0
    %3661 = vmatpush2.msra.mxu0 0.0
    %3662 = vmatprep.subr.mxu0 0.0
    %3663 = vmatpush2.msra.mxu0 0.0
    %3664 = vmatprep.subr.mxu0 0.0
    %3665 = vmatpush2.msra.mxu0 0.0
    %3666 = vmatprep.subr.mxu0 0.0
    %3667 = vmatpush2.msra.mxu0 0.0
    %3668 = vmatprep.subr.mxu0 0.0
    %3669 = vmatpush2.msra.mxu0 0.0
    %3670 = vmatprep.subr.mxu0 0.0
    %3671 = vmatpush2.msra.mxu0 0.0
    %3672 = vmatprep.subr.mxu0 0.0
    %3673 = vmatpush2.msra.mxu0 0.0
    %3674 = vmatprep.subr.mxu0 0.0
    %3675 = vmatpush2.msra.mxu0 0.0
    %3676 = vmatprep.subr.mxu0 0.0
    %3677 = vmatpush2.msra.mxu0 0.0
    %3678 = vmatprep.subr.mxu0 0.0
    %3679 = vmatpush2.msra.mxu0 0.0
    %3680 = vmatprep.subr.mxu0 0.0
    %3681 = vmatpush2.msra.mxu0 0.0
    %3682 = vmatprep.subr.mxu0 0.0
    %3683 = vmatpush2.msra.mxu0 0.0
    %3684 = vmatprep.subr.mxu0 0.0
    %3685 = vmatpush2.msra.mxu0 0.0
    %3686 = vmatprep.subr.mxu0 0.0
    %3687 = vmatpush2.msra.mxu0 0.0
    %3688 = vmatprep.mubr.f32.mxu0 0.0
    %3689 = vmatmul.mubr.f32.gmra.mxu0 %v3619
    %v3690 = vpop.f32.mrf.mxu0
    %v3691 = vadd.f32 0.0, %v3690
    %v3692 = vpop.f32.mrf.mxu0
    %3693 = vmatprep.mubr.f32.mxu0 0.0
    %3694 = vmatmul.mubr.f32.gmra.mxu0 %v3622
    %v3695 = vpop.f32.mrf.mxu0
    %v3696 = vadd.f32 0.0, %v3695
    %v3697 = vpop.f32.mrf.mxu0
    %3698 = vdwg.mxu0
    %v3699 = vadd.f32 %v3531, %v3691
    %v3700 = vadd.f32 %v3532, %v3696
    %v3701 = vld [vmem:[%s1195] sm:$0xff]
    %v3702 = vld [vmem:[%s1195 + $0x8] sm:$0xff]
    %v3704 = vsel %vm182, %v3701, 0
    %v3707 = vsel %vm182, %v3702, 0
    %3709 = vmatprep.subr.mxu0 0.0
    %3710 = vmatpush1.msra.mxu0 0.0
    %3711 = vmatprep.subr.mxu0 0.0
    %3712 = vmatpush1.msra.mxu0 0.0
    %3713 = vmatprep.subr.mxu0 0.0
    %3714 = vmatpush1.msra.mxu0 0.0
    %3715 = vmatprep.subr.mxu0 0.0
    %3716 = vmatpush1.msra.mxu0 0.0
    %3717 = vmatprep.subr.mxu0 0.0
    %3718 = vmatpush1.msra.mxu0 0.0
    %3719 = vmatprep.subr.mxu0 0.0
    %3720 = vmatpush1.msra.mxu0 0.0
    %3721 = vmatprep.subr.mxu0 0.0
    %3722 = vmatpush1.msra.mxu0 0.0
    %3723 = vmatprep.subr.mxu0 0.0
    %3724 = vmatpush1.msra.mxu0 0.0
    %3725 = vmatprep.subr.mxu0 0.0
    %3726 = vmatpush1.msra.mxu0 %v2674
    %3727 = vmatprep.subr.mxu0 0.0
    %3728 = vmatpush1.msra.mxu0 %v2673
    %3729 = vmatprep.subr.mxu0 0.0
    %3730 = vmatpush1.msra.mxu0 %v2672
    %3731 = vmatprep.subr.mxu0 0.0
    %3732 = vmatpush1.msra.mxu0 %v2671
    %3733 = vmatprep.subr.mxu0 0.0
    %3734 = vmatpush1.msra.mxu0 %v2670
    %3735 = vmatprep.subr.mxu0 0.0
    %3736 = vmatpush1.msra.mxu0 %v2669
    %3737 = vmatprep.subr.mxu0 0.0
    %3738 = vmatpush1.msra.mxu0 %v2668
    %3739 = vmatprep.subr.mxu0 0.0
    %3740 = vmatpush1.msra.mxu0 %v2667
    %3741 = vmatprep.subr.mxu0 0.0
    %3742 = vmatpush2.msra.mxu0 0.0
    %3743 = vmatprep.subr.mxu0 0.0
    %3744 = vmatpush2.msra.mxu0 0.0
    %3745 = vmatprep.subr.mxu0 0.0
    %3746 = vmatpush2.msra.mxu0 0.0
    %3747 = vmatprep.subr.mxu0 0.0
    %3748 = vmatpush2.msra.mxu0 0.0
    %3749 = vmatprep.subr.mxu0 0.0
    %3750 = vmatpush2.msra.mxu0 0.0
    %3751 = vmatprep.subr.mxu0 0.0
    %3752 = vmatpush2.msra.mxu0 0.0
    %3753 = vmatprep.subr.mxu0 0.0
    %3754 = vmatpush2.msra.mxu0 0.0
    %3755 = vmatprep.subr.mxu0 0.0
    %3756 = vmatpush2.msra.mxu0 0.0
    %3757 = vmatprep.subr.mxu0 0.0
    %3758 = vmatpush2.msra.mxu0 0.0
    %3759 = vmatprep.subr.mxu0 0.0
    %3760 = vmatpush2.msra.mxu0 0.0
    %3761 = vmatprep.subr.mxu0 0.0
    %3762 = vmatpush2.msra.mxu0 0.0
    %3763 = vmatprep.subr.mxu0 0.0
    %3764 = vmatpush2.msra.mxu0 0.0
    %3765 = vmatprep.subr.mxu0 0.0
    %3766 = vmatpush2.msra.mxu0 0.0
    %3767 = vmatprep.subr.mxu0 0.0
    %3768 = vmatpush2.msra.mxu0 0.0
    %3769 = vmatprep.subr.mxu0 0.0
    %3770 = vmatpush2.msra.mxu0 0.0
    %3771 = vmatprep.subr.mxu0 0.0
    %3772 = vmatpush2.msra.mxu0 0.0
    %3773 = vmatprep.mubr.f32.mxu0 0.0
    %3774 = vmatmul.mubr.f32.gmra.mxu0 %v3704
    %v3775 = vpop.f32.mrf.mxu0
    %v3776 = vadd.f32 0.0, %v3775
    %v3777 = vpop.f32.mrf.mxu0
    %3778 = vmatprep.mubr.f32.mxu0 0.0
    %3779 = vmatmul.mubr.f32.gmra.mxu0 %v3707
    %v3780 = vpop.f32.mrf.mxu0
    %v3781 = vadd.f32 0.0, %v3780
    %v3782 = vpop.f32.mrf.mxu0
    %3783 = vdwg.mxu0
    %v3784 = vld [vmem:[%s1279] sm:$0xff]
    %v3785 = vld [vmem:[%s1279 + $0x8] sm:$0xff]
    %v3787 = vsel %vm156, %v3776, 0
    %v3790 = vsel %vm156, %v3781, 0
    %3792 = vmatprep.subr.mxu0 0.0
    %3793 = vmatpush1.msra.mxu0 0.0
    %3794 = vmatprep.subr.mxu0 0.0
    %3795 = vmatpush1.msra.mxu0 0.0
    %3796 = vmatprep.subr.mxu0 0.0
    %3797 = vmatpush1.msra.mxu0 0.0
    %3798 = vmatprep.subr.mxu0 0.0
    %3799 = vmatpush1.msra.mxu0 0.0
    %3800 = vmatprep.subr.mxu0 0.0
    %3801 = vmatpush1.msra.mxu0 0.0
    %3802 = vmatprep.subr.mxu0 0.0
    %3803 = vmatpush1.msra.mxu0 0.0
    %3804 = vmatprep.subr.mxu0 0.0
    %3805 = vmatpush1.msra.mxu0 0.0
    %3806 = vmatprep.subr.mxu0 0.0
    %3807 = vmatpush1.msra.mxu0 0.0
    %3808 = vmatprep.subr.mxu0 0.0
    %3809 = vmatpush1.msra.mxu0 0.0
    %3810 = vmatprep.subr.mxu0 0.0
    %3811 = vmatpush1.msra.mxu0 0.0
    %3812 = vmatprep.subr.mxu0 0.0
    %3813 = vmatpush1.msra.mxu0 0.0
    %3814 = vmatprep.subr.mxu0 0.0
    %3815 = vmatpush1.msra.mxu0 0.0
    %3816 = vmatprep.subr.mxu0 0.0
    %3817 = vmatpush1.msra.mxu0 0.0
    %3818 = vmatprep.subr.mxu0 0.0
    %3819 = vmatpush1.msra.mxu0 0.0
    %3820 = vmatprep.subr.mxu0 0.0
    %3821 = vmatpush1.msra.mxu0 %v3785
    %3822 = vmatprep.subr.mxu0 0.0
    %3823 = vmatpush1.msra.mxu0 %v3784
    %3824 = vmatprep.subr.mxu0 0.0
    %3825 = vmatpush2.msra.mxu0 0.0
    %3826 = vmatprep.subr.mxu0 0.0
    %3827 = vmatpush2.msra.mxu0 0.0
    %3828 = vmatprep.subr.mxu0 0.0
    %3829 = vmatpush2.msra.mxu0 0.0
    %3830 = vmatprep.subr.mxu0 0.0
    %3831 = vmatpush2.msra.mxu0 0.0
    %3832 = vmatprep.subr.mxu0 0.0
    %3833 = vmatpush2.msra.mxu0 0.0
    %3834 = vmatprep.subr.mxu0 0.0
    %3835 = vmatpush2.msra.mxu0 0.0
    %3836 = vmatprep.subr.mxu0 0.0
    %3837 = vmatpush2.msra.mxu0 0.0
    %3838 = vmatprep.subr.mxu0 0.0
    %3839 = vmatpush2.msra.mxu0 0.0
    %3840 = vmatprep.subr.mxu0 0.0
    %3841 = vmatpush2.msra.mxu0 0.0
    %3842 = vmatprep.subr.mxu0 0.0
    %3843 = vmatpush2.msra.mxu0 0.0
    %3844 = vmatprep.subr.mxu0 0.0
    %3845 = vmatpush2.msra.mxu0 0.0
    %3846 = vmatprep.subr.mxu0 0.0
    %3847 = vmatpush2.msra.mxu0 0.0
    %3848 = vmatprep.subr.mxu0 0.0
    %3849 = vmatpush2.msra.mxu0 0.0
    %3850 = vmatprep.subr.mxu0 0.0
    %3851 = vmatpush2.msra.mxu0 0.0
    %3852 = vmatprep.subr.mxu0 0.0
    %3853 = vmatpush2.msra.mxu0 0.0
    %3854 = vmatprep.subr.mxu0 0.0
    %3855 = vmatpush2.msra.mxu0 0.0
    %3856 = vmatprep.mubr.f32.mxu0 0.0
    %3857 = vmatmul.mubr.f32.gmra.mxu0 %v3787
    %v3858 = vpop.f32.mrf.mxu0
    %v3859 = vadd.f32 0.0, %v3858
    %v3860 = vpop.f32.mrf.mxu0
    %3861 = vmatprep.mubr.f32.mxu0 0.0
    %3862 = vmatmul.mubr.f32.gmra.mxu0 %v3790
    %v3863 = vpop.f32.mrf.mxu0
    %v3864 = vadd.f32 0.0, %v3863
    %v3865 = vpop.f32.mrf.mxu0
    %3866 = vdwg.mxu0
    %v3867 = vadd.f32 %v3699, %v3859
    %v3868 = vadd.f32 %v3700, %v3864
    %v3869 = vld [vmem:[%s1365] sm:$0xff]
    %v3870 = vld [vmem:[%s1365 + $0x8] sm:$0xff]
    %v3872 = vsel %vm182, %v3869, 0
    %v3875 = vsel %vm182, %v3870, 0
    %3877 = vmatprep.subr.mxu0 0.0
    %3878 = vmatpush1.msra.mxu0 0.0
    %3879 = vmatprep.subr.mxu0 0.0
    %3880 = vmatpush1.msra.mxu0 0.0
    %3881 = vmatprep.subr.mxu0 0.0
    %3882 = vmatpush1.msra.mxu0 0.0
    %3883 = vmatprep.subr.mxu0 0.0
    %3884 = vmatpush1.msra.mxu0 0.0
    %3885 = vmatprep.subr.mxu0 0.0
    %3886 = vmatpush1.msra.mxu0 0.0
    %3887 = vmatprep.subr.mxu0 0.0
    %3888 = vmatpush1.msra.mxu0 0.0
    %3889 = vmatprep.subr.mxu0 0.0
    %3890 = vmatpush1.msra.mxu0 0.0
    %3891 = vmatprep.subr.mxu0 0.0
    %3892 = vmatpush1.msra.mxu0 0.0
    %3893 = vmatprep.subr.mxu0 0.0
    %3894 = vmatpush1.msra.mxu0 %v2674
    %3895 = vmatprep.subr.mxu0 0.0
    %3896 = vmatpush1.msra.mxu0 %v2673
    %3897 = vmatprep.subr.mxu0 0.0
    %3898 = vmatpush1.msra.mxu0 %v2672
    %3899 = vmatprep.subr.mxu0 0.0
    %3900 = vmatpush1.msra.mxu0 %v2671
    %3901 = vmatprep.subr.mxu0 0.0
    %3902 = vmatpush1.msra.mxu0 %v2670
    %3903 = vmatprep.subr.mxu0 0.0
    %3904 = vmatpush1.msra.mxu0 %v2669
    %3905 = vmatprep.subr.mxu0 0.0
    %3906 = vmatpush1.msra.mxu0 %v2668
    %3907 = vmatprep.subr.mxu0 0.0
    %3908 = vmatpush1.msra.mxu0 %v2667
    %3909 = vmatprep.subr.mxu0 0.0
    %3910 = vmatpush2.msra.mxu0 0.0
    %3911 = vmatprep.subr.mxu0 0.0
    %3912 = vmatpush2.msra.mxu0 0.0
    %3913 = vmatprep.subr.mxu0 0.0
    %3914 = vmatpush2.msra.mxu0 0.0
    %3915 = vmatprep.subr.mxu0 0.0
    %3916 = vmatpush2.msra.mxu0 0.0
    %3917 = vmatprep.subr.mxu0 0.0
    %3918 = vmatpush2.msra.mxu0 0.0
    %3919 = vmatprep.subr.mxu0 0.0
    %3920 = vmatpush2.msra.mxu0 0.0
    %3921 = vmatprep.subr.mxu0 0.0
    %3922 = vmatpush2.msra.mxu0 0.0
    %3923 = vmatprep.subr.mxu0 0.0
    %3924 = vmatpush2.msra.mxu0 0.0
    %3925 = vmatprep.subr.mxu0 0.0
    %3926 = vmatpush2.msra.mxu0 0.0
    %3927 = vmatprep.subr.mxu0 0.0
    %3928 = vmatpush2.msra.mxu0 0.0
    %3929 = vmatprep.subr.mxu0 0.0
    %3930 = vmatpush2.msra.mxu0 0.0
    %3931 = vmatprep.subr.mxu0 0.0
    %3932 = vmatpush2.msra.mxu0 0.0
    %3933 = vmatprep.subr.mxu0 0.0
    %3934 = vmatpush2.msra.mxu0 0.0
    %3935 = vmatprep.subr.mxu0 0.0
    %3936 = vmatpush2.msra.mxu0 0.0
    %3937 = vmatprep.subr.mxu0 0.0
    %3938 = vmatpush2.msra.mxu0 0.0
    %3939 = vmatprep.subr.mxu0 0.0
    %3940 = vmatpush2.msra.mxu0 0.0
    %3941 = vmatprep.mubr.f32.mxu0 0.0
    %3942 = vmatmul.mubr.f32.gmra.mxu0 %v3872
    %v3943 = vpop.f32.mrf.mxu0
    %v3944 = vadd.f32 0.0, %v3943
    %v3945 = vpop.f32.mrf.mxu0
    %3946 = vmatprep.mubr.f32.mxu0 0.0
    %3947 = vmatmul.mubr.f32.gmra.mxu0 %v3875
    %v3948 = vpop.f32.mrf.mxu0
    %v3949 = vadd.f32 0.0, %v3948
    %v3950 = vpop.f32.mrf.mxu0
    %3951 = vdwg.mxu0
    %v3952 = vld [vmem:[%s1449] sm:$0xff]
    %v3953 = vld [vmem:[%s1449 + $0x8] sm:$0xff]
    %v3955 = vsel %vm156, %v3944, 0
    %v3958 = vsel %vm156, %v3949, 0
    %3960 = vmatprep.subr.mxu0 0.0
    %3961 = vmatpush1.msra.mxu0 0.0
    %3962 = vmatprep.subr.mxu0 0.0
    %3963 = vmatpush1.msra.mxu0 0.0
    %3964 = vmatprep.subr.mxu0 0.0
    %3965 = vmatpush1.msra.mxu0 0.0
    %3966 = vmatprep.subr.mxu0 0.0
    %3967 = vmatpush1.msra.mxu0 0.0
    %3968 = vmatprep.subr.mxu0 0.0
    %3969 = vmatpush1.msra.mxu0 0.0
    %3970 = vmatprep.subr.mxu0 0.0
    %3971 = vmatpush1.msra.mxu0 0.0
    %3972 = vmatprep.subr.mxu0 0.0
    %3973 = vmatpush1.msra.mxu0 0.0
    %3974 = vmatprep.subr.mxu0 0.0
    %3975 = vmatpush1.msra.mxu0 0.0
    %3976 = vmatprep.subr.mxu0 0.0
    %3977 = vmatpush1.msra.mxu0 0.0
    %3978 = vmatprep.subr.mxu0 0.0
    %3979 = vmatpush1.msra.mxu0 0.0
    %3980 = vmatprep.subr.mxu0 0.0
    %3981 = vmatpush1.msra.mxu0 0.0
    %3982 = vmatprep.subr.mxu0 0.0
    %3983 = vmatpush1.msra.mxu0 0.0
    %3984 = vmatprep.subr.mxu0 0.0
    %3985 = vmatpush1.msra.mxu0 0.0
    %3986 = vmatprep.subr.mxu0 0.0
    %3987 = vmatpush1.msra.mxu0 0.0
    %3988 = vmatprep.subr.mxu0 0.0
    %3989 = vmatpush1.msra.mxu0 %v3953
    %3990 = vmatprep.subr.mxu0 0.0
    %3991 = vmatpush1.msra.mxu0 %v3952
    %3992 = vmatprep.subr.mxu0 0.0
    %3993 = vmatpush2.msra.mxu0 0.0
    %3994 = vmatprep.subr.mxu0 0.0
    %3995 = vmatpush2.msra.mxu0 0.0
    %3996 = vmatprep.subr.mxu0 0.0
    %3997 = vmatpush2.msra.mxu0 0.0
    %3998 = vmatprep.subr.mxu0 0.0
    %3999 = vmatpush2.msra.mxu0 0.0
    %4000 = vmatprep.subr.mxu0 0.0
    %4001 = vmatpush2.msra.mxu0 0.0
    %4002 = vmatprep.subr.mxu0 0.0
    %4003 = vmatpush2.msra.mxu0 0.0
    %4004 = vmatprep.subr.mxu0 0.0
    %4005 = vmatpush2.msra.mxu0 0.0
    %4006 = vmatprep.subr.mxu0 0.0
    %4007 = vmatpush2.msra.mxu0 0.0
    %4008 = vmatprep.subr.mxu0 0.0
    %4009 = vmatpush2.msra.mxu0 0.0
    %4010 = vmatprep.subr.mxu0 0.0
    %4011 = vmatpush2.msra.mxu0 0.0
    %4012 = vmatprep.subr.mxu0 0.0
    %4013 = vmatpush2.msra.mxu0 0.0
    %4014 = vmatprep.subr.mxu0 0.0
    %4015 = vmatpush2.msra.mxu0 0.0
    %4016 = vmatprep.subr.mxu0 0.0
    %4017 = vmatpush2.msra.mxu0 0.0
    %4018 = vmatprep.subr.mxu0 0.0
    %4019 = vmatpush2.msra.mxu0 0.0
    %4020 = vmatprep.subr.mxu0 0.0
    %4021 = vmatpush2.msra.mxu0 0.0
    %4022 = vmatprep.subr.mxu0 0.0
    %4023 = vmatpush2.msra.mxu0 0.0
    %4024 = vmatprep.mubr.f32.mxu0 0.0
    %4025 = vmatmul.mubr.f32.gmra.mxu0 %v3955
    %v4026 = vpop.f32.mrf.mxu0
    %v4027 = vadd.f32 0.0, %v4026
    %v4028 = vpop.f32.mrf.mxu0
    %4029 = vmatprep.mubr.f32.mxu0 0.0
    %4030 = vmatmul.mubr.f32.gmra.mxu0 %v3958
    %v4031 = vpop.f32.mrf.mxu0
    %v4032 = vadd.f32 0.0, %v4031
    %v4033 = vpop.f32.mrf.mxu0
    %4034 = vdwg.mxu0
    %v4035 = vadd.f32 %v3867, %v4027
    %v4036 = vadd.f32 %v3868, %v4032
    %v4037 = vld [vmem:[%s1535] sm:$0xff]
    %v4038 = vld [vmem:[%s1535 + $0x8] sm:$0xff]
    %v4040 = vsel %vm182, %v4037, 0
    %v4043 = vsel %vm182, %v4038, 0
    %4045 = vmatprep.subr.mxu0 0.0
    %4046 = vmatpush1.msra.mxu0 0.0
    %4047 = vmatprep.subr.mxu0 0.0
    %4048 = vmatpush1.msra.mxu0 0.0
    %4049 = vmatprep.subr.mxu0 0.0
    %4050 = vmatpush1.msra.mxu0 0.0
    %4051 = vmatprep.subr.mxu0 0.0
    %4052 = vmatpush1.msra.mxu0 0.0
    %4053 = vmatprep.subr.mxu0 0.0
    %4054 = vmatpush1.msra.mxu0 0.0
    %4055 = vmatprep.subr.mxu0 0.0
    %4056 = vmatpush1.msra.mxu0 0.0
    %4057 = vmatprep.subr.mxu0 0.0
    %4058 = vmatpush1.msra.mxu0 0.0
    %4059 = vmatprep.subr.mxu0 0.0
    %4060 = vmatpush1.msra.mxu0 0.0
    %4061 = vmatprep.subr.mxu0 0.0
    %4062 = vmatpush1.msra.mxu0 %v2674
    %4063 = vmatprep.subr.mxu0 0.0
    %4064 = vmatpush1.msra.mxu0 %v2673
    %4065 = vmatprep.subr.mxu0 0.0
    %4066 = vmatpush1.msra.mxu0 %v2672
    %4067 = vmatprep.subr.mxu0 0.0
    %4068 = vmatpush1.msra.mxu0 %v2671
    %4069 = vmatprep.subr.mxu0 0.0
    %4070 = vmatpush1.msra.mxu0 %v2670
    %4071 = vmatprep.subr.mxu0 0.0
    %4072 = vmatpush1.msra.mxu0 %v2669
    %4073 = vmatprep.subr.mxu0 0.0
    %4074 = vmatpush1.msra.mxu0 %v2668
    %4075 = vmatprep.subr.mxu0 0.0
    %4076 = vmatpush1.msra.mxu0 %v2667
    %4077 = vmatprep.subr.mxu0 0.0
    %4078 = vmatpush2.msra.mxu0 0.0
    %4079 = vmatprep.subr.mxu0 0.0
    %4080 = vmatpush2.msra.mxu0 0.0
    %4081 = vmatprep.subr.mxu0 0.0
    %4082 = vmatpush2.msra.mxu0 0.0
    %4083 = vmatprep.subr.mxu0 0.0
    %4084 = vmatpush2.msra.mxu0 0.0
    %4085 = vmatprep.subr.mxu0 0.0
    %4086 = vmatpush2.msra.mxu0 0.0
    %4087 = vmatprep.subr.mxu0 0.0
    %4088 = vmatpush2.msra.mxu0 0.0
    %4089 = vmatprep.subr.mxu0 0.0
    %4090 = vmatpush2.msra.mxu0 0.0
    %4091 = vmatprep.subr.mxu0 0.0
    %4092 = vmatpush2.msra.mxu0 0.0
    %4093 = vmatprep.subr.mxu0 0.0
    %4094 = vmatpush2.msra.mxu0 0.0
    %4095 = vmatprep.subr.mxu0 0.0
    %4096 = vmatpush2.msra.mxu0 0.0
    %4097 = vmatprep.subr.mxu0 0.0
    %4098 = vmatpush2.msra.mxu0 0.0
    %4099 = vmatprep.subr.mxu0 0.0
    %4100 = vmatpush2.msra.mxu0 0.0
    %4101 = vmatprep.subr.mxu0 0.0
    %4102 = vmatpush2.msra.mxu0 0.0
    %4103 = vmatprep.subr.mxu0 0.0
    %4104 = vmatpush2.msra.mxu0 0.0
    %4105 = vmatprep.subr.mxu0 0.0
    %4106 = vmatpush2.msra.mxu0 0.0
    %4107 = vmatprep.subr.mxu0 0.0
    %4108 = vmatpush2.msra.mxu0 0.0
    %4109 = vmatprep.mubr.f32.mxu0 0.0
    %4110 = vmatmul.mubr.f32.gmra.mxu0 %v4040
    %v4111 = vpop.f32.mrf.mxu0
    %v4112 = vadd.f32 0.0, %v4111
    %v4113 = vpop.f32.mrf.mxu0
    %4114 = vmatprep.mubr.f32.mxu0 0.0
    %4115 = vmatmul.mubr.f32.gmra.mxu0 %v4043
    %v4116 = vpop.f32.mrf.mxu0
    %v4117 = vadd.f32 0.0, %v4116
    %v4118 = vpop.f32.mrf.mxu0
    %4119 = vdwg.mxu0
    %v4120 = vld [vmem:[%s1619] sm:$0xff]
    %v4121 = vld [vmem:[%s1619 + $0x8] sm:$0xff]
    %v4123 = vsel %vm156, %v4112, 0
    %v4126 = vsel %vm156, %v4117, 0
    %4128 = vmatprep.subr.mxu0 0.0
    %4129 = vmatpush1.msra.mxu0 0.0
    %4130 = vmatprep.subr.mxu0 0.0
    %4131 = vmatpush1.msra.mxu0 0.0
    %4132 = vmatprep.subr.mxu0 0.0
    %4133 = vmatpush1.msra.mxu0 0.0
    %4134 = vmatprep.subr.mxu0 0.0
    %4135 = vmatpush1.msra.mxu0 0.0
    %4136 = vmatprep.subr.mxu0 0.0
    %4137 = vmatpush1.msra.mxu0 0.0
    %4138 = vmatprep.subr.mxu0 0.0
    %4139 = vmatpush1.msra.mxu0 0.0
    %4140 = vmatprep.subr.mxu0 0.0
    %4141 = vmatpush1.msra.mxu0 0.0
    %4142 = vmatprep.subr.mxu0 0.0
    %4143 = vmatpush1.msra.mxu0 0.0
    %4144 = vmatprep.subr.mxu0 0.0
    %4145 = vmatpush1.msra.mxu0 0.0
    %4146 = vmatprep.subr.mxu0 0.0
    %4147 = vmatpush1.msra.mxu0 0.0
    %4148 = vmatprep.subr.mxu0 0.0
    %4149 = vmatpush1.msra.mxu0 0.0
    %4150 = vmatprep.subr.mxu0 0.0
    %4151 = vmatpush1.msra.mxu0 0.0
    %4152 = vmatprep.subr.mxu0 0.0
    %4153 = vmatpush1.msra.mxu0 0.0
    %4154 = vmatprep.subr.mxu0 0.0
    %4155 = vmatpush1.msra.mxu0 0.0
    %4156 = vmatprep.subr.mxu0 0.0
    %4157 = vmatpush1.msra.mxu0 %v4121
    %4158 = vmatprep.subr.mxu0 0.0
    %4159 = vmatpush1.msra.mxu0 %v4120
    %4160 = vmatprep.subr.mxu0 0.0
    %4161 = vmatpush2.msra.mxu0 0.0
    %4162 = vmatprep.subr.mxu0 0.0
    %4163 = vmatpush2.msra.mxu0 0.0
    %4164 = vmatprep.subr.mxu0 0.0
    %4165 = vmatpush2.msra.mxu0 0.0
    %4166 = vmatprep.subr.mxu0 0.0
    %4167 = vmatpush2.msra.mxu0 0.0
    %4168 = vmatprep.subr.mxu0 0.0
    %4169 = vmatpush2.msra.mxu0 0.0
    %4170 = vmatprep.subr.mxu0 0.0
    %4171 = vmatpush2.msra.mxu0 0.0
    %4172 = vmatprep.subr.mxu0 0.0
    %4173 = vmatpush2.msra.mxu0 0.0
    %4174 = vmatprep.subr.mxu0 0.0
    %4175 = vmatpush2.msra.mxu0 0.0
    %4176 = vmatprep.subr.mxu0 0.0
    %4177 = vmatpush2.msra.mxu0 0.0
    %4178 = vmatprep.subr.mxu0 0.0
    %4179 = vmatpush2.msra.mxu0 0.0
    %4180 = vmatprep.subr.mxu0 0.0
    %4181 = vmatpush2.msra.mxu0 0.0
    %4182 = vmatprep.subr.mxu0 0.0
    %4183 = vmatpush2.msra.mxu0 0.0
    %4184 = vmatprep.subr.mxu0 0.0
    %4185 = vmatpush2.msra.mxu0 0.0
    %4186 = vmatprep.subr.mxu0 0.0
    %4187 = vmatpush2.msra.mxu0 0.0
    %4188 = vmatprep.subr.mxu0 0.0
    %4189 = vmatpush2.msra.mxu0 0.0
    %4190 = vmatprep.subr.mxu0 0.0
    %4191 = vmatpush2.msra.mxu0 0.0
    %4192 = vmatprep.mubr.f32.mxu0 0.0
    %4193 = vmatmul.mubr.f32.gmra.mxu0 %v4123
    %v4194 = vpop.f32.mrf.mxu0
    %v4195 = vadd.f32 0.0, %v4194
    %v4196 = vpop.f32.mrf.mxu0
    %4197 = vmatprep.mubr.f32.mxu0 0.0
    %4198 = vmatmul.mubr.f32.gmra.mxu0 %v4126
    %v4199 = vpop.f32.mrf.mxu0
    %v4200 = vadd.f32 0.0, %v4199
    %v4201 = vpop.f32.mrf.mxu0
    %4202 = vdwg.mxu0
    %v4203 = vadd.f32 %v4035, %v4195
    %v4204 = vadd.f32 %v4036, %v4200
    %v4205 = vld [vmem:[%s3] sm:$0x1]
    %v4207 = vlaneseq
    %v4208 = vshrl.u32 %v4207, 7
    %v4209 = vsub.s32 0, %v4208
    %v4210 = vrot.slane %v4205, %v4209
    %v4212 = vadd.f32 %v4203, %v4210
    %v4213 = vadd.f32 %v4204, %v4210
    %v4214 = vmax.f32 %v4212, 0.0
    %v4215 = vmax.f32 %v4213, 0.0
    %v4216 = vsel %vm1716, %v4214, 0.0
    %v4217 = vsel %vm1716, %v4215, 0.0
    %v4218 = vadd.f32 %v4216, %v4217
    %v4219 = vrot.slane %v4218, 4
    %v4220 = vadd.f32 %v4218, %v4219
    %v4221 = vrot.slane %v4220, 2
    %v4222 = vadd.f32 %v4220, %v4221
    %v4223 = vrot.slane %v4222, 1
    %v4224 = vadd.f32 %v4222, %v4223
    %v4225 = vmul.f32 %v4224, %v1726
    %v4226 = vld [vmem:[#allocation8] sm:$0xff]
    %v4227 = vld [vmem:[#allocation8 + $0x8] sm:$0x1]
    %v4229 = vsel %vm156, %v4226, 0
    %v4232 = vsel %vm156, %v4227, 0
    %4234 = vmatprep.subr.mxu0 0.0
    %4235 = vmatpush1.msra.mxu0 0.0
    %4236 = vmatprep.subr.mxu0 0.0
    %4237 = vmatpush1.msra.mxu0 0.0
    %4238 = vmatprep.subr.mxu0 0.0
    %4239 = vmatpush1.msra.mxu0 0.0
    %4240 = vmatprep.subr.mxu0 0.0
    %4241 = vmatpush1.msra.mxu0 0.0
    %4242 = vmatprep.subr.mxu0 0.0
    %4243 = vmatpush1.msra.mxu0 0.0
    %4244 = vmatprep.subr.mxu0 0.0
    %4245 = vmatpush1.msra.mxu0 0.0
    %4246 = vmatprep.subr.mxu0 0.0
    %4247 = vmatpush1.msra.mxu0 0.0
    %4248 = vmatprep.subr.mxu0 0.0
    %4249 = vmatpush1.msra.mxu0 0.0
    %4250 = vmatprep.subr.mxu0 0.0
    %4251 = vmatpush1.msra.mxu0 0.0
    %4252 = vmatprep.subr.mxu0 0.0
    %4253 = vmatpush1.msra.mxu0 0.0
    %4254 = vmatprep.subr.mxu0 0.0
    %4255 = vmatpush1.msra.mxu0 0.0
    %4256 = vmatprep.subr.mxu0 0.0
    %4257 = vmatpush1.msra.mxu0 0.0
    %4258 = vmatprep.subr.mxu0 0.0
    %4259 = vmatpush1.msra.mxu0 0.0
    %4260 = vmatprep.subr.mxu0 0.0
    %4261 = vmatpush1.msra.mxu0 0.0
    %4262 = vmatprep.subr.mxu0 0.0
    %4263 = vmatpush1.msra.mxu0 %v4215
    %4264 = vmatprep.subr.mxu0 0.0
    %4265 = vmatpush1.msra.mxu0 %v4214
    %4266 = vmatprep.subr.mxu0 0.0
    %4267 = vmatpush2.msra.mxu0 0.0
    %4268 = vmatprep.subr.mxu0 0.0
    %4269 = vmatpush2.msra.mxu0 0.0
    %4270 = vmatprep.subr.mxu0 0.0
    %4271 = vmatpush2.msra.mxu0 0.0
    %4272 = vmatprep.subr.mxu0 0.0
    %4273 = vmatpush2.msra.mxu0 0.0
    %4274 = vmatprep.subr.mxu0 0.0
    %4275 = vmatpush2.msra.mxu0 0.0
    %4276 = vmatprep.subr.mxu0 0.0
    %4277 = vmatpush2.msra.mxu0 0.0
    %4278 = vmatprep.subr.mxu0 0.0
    %4279 = vmatpush2.msra.mxu0 0.0
    %4280 = vmatprep.subr.mxu0 0.0
    %4281 = vmatpush2.msra.mxu0 0.0
    %4282 = vmatprep.subr.mxu0 0.0
    %4283 = vmatpush2.msra.mxu0 0.0
    %4284 = vmatprep.subr.mxu0 0.0
    %4285 = vmatpush2.msra.mxu0 0.0
    %4286 = vmatprep.subr.mxu0 0.0
    %4287 = vmatpush2.msra.mxu0 0.0
    %4288 = vmatprep.subr.mxu0 0.0
    %4289 = vmatpush2.msra.mxu0 0.0
    %4290 = vmatprep.subr.mxu0 0.0
    %4291 = vmatpush2.msra.mxu0 0.0
    %4292 = vmatprep.subr.mxu0 0.0
    %4293 = vmatpush2.msra.mxu0 0.0
    %4294 = vmatprep.subr.mxu0 0.0
    %4295 = vmatpush2.msra.mxu0 0.0
    %4296 = vmatprep.subr.mxu0 0.0
    %4297 = vmatpush2.msra.mxu0 0.0
    %4298 = vmatprep.mubr.f32.mxu0 0.0
    %4299 = vmatmul.mubr.f32.gmra.mxu0 %v4229
    %v4300 = vpop.f32.mrf.mxu0
    %v4301 = vadd.f32 0.0, %v4300
    %v4302 = vpop.f32.mrf.mxu0
    %4303 = vmatprep.mubr.f32.mxu0 0.0
    %4304 = vmatmul.mubr.f32.gmra.mxu0 %v4232
    %v4305 = vpop.f32.mrf.mxu0
    %v4306 = vadd.f32 0.0, %v4305
    %v4307 = vpop.f32.mrf.mxu0
    %4308 = vdwg.mxu0
    %v4309 = vld [vmem:[#allocation10] sm:$0xff]
    %v4310 = vld [vmem:[#allocation10 + $0x8] sm:$0xff]
    %v4311 = vld [vmem:[#allocation10 + $0x10] sm:$0xff]
    %v4312 = vld [vmem:[#allocation10 + $0x18] sm:$0xff]
    %v4313 = vld [vmem:[%s1815] sm:$0xff]
    %v4314 = vld [vmem:[%s1815 + $0x8] sm:$0x1]
    %v4316 = vsel %vm156, %v4313, 0
    %v4319 = vsel %vm156, %v4314, 0
    %4321 = vmatprep.subr.mxu0 0.0
    %4322 = vmatpush1.msra.mxu0 0.0
    %4323 = vmatprep.subr.mxu0 0.0
    %4324 = vmatpush1.msra.mxu0 0.0
    %4325 = vmatprep.subr.mxu0 0.0
    %4326 = vmatpush1.msra.mxu0 0.0
    %4327 = vmatprep.subr.mxu0 0.0
    %4328 = vmatpush1.msra.mxu0 0.0
    %4329 = vmatprep.subr.mxu0 0.0
    %4330 = vmatpush1.msra.mxu0 0.0
    %4331 = vmatprep.subr.mxu0 0.0
    %4332 = vmatpush1.msra.mxu0 0.0
    %4333 = vmatprep.subr.mxu0 0.0
    %4334 = vmatpush1.msra.mxu0 0.0
    %4335 = vmatprep.subr.mxu0 0.0
    %4336 = vmatpush1.msra.mxu0 0.0
    %4337 = vmatprep.subr.mxu0 0.0
    %4338 = vmatpush1.msra.mxu0 0.0
    %4339 = vmatprep.subr.mxu0 0.0
    %4340 = vmatpush1.msra.mxu0 0.0
    %4341 = vmatprep.subr.mxu0 0.0
    %4342 = vmatpush1.msra.mxu0 0.0
    %4343 = vmatprep.subr.mxu0 0.0
    %4344 = vmatpush1.msra.mxu0 0.0
    %4345 = vmatprep.subr.mxu0 0.0
    %4346 = vmatpush1.msra.mxu0 0.0
    %4347 = vmatprep.subr.mxu0 0.0
    %4348 = vmatpush1.msra.mxu0 0.0
    %4349 = vmatprep.subr.mxu0 0.0
    %4350 = vmatpush1.msra.mxu0 %v4215
    %4351 = vmatprep.subr.mxu0 0.0
    %4352 = vmatpush1.msra.mxu0 %v4214
    %4353 = vmatprep.subr.mxu0 0.0
    %4354 = vmatpush2.msra.mxu0 0.0
    %4355 = vmatprep.subr.mxu0 0.0
    %4356 = vmatpush2.msra.mxu0 0.0
    %4357 = vmatprep.subr.mxu0 0.0
    %4358 = vmatpush2.msra.mxu0 0.0
    %4359 = vmatprep.subr.mxu0 0.0
    %4360 = vmatpush2.msra.mxu0 0.0
    %4361 = vmatprep.subr.mxu0 0.0
    %4362 = vmatpush2.msra.mxu0 0.0
    %4363 = vmatprep.subr.mxu0 0.0
    %4364 = vmatpush2.msra.mxu0 0.0
    %4365 = vmatprep.subr.mxu0 0.0
    %4366 = vmatpush2.msra.mxu0 0.0
    %4367 = vmatprep.subr.mxu0 0.0
    %4368 = vmatpush2.msra.mxu0 0.0
    %4369 = vmatprep.subr.mxu0 0.0
    %4370 = vmatpush2.msra.mxu0 0.0
    %4371 = vmatprep.subr.mxu0 0.0
    %4372 = vmatpush2.msra.mxu0 0.0
    %4373 = vmatprep.subr.mxu0 0.0
    %4374 = vmatpush2.msra.mxu0 0.0
    %4375 = vmatprep.subr.mxu0 0.0
    %4376 = vmatpush2.msra.mxu0 0.0
    %4377 = vmatprep.subr.mxu0 0.0
    %4378 = vmatpush2.msra.mxu0 0.0
    %4379 = vmatprep.subr.mxu0 0.0
    %4380 = vmatpush2.msra.mxu0 0.0
    %4381 = vmatprep.subr.mxu0 0.0
    %4382 = vmatpush2.msra.mxu0 0.0
    %4383 = vmatprep.subr.mxu0 0.0
    %4384 = vmatpush2.msra.mxu0 0.0
    %4385 = vmatprep.mubr.f32.mxu0 0.0
    %4386 = vmatmul.mubr.f32.gmra.mxu0 %v4316
    %v4387 = vpop.f32.mrf.mxu0
    %v4388 = vadd.f32 0.0, %v4387
    %v4389 = vpop.f32.mrf.mxu0
    %4390 = vmatprep.mubr.f32.mxu0 0.0
    %4391 = vmatmul.mubr.f32.gmra.mxu0 %v4319
    %v4392 = vpop.f32.mrf.mxu0
    %v4393 = vadd.f32 0.0, %v4392
    %v4394 = vpop.f32.mrf.mxu0
    %4395 = vdwg.mxu0
    %v4396 = vld [vmem:[%s1899] sm:$0xff]
    %v4397 = vld [vmem:[%s1899 + $0x8] sm:$0xff]
    %v4398 = vld [vmem:[%s1899 + $0x10] sm:$0xff]
    %v4399 = vld [vmem:[%s1899 + $0x18] sm:$0xff]
    %v4401 = vsel %vm1716, %v4388, 0
    %v4404 = vsel %vm1716, %v4393, 0
    %4406 = vmatprep.subr.mxu0 0.0
    %4407 = vmatpush1.msra.mxu0 0.0
    %4408 = vmatprep.subr.mxu0 0.0
    %4409 = vmatpush1.msra.mxu0 0.0
    %4410 = vmatprep.subr.mxu0 0.0
    %4411 = vmatpush1.msra.mxu0 0.0
    %4412 = vmatprep.subr.mxu0 0.0
    %4413 = vmatpush1.msra.mxu0 0.0
    %4414 = vmatprep.subr.mxu0 0.0
    %4415 = vmatpush1.msra.mxu0 0.0
    %4416 = vmatprep.subr.mxu0 0.0
    %4417 = vmatpush1.msra.mxu0 0.0
    %4418 = vmatprep.subr.mxu0 0.0
    %4419 = vmatpush1.msra.mxu0 0.0
    %4420 = vmatprep.subr.mxu0 0.0
    %4421 = vmatpush1.msra.mxu0 0.0
    %4422 = vmatprep.subr.mxu0 0.0
    %4423 = vmatpush1.msra.mxu0 0.0
    %4424 = vmatprep.subr.mxu0 0.0
    %4425 = vmatpush1.msra.mxu0 0.0
    %4426 = vmatprep.subr.mxu0 0.0
    %4427 = vmatpush1.msra.mxu0 0.0
    %4428 = vmatprep.subr.mxu0 0.0
    %4429 = vmatpush1.msra.mxu0 0.0
    %4430 = vmatprep.subr.mxu0 0.0
    %4431 = vmatpush1.msra.mxu0 %v4399
    %4432 = vmatprep.subr.mxu0 0.0
    %4433 = vmatpush1.msra.mxu0 %v4398
    %4434 = vmatprep.subr.mxu0 0.0
    %4435 = vmatpush1.msra.mxu0 %v4397
    %4436 = vmatprep.subr.mxu0 0.0
    %4437 = vmatpush1.msra.mxu0 %v4396
    %4438 = vmatprep.subr.mxu0 0.0
    %4439 = vmatpush2.msra.mxu0 0.0
    %4440 = vmatprep.subr.mxu0 0.0
    %4441 = vmatpush2.msra.mxu0 0.0
    %4442 = vmatprep.subr.mxu0 0.0
    %4443 = vmatpush2.msra.mxu0 0.0
    %4444 = vmatprep.subr.mxu0 0.0
    %4445 = vmatpush2.msra.mxu0 0.0
    %4446 = vmatprep.subr.mxu0 0.0
    %4447 = vmatpush2.msra.mxu0 0.0
    %4448 = vmatprep.subr.mxu0 0.0
    %4449 = vmatpush2.msra.mxu0 0.0
    %4450 = vmatprep.subr.mxu0 0.0
    %4451 = vmatpush2.msra.mxu0 0.0
    %4452 = vmatprep.subr.mxu0 0.0
    %4453 = vmatpush2.msra.mxu0 0.0
    %4454 = vmatprep.subr.mxu0 0.0
    %4455 = vmatpush2.msra.mxu0 0.0
    %4456 = vmatprep.subr.mxu0 0.0
    %4457 = vmatpush2.msra.mxu0 0.0
    %4458 = vmatprep.subr.mxu0 0.0
    %4459 = vmatpush2.msra.mxu0 0.0
    %4460 = vmatprep.subr.mxu0 0.0
    %4461 = vmatpush2.msra.mxu0 0.0
    %4462 = vmatprep.subr.mxu0 0.0
    %4463 = vmatpush2.msra.mxu0 0.0
    %4464 = vmatprep.subr.mxu0 0.0
    %4465 = vmatpush2.msra.mxu0 0.0
    %4466 = vmatprep.subr.mxu0 0.0
    %4467 = vmatpush2.msra.mxu0 0.0
    %4468 = vmatprep.subr.mxu0 0.0
    %4469 = vmatpush2.msra.mxu0 0.0
    %4470 = vmatprep.mubr.f32.mxu0 0.0
    %4471 = vmatmul.mubr.f32.gmra.mxu0 %v4401
    %v4472 = vpop.f32.mrf.mxu0
    %v4473 = vadd.f32 0.0, %v4472
    %v4474 = vpop.f32.mrf.mxu0
    %4475 = vmatprep.mubr.f32.mxu0 0.0
    %4476 = vmatmul.mubr.f32.gmra.mxu0 %v4404
    %v4477 = vpop.f32.mrf.mxu0
    %v4478 = vadd.f32 0.0, %v4477
    %v4479 = vpop.f32.mrf.mxu0
    %4480 = vdwg.mxu0
    %v4482 = vsel %vm1716, %v4301, 0
    %v4485 = vsel %vm1716, %v4306, 0
    %4487 = vmatprep.subr.mxu0 0.0
    %4488 = vmatpush1.msra.mxu0 0.0
    %4489 = vmatprep.subr.mxu0 0.0
    %4490 = vmatpush1.msra.mxu0 0.0
    %4491 = vmatprep.subr.mxu0 0.0
    %4492 = vmatpush1.msra.mxu0 0.0
    %4493 = vmatprep.subr.mxu0 0.0
    %4494 = vmatpush1.msra.mxu0 0.0
    %4495 = vmatprep.subr.mxu0 0.0
    %4496 = vmatpush1.msra.mxu0 0.0
    %4497 = vmatprep.subr.mxu0 0.0
    %4498 = vmatpush1.msra.mxu0 0.0
    %4499 = vmatprep.subr.mxu0 0.0
    %4500 = vmatpush1.msra.mxu0 0.0
    %4501 = vmatprep.subr.mxu0 0.0
    %4502 = vmatpush1.msra.mxu0 0.0
    %4503 = vmatprep.subr.mxu0 0.0
    %4504 = vmatpush1.msra.mxu0 0.0
    %4505 = vmatprep.subr.mxu0 0.0
    %4506 = vmatpush1.msra.mxu0 0.0
    %4507 = vmatprep.subr.mxu0 0.0
    %4508 = vmatpush1.msra.mxu0 0.0
    %4509 = vmatprep.subr.mxu0 0.0
    %4510 = vmatpush1.msra.mxu0 0.0
    %4511 = vmatprep.subr.mxu0 0.0
    %4512 = vmatpush1.msra.mxu0 %v4312
    %4513 = vmatprep.subr.mxu0 0.0
    %4514 = vmatpush1.msra.mxu0 %v4311
    %4515 = vmatprep.subr.mxu0 0.0
    %4516 = vmatpush1.msra.mxu0 %v4310
    %4517 = vmatprep.subr.mxu0 0.0
    %4518 = vmatpush1.msra.mxu0 %v4309
    %4519 = vmatprep.subr.mxu0 0.0
    %4520 = vmatpush2.msra.mxu0 0.0
    %4521 = vmatprep.subr.mxu0 0.0
    %4522 = vmatpush2.msra.mxu0 0.0
    %4523 = vmatprep.subr.mxu0 0.0
    %4524 = vmatpush2.msra.mxu0 0.0
    %4525 = vmatprep.subr.mxu0 0.0
    %4526 = vmatpush2.msra.mxu0 0.0
    %4527 = vmatprep.subr.mxu0 0.0
    %4528 = vmatpush2.msra.mxu0 0.0
    %4529 = vmatprep.subr.mxu0 0.0
    %4530 = vmatpush2.msra.mxu0 0.0
    %4531 = vmatprep.subr.mxu0 0.0
    %4532 = vmatpush2.msra.mxu0 0.0
    %4533 = vmatprep.subr.mxu0 0.0
    %4534 = vmatpush2.msra.mxu0 0.0
    %4535 = vmatprep.subr.mxu0 0.0
    %4536 = vmatpush2.msra.mxu0 0.0
    %4537 = vmatprep.subr.mxu0 0.0
    %4538 = vmatpush2.msra.mxu0 0.0
    %4539 = vmatprep.subr.mxu0 0.0
    %4540 = vmatpush2.msra.mxu0 0.0
    %4541 = vmatprep.subr.mxu0 0.0
    %4542 = vmatpush2.msra.mxu0 0.0
    %4543 = vmatprep.subr.mxu0 0.0
    %4544 = vmatpush2.msra.mxu0 0.0
    %4545 = vmatprep.subr.mxu0 0.0
    %4546 = vmatpush2.msra.mxu0 0.0
    %4547 = vmatprep.subr.mxu0 0.0
    %4548 = vmatpush2.msra.mxu0 0.0
    %4549 = vmatprep.subr.mxu0 0.0
    %4550 = vmatpush2.msra.mxu0 0.0
    %4551 = vmatprep.mubr.f32.mxu0 0.0
    %4552 = vmatmul.mubr.f32.gmra.mxu0 %v4482
    %v4553 = vpop.f32.mrf.mxu0
    %v4554 = vadd.f32 %v4473, %v4553
    %v4555 = vpop.f32.mrf.mxu0
    %4556 = vmatprep.mubr.f32.mxu0 0.0
    %4557 = vmatmul.mubr.f32.gmra.mxu0 %v4485
    %v4558 = vpop.f32.mrf.mxu0
    %v4559 = vadd.f32 %v4478, %v4558
    %v4560 = vpop.f32.mrf.mxu0
    %4561 = vdwg.mxu0
    %v4562 = vld [vmem:[%s2066] sm:$0xff]
    %v4563 = vld [vmem:[%s2066 + $0x8] sm:$0x1]
    %v4565 = vsel %vm156, %v4562, 0
    %v4568 = vsel %vm156, %v4563, 0
    %4570 = vmatprep.subr.mxu0 0.0
    %4571 = vmatpush1.msra.mxu0 0.0
    %4572 = vmatprep.subr.mxu0 0.0
    %4573 = vmatpush1.msra.mxu0 0.0
    %4574 = vmatprep.subr.mxu0 0.0
    %4575 = vmatpush1.msra.mxu0 0.0
    %4576 = vmatprep.subr.mxu0 0.0
    %4577 = vmatpush1.msra.mxu0 0.0
    %4578 = vmatprep.subr.mxu0 0.0
    %4579 = vmatpush1.msra.mxu0 0.0
    %4580 = vmatprep.subr.mxu0 0.0
    %4581 = vmatpush1.msra.mxu0 0.0
    %4582 = vmatprep.subr.mxu0 0.0
    %4583 = vmatpush1.msra.mxu0 0.0
    %4584 = vmatprep.subr.mxu0 0.0
    %4585 = vmatpush1.msra.mxu0 0.0
    %4586 = vmatprep.subr.mxu0 0.0
    %4587 = vmatpush1.msra.mxu0 0.0
    %4588 = vmatprep.subr.mxu0 0.0
    %4589 = vmatpush1.msra.mxu0 0.0
    %4590 = vmatprep.subr.mxu0 0.0
    %4591 = vmatpush1.msra.mxu0 0.0
    %4592 = vmatprep.subr.mxu0 0.0
    %4593 = vmatpush1.msra.mxu0 0.0
    %4594 = vmatprep.subr.mxu0 0.0
    %4595 = vmatpush1.msra.mxu0 0.0
    %4596 = vmatprep.subr.mxu0 0.0
    %4597 = vmatpush1.msra.mxu0 0.0
    %4598 = vmatprep.subr.mxu0 0.0
    %4599 = vmatpush1.msra.mxu0 %v4215
    %4600 = vmatprep.subr.mxu0 0.0
    %4601 = vmatpush1.msra.mxu0 %v4214
    %4602 = vmatprep.subr.mxu0 0.0
    %4603 = vmatpush2.msra.mxu0 0.0
    %4604 = vmatprep.subr.mxu0 0.0
    %4605 = vmatpush2.msra.mxu0 0.0
    %4606 = vmatprep.subr.mxu0 0.0
    %4607 = vmatpush2.msra.mxu0 0.0
    %4608 = vmatprep.subr.mxu0 0.0
    %4609 = vmatpush2.msra.mxu0 0.0
    %4610 = vmatprep.subr.mxu0 0.0
    %4611 = vmatpush2.msra.mxu0 0.0
    %4612 = vmatprep.subr.mxu0 0.0
    %4613 = vmatpush2.msra.mxu0 0.0
    %4614 = vmatprep.subr.mxu0 0.0
    %4615 = vmatpush2.msra.mxu0 0.0
    %4616 = vmatprep.subr.mxu0 0.0
    %4617 = vmatpush2.msra.mxu0 0.0
    %4618 = vmatprep.subr.mxu0 0.0
    %4619 = vmatpush2.msra.mxu0 0.0
    %4620 = vmatprep.subr.mxu0 0.0
    %4621 = vmatpush2.msra.mxu0 0.0
    %4622 = vmatprep.subr.mxu0 0.0
    %4623 = vmatpush2.msra.mxu0 0.0
    %4624 = vmatprep.subr.mxu0 0.0
    %4625 = vmatpush2.msra.mxu0 0.0
    %4626 = vmatprep.subr.mxu0 0.0
    %4627 = vmatpush2.msra.mxu0 0.0
    %4628 = vmatprep.subr.mxu0 0.0
    %4629 = vmatpush2.msra.mxu0 0.0
    %4630 = vmatprep.subr.mxu0 0.0
    %4631 = vmatpush2.msra.mxu0 0.0
    %4632 = vmatprep.subr.mxu0 0.0
    %4633 = vmatpush2.msra.mxu0 0.0
    %4634 = vmatprep.mubr.f32.mxu0 0.0
    %4635 = vmatmul.mubr.f32.gmra.mxu0 %v4565
    %v4636 = vpop.f32.mrf.mxu0
    %v4637 = vadd.f32 0.0, %v4636
    %v4638 = vpop.f32.mrf.mxu0
    %4639 = vmatprep.mubr.f32.mxu0 0.0
    %4640 = vmatmul.mubr.f32.gmra.mxu0 %v4568
    %v4641 = vpop.f32.mrf.mxu0
    %v4642 = vadd.f32 0.0, %v4641
    %v4643 = vpop.f32.mrf.mxu0
    %4644 = vdwg.mxu0
    %v4645 = vld [vmem:[%s2150] sm:$0xff]
    %v4646 = vld [vmem:[%s2150 + $0x8] sm:$0xff]
    %v4647 = vld [vmem:[%s2150 + $0x10] sm:$0xff]
    %v4648 = vld [vmem:[%s2150 + $0x18] sm:$0xff]
    %v4650 = vsel %vm1716, %v4637, 0
    %v4653 = vsel %vm1716, %v4642, 0
    %4655 = vmatprep.subr.mxu0 0.0
    %4656 = vmatpush1.msra.mxu0 0.0
    %4657 = vmatprep.subr.mxu0 0.0
    %4658 = vmatpush1.msra.mxu0 0.0
    %4659 = vmatprep.subr.mxu0 0.0
    %4660 = vmatpush1.msra.mxu0 0.0
    %4661 = vmatprep.subr.mxu0 0.0
    %4662 = vmatpush1.msra.mxu0 0.0
    %4663 = vmatprep.subr.mxu0 0.0
    %4664 = vmatpush1.msra.mxu0 0.0
    %4665 = vmatprep.subr.mxu0 0.0
    %4666 = vmatpush1.msra.mxu0 0.0
    %4667 = vmatprep.subr.mxu0 0.0
    %4668 = vmatpush1.msra.mxu0 0.0
    %4669 = vmatprep.subr.mxu0 0.0
    %4670 = vmatpush1.msra.mxu0 0.0
    %4671 = vmatprep.subr.mxu0 0.0
    %4672 = vmatpush1.msra.mxu0 0.0
    %4673 = vmatprep.subr.mxu0 0.0
    %4674 = vmatpush1.msra.mxu0 0.0
    %4675 = vmatprep.subr.mxu0 0.0
    %4676 = vmatpush1.msra.mxu0 0.0
    %4677 = vmatprep.subr.mxu0 0.0
    %4678 = vmatpush1.msra.mxu0 0.0
    %4679 = vmatprep.subr.mxu0 0.0
    %4680 = vmatpush1.msra.mxu0 %v4648
    %4681 = vmatprep.subr.mxu0 0.0
    %4682 = vmatpush1.msra.mxu0 %v4647
    %4683 = vmatprep.subr.mxu0 0.0
    %4684 = vmatpush1.msra.mxu0 %v4646
    %4685 = vmatprep.subr.mxu0 0.0
    %4686 = vmatpush1.msra.mxu0 %v4645
    %4687 = vmatprep.subr.mxu0 0.0
    %4688 = vmatpush2.msra.mxu0 0.0
    %4689 = vmatprep.subr.mxu0 0.0
    %4690 = vmatpush2.msra.mxu0 0.0
    %4691 = vmatprep.subr.mxu0 0.0
    %4692 = vmatpush2.msra.mxu0 0.0
    %4693 = vmatprep.subr.mxu0 0.0
    %4694 = vmatpush2.msra.mxu0 0.0
    %4695 = vmatprep.subr.mxu0 0.0
    %4696 = vmatpush2.msra.mxu0 0.0
    %4697 = vmatprep.subr.mxu0 0.0
    %4698 = vmatpush2.msra.mxu0 0.0
    %4699 = vmatprep.subr.mxu0 0.0
    %4700 = vmatpush2.msra.mxu0 0.0
    %4701 = vmatprep.subr.mxu0 0.0
    %4702 = vmatpush2.msra.mxu0 0.0
    %4703 = vmatprep.subr.mxu0 0.0
    %4704 = vmatpush2.msra.mxu0 0.0
    %4705 = vmatprep.subr.mxu0 0.0
    %4706 = vmatpush2.msra.mxu0 0.0
    %4707 = vmatprep.subr.mxu0 0.0
    %4708 = vmatpush2.msra.mxu0 0.0
    %4709 = vmatprep.subr.mxu0 0.0
    %4710 = vmatpush2.msra.mxu0 0.0
    %4711 = vmatprep.subr.mxu0 0.0
    %4712 = vmatpush2.msra.mxu0 0.0
    %4713 = vmatprep.subr.mxu0 0.0
    %4714 = vmatpush2.msra.mxu0 0.0
    %4715 = vmatprep.subr.mxu0 0.0
    %4716 = vmatpush2.msra.mxu0 0.0
    %4717 = vmatprep.subr.mxu0 0.0
    %4718 = vmatpush2.msra.mxu0 0.0
    %4719 = vmatprep.mubr.f32.mxu0 0.0
    %4720 = vmatmul.mubr.f32.gmra.mxu0 %v4650
    %v4721 = vpop.f32.mrf.mxu0
    %v4722 = vadd.f32 0.0, %v4721
    %v4723 = vpop.f32.mrf.mxu0
    %4724 = vmatprep.mubr.f32.mxu0 0.0
    %4725 = vmatmul.mubr.f32.gmra.mxu0 %v4653
    %v4726 = vpop.f32.mrf.mxu0
    %v4727 = vadd.f32 0.0, %v4726
    %v4728 = vpop.f32.mrf.mxu0
    %4729 = vdwg.mxu0
    %v4730 = vadd.f32 %v4554, %v4722
    %v4731 = vadd.f32 %v4559, %v4727
    %v4732 = vld [vmem:[%s2238] sm:$0xff]
    %v4733 = vld [vmem:[%s2238 + $0x8] sm:$0x1]
    %v4735 = vsel %vm156, %v4732, 0
    %v4738 = vsel %vm156, %v4733, 0
    %4740 = vmatprep.subr.mxu0 0.0
    %4741 = vmatpush1.msra.mxu0 0.0
    %4742 = vmatprep.subr.mxu0 0.0
    %4743 = vmatpush1.msra.mxu0 0.0
    %4744 = vmatprep.subr.mxu0 0.0
    %4745 = vmatpush1.msra.mxu0 0.0
    %4746 = vmatprep.subr.mxu0 0.0
    %4747 = vmatpush1.msra.mxu0 0.0
    %4748 = vmatprep.subr.mxu0 0.0
    %4749 = vmatpush1.msra.mxu0 0.0
    %4750 = vmatprep.subr.mxu0 0.0
    %4751 = vmatpush1.msra.mxu0 0.0
    %4752 = vmatprep.subr.mxu0 0.0
    %4753 = vmatpush1.msra.mxu0 0.0
    %4754 = vmatprep.subr.mxu0 0.0
    %4755 = vmatpush1.msra.mxu0 0.0
    %4756 = vmatprep.subr.mxu0 0.0
    %4757 = vmatpush1.msra.mxu0 0.0
    %4758 = vmatprep.subr.mxu0 0.0
    %4759 = vmatpush1.msra.mxu0 0.0
    %4760 = vmatprep.subr.mxu0 0.0
    %4761 = vmatpush1.msra.mxu0 0.0
    %4762 = vmatprep.subr.mxu0 0.0
    %4763 = vmatpush1.msra.mxu0 0.0
    %4764 = vmatprep.subr.mxu0 0.0
    %4765 = vmatpush1.msra.mxu0 0.0
    %4766 = vmatprep.subr.mxu0 0.0
    %4767 = vmatpush1.msra.mxu0 0.0
    %4768 = vmatprep.subr.mxu0 0.0
    %4769 = vmatpush1.msra.mxu0 %v4215
    %4770 = vmatprep.subr.mxu0 0.0
    %4771 = vmatpush1.msra.mxu0 %v4214
    %4772 = vmatprep.subr.mxu0 0.0
    %4773 = vmatpush2.msra.mxu0 0.0
    %4774 = vmatprep.subr.mxu0 0.0
    %4775 = vmatpush2.msra.mxu0 0.0
    %4776 = vmatprep.subr.mxu0 0.0
    %4777 = vmatpush2.msra.mxu0 0.0
    %4778 = vmatprep.subr.mxu0 0.0
    %4779 = vmatpush2.msra.mxu0 0.0
    %4780 = vmatprep.subr.mxu0 0.0
    %4781 = vmatpush2.msra.mxu0 0.0
    %4782 = vmatprep.subr.mxu0 0.0
    %4783 = vmatpush2.msra.mxu0 0.0
    %4784 = vmatprep.subr.mxu0 0.0
    %4785 = vmatpush2.msra.mxu0 0.0
    %4786 = vmatprep.subr.mxu0 0.0
    %4787 = vmatpush2.msra.mxu0 0.0
    %4788 = vmatprep.subr.mxu0 0.0
    %4789 = vmatpush2.msra.mxu0 0.0
    %4790 = vmatprep.subr.mxu0 0.0
    %4791 = vmatpush2.msra.mxu0 0.0
    %4792 = vmatprep.subr.mxu0 0.0
    %4793 = vmatpush2.msra.mxu0 0.0
    %4794 = vmatprep.subr.mxu0 0.0
    %4795 = vmatpush2.msra.mxu0 0.0
    %4796 = vmatprep.subr.mxu0 0.0
    %4797 = vmatpush2.msra.mxu0 0.0
    %4798 = vmatprep.subr.mxu0 0.0
    %4799 = vmatpush2.msra.mxu0 0.0
    %4800 = vmatprep.subr.mxu0 0.0
    %4801 = vmatpush2.msra.mxu0 0.0
    %4802 = vmatprep.subr.mxu0 0.0
    %4803 = vmatpush2.msra.mxu0 0.0
    %4804 = vmatprep.mubr.f32.mxu0 0.0
    %4805 = vmatmul.mubr.f32.gmra.mxu0 %v4735
    %v4806 = vpop.f32.mrf.mxu0
    %v4807 = vadd.f32 0.0, %v4806
    %v4808 = vpop.f32.mrf.mxu0
    %4809 = vmatprep.mubr.f32.mxu0 0.0
    %4810 = vmatmul.mubr.f32.gmra.mxu0 %v4738
    %v4811 = vpop.f32.mrf.mxu0
    %v4812 = vadd.f32 0.0, %v4811
    %v4813 = vpop.f32.mrf.mxu0
    %4814 = vdwg.mxu0
    %v4815 = vld [vmem:[%s2322] sm:$0xff]
    %v4816 = vld [vmem:[%s2322 + $0x8] sm:$0xff]
    %v4817 = vld [vmem:[%s2322 + $0x10] sm:$0xff]
    %v4818 = vld [vmem:[%s2322 + $0x18] sm:$0xff]
    %v4820 = vsel %vm1716, %v4807, 0
    %v4823 = vsel %vm1716, %v4812, 0
    %4825 = vmatprep.subr.mxu0 0.0
    %4826 = vmatpush1.msra.mxu0 0.0
    %4827 = vmatprep.subr.mxu0 0.0
    %4828 = vmatpush1.msra.mxu0 0.0
    %4829 = vmatprep.subr.mxu0 0.0
    %4830 = vmatpush1.msra.mxu0 0.0
    %4831 = vmatprep.subr.mxu0 0.0
    %4832 = vmatpush1.msra.mxu0 0.0
    %4833 = vmatprep.subr.mxu0 0.0
    %4834 = vmatpush1.msra.mxu0 0.0
    %4835 = vmatprep.subr.mxu0 0.0
    %4836 = vmatpush1.msra.mxu0 0.0
    %4837 = vmatprep.subr.mxu0 0.0
    %4838 = vmatpush1.msra.mxu0 0.0
    %4839 = vmatprep.subr.mxu0 0.0
    %4840 = vmatpush1.msra.mxu0 0.0
    %4841 = vmatprep.subr.mxu0 0.0
    %4842 = vmatpush1.msra.mxu0 0.0
    %4843 = vmatprep.subr.mxu0 0.0
    %4844 = vmatpush1.msra.mxu0 0.0
    %4845 = vmatprep.subr.mxu0 0.0
    %4846 = vmatpush1.msra.mxu0 0.0
    %4847 = vmatprep.subr.mxu0 0.0
    %4848 = vmatpush1.msra.mxu0 0.0
    %4849 = vmatprep.subr.mxu0 0.0
    %4850 = vmatpush1.msra.mxu0 %v4818
    %4851 = vmatprep.subr.mxu0 0.0
    %4852 = vmatpush1.msra.mxu0 %v4817
    %4853 = vmatprep.subr.mxu0 0.0
    %4854 = vmatpush1.msra.mxu0 %v4816
    %4855 = vmatprep.subr.mxu0 0.0
    %4856 = vmatpush1.msra.mxu0 %v4815
    %4857 = vmatprep.subr.mxu0 0.0
    %4858 = vmatpush2.msra.mxu0 0.0
    %4859 = vmatprep.subr.mxu0 0.0
    %4860 = vmatpush2.msra.mxu0 0.0
    %4861 = vmatprep.subr.mxu0 0.0
    %4862 = vmatpush2.msra.mxu0 0.0
    %4863 = vmatprep.subr.mxu0 0.0
    %4864 = vmatpush2.msra.mxu0 0.0
    %4865 = vmatprep.subr.mxu0 0.0
    %4866 = vmatpush2.msra.mxu0 0.0
    %4867 = vmatprep.subr.mxu0 0.0
    %4868 = vmatpush2.msra.mxu0 0.0
    %4869 = vmatprep.subr.mxu0 0.0
    %4870 = vmatpush2.msra.mxu0 0.0
    %4871 = vmatprep.subr.mxu0 0.0
    %4872 = vmatpush2.msra.mxu0 0.0
    %4873 = vmatprep.subr.mxu0 0.0
    %4874 = vmatpush2.msra.mxu0 0.0
    %4875 = vmatprep.subr.mxu0 0.0
    %4876 = vmatpush2.msra.mxu0 0.0
    %4877 = vmatprep.subr.mxu0 0.0
    %4878 = vmatpush2.msra.mxu0 0.0
    %4879 = vmatprep.subr.mxu0 0.0
    %4880 = vmatpush2.msra.mxu0 0.0
    %4881 = vmatprep.subr.mxu0 0.0
    %4882 = vmatpush2.msra.mxu0 0.0
    %4883 = vmatprep.subr.mxu0 0.0
    %4884 = vmatpush2.msra.mxu0 0.0
    %4885 = vmatprep.subr.mxu0 0.0
    %4886 = vmatpush2.msra.mxu0 0.0
    %4887 = vmatprep.subr.mxu0 0.0
    %4888 = vmatpush2.msra.mxu0 0.0
    %4889 = vmatprep.mubr.f32.mxu0 0.0
    %4890 = vmatmul.mubr.f32.gmra.mxu0 %v4820
    %v4891 = vpop.f32.mrf.mxu0
    %v4892 = vadd.f32 0.0, %v4891
    %v4893 = vpop.f32.mrf.mxu0
    %4894 = vmatprep.mubr.f32.mxu0 0.0
    %4895 = vmatmul.mubr.f32.gmra.mxu0 %v4823
    %v4896 = vpop.f32.mrf.mxu0
    %v4897 = vadd.f32 0.0, %v4896
    %v4898 = vpop.f32.mrf.mxu0
    %4899 = vdwg.mxu0
    %v4900 = vadd.f32 %v4730, %v4892
    %v4901 = vadd.f32 %v4731, %v4897
    %v4902 = vld [vmem:[%s6] sm:$0x1]
    %v4904 = vlaneseq
    %v4905 = vshrl.u32 %v4904, 7
    %v4906 = vsub.s32 0, %v4905
    %v4907 = vrot.slane %v4902, %v4906
    %v4909 = vadd.f32 %v4900, %v4907
    %v4910 = vadd.f32 %v4901, %v4907
    %v4911 = vmax.f32 %v4909, 0.0
    %v4912 = vmax.f32 %v4910, 0.0
    %v4913 = vsel %vm1716, %v4911, 0.0
    %v4914 = vsel %vm2422, %v4912, 0.0
    %v4915 = vadd.f32 %v4913, %v4914
    %v4916 = vrot.slane %v4915, 4
    %v4917 = vadd.f32 %v4915, %v4916
    %v4918 = vrot.slane %v4917, 2
    %v4919 = vadd.f32 %v4917, %v4918
    %v4920 = vrot.slane %v4919, 1
    %v4921 = vadd.f32 %v4919, %v4920
    %v4922 = vmul.f32 %v4921, %v2431
    %v4923 = vld [vmem:[#allocation11] sm:$0xff]
    %v4924 = vld [vmem:[#allocation11 + $0x8] sm:$0xff]
    %v4925 = vld [vmem:[#allocation13] sm:$0xff]
    %v4926 = vld [vmem:[#allocation13 + $0x8] sm:$0xff]
    %v4927 = vld [vmem:[#allocation13 + $0x10] sm:$0xff]
    %v4928 = vld [vmem:[#allocation13 + $0x18] sm:$0xff]
    %v4930 = vsel %vm1716, %v4225, 0
    %4932 = vmatprep.subr.mxu0 0.0
    %4933 = vmatpush1.msra.mxu0 0.0
    %4934 = vmatprep.subr.mxu0 0.0
    %4935 = vmatpush1.msra.mxu0 0.0
    %4936 = vmatprep.subr.mxu0 0.0
    %4937 = vmatpush1.msra.mxu0 0.0
    %4938 = vmatprep.subr.mxu0 0.0
    %4939 = vmatpush1.msra.mxu0 0.0
    %4940 = vmatprep.subr.mxu0 0.0
    %4941 = vmatpush1.msra.mxu0 0.0
    %4942 = vmatprep.subr.mxu0 0.0
    %4943 = vmatpush1.msra.mxu0 0.0
    %4944 = vmatprep.subr.mxu0 0.0
    %4945 = vmatpush1.msra.mxu0 0.0
    %4946 = vmatprep.subr.mxu0 0.0
    %4947 = vmatpush1.msra.mxu0 0.0
    %4948 = vmatprep.subr.mxu0 0.0
    %4949 = vmatpush1.msra.mxu0 0.0
    %4950 = vmatprep.subr.mxu0 0.0
    %4951 = vmatpush1.msra.mxu0 0.0
    %4952 = vmatprep.subr.mxu0 0.0
    %4953 = vmatpush1.msra.mxu0 0.0
    %4954 = vmatprep.subr.mxu0 0.0
    %4955 = vmatpush1.msra.mxu0 0.0
    %4956 = vmatprep.subr.mxu0 0.0
    %4957 = vmatpush1.msra.mxu0 %v4928
    %4958 = vmatprep.subr.mxu0 0.0
    %4959 = vmatpush1.msra.mxu0 %v4927
    %4960 = vmatprep.subr.mxu0 0.0
    %4961 = vmatpush1.msra.mxu0 %v4926
    %4962 = vmatprep.subr.mxu0 0.0
    %4963 = vmatpush1.msra.mxu0 %v4925
    %4964 = vmatprep.subr.mxu0 0.0
    %4965 = vmatpush2.msra.mxu0 0.0
    %4966 = vmatprep.subr.mxu0 0.0
    %4967 = vmatpush2.msra.mxu0 0.0
    %4968 = vmatprep.subr.mxu0 0.0
    %4969 = vmatpush2.msra.mxu0 0.0
    %4970 = vmatprep.subr.mxu0 0.0
    %4971 = vmatpush2.msra.mxu0 0.0
    %4972 = vmatprep.subr.mxu0 0.0
    %4973 = vmatpush2.msra.mxu0 0.0
    %4974 = vmatprep.subr.mxu0 0.0
    %4975 = vmatpush2.msra.mxu0 0.0
    %4976 = vmatprep.subr.mxu0 0.0
    %4977 = vmatpush2.msra.mxu0 0.0
    %4978 = vmatprep.subr.mxu0 0.0
    %4979 = vmatpush2.msra.mxu0 0.0
    %4980 = vmatprep.subr.mxu0 0.0
    %4981 = vmatpush2.msra.mxu0 0.0
    %4982 = vmatprep.subr.mxu0 0.0
    %4983 = vmatpush2.msra.mxu0 0.0
    %4984 = vmatprep.subr.mxu0 0.0
    %4985 = vmatpush2.msra.mxu0 0.0
    %4986 = vmatprep.subr.mxu0 0.0
    %4987 = vmatpush2.msra.mxu0 0.0
    %4988 = vmatprep.subr.mxu0 0.0
    %4989 = vmatpush2.msra.mxu0 0.0
    %4990 = vmatprep.subr.mxu0 0.0
    %4991 = vmatpush2.msra.mxu0 0.0
    %4992 = vmatprep.subr.mxu0 0.0
    %4993 = vmatpush2.msra.mxu0 0.0
    %4994 = vmatprep.subr.mxu0 0.0
    %4995 = vmatpush2.msra.mxu0 0.0
    %4996 = vmatprep.mubr.f32.mxu0 0.0
    %4997 = vmatmul.mubr.f32.gmra.mxu0 %v4930
    %v4998 = vpop.f32.mrf.mxu0
    %v4999 = vadd.f32 0.0, %v4998
    %v5000 = vpop.f32.mrf.mxu0
    %5001 = vdwg.mxu0
    %v5003 = vsel %vm156, %v2696, 0
    %5005 = vmatprep.subr.mxu0 0.0
    %5006 = vmatpush1.msra.mxu0 0.0
    %5007 = vmatprep.subr.mxu0 0.0
    %5008 = vmatpush1.msra.mxu0 0.0
    %5009 = vmatprep.subr.mxu0 0.0
    %5010 = vmatpush1.msra.mxu0 0.0
    %5011 = vmatprep.subr.mxu0 0.0
    %5012 = vmatpush1.msra.mxu0 0.0
    %5013 = vmatprep.subr.mxu0 0.0
    %5014 = vmatpush1.msra.mxu0 0.0
    %5015 = vmatprep.subr.mxu0 0.0
    %5016 = vmatpush1.msra.mxu0 0.0
    %5017 = vmatprep.subr.mxu0 0.0
    %5018 = vmatpush1.msra.mxu0 0.0
    %5019 = vmatprep.subr.mxu0 0.0
    %5020 = vmatpush1.msra.mxu0 0.0
    %5021 = vmatprep.subr.mxu0 0.0
    %5022 = vmatpush1.msra.mxu0 0.0
    %5023 = vmatprep.subr.mxu0 0.0
    %5024 = vmatpush1.msra.mxu0 0.0
    %5025 = vmatprep.subr.mxu0 0.0
    %5026 = vmatpush1.msra.mxu0 0.0
    %5027 = vmatprep.subr.mxu0 0.0
    %5028 = vmatpush1.msra.mxu0 0.0
    %5029 = vmatprep.subr.mxu0 0.0
    %5030 = vmatpush1.msra.mxu0 0.0
    %5031 = vmatprep.subr.mxu0 0.0
    %5032 = vmatpush1.msra.mxu0 0.0
    %5033 = vmatprep.subr.mxu0 0.0
    %5034 = vmatpush1.msra.mxu0 %v4924
    %5035 = vmatprep.subr.mxu0 0.0
    %5036 = vmatpush1.msra.mxu0 %v4923
    %5037 = vmatprep.subr.mxu0 0.0
    %5038 = vmatpush2.msra.mxu0 0.0
    %5039 = vmatprep.subr.mxu0 0.0
    %5040 = vmatpush2.msra.mxu0 0.0
    %5041 = vmatprep.subr.mxu0 0.0
    %5042 = vmatpush2.msra.mxu0 0.0
    %5043 = vmatprep.subr.mxu0 0.0
    %5044 = vmatpush2.msra.mxu0 0.0
    %5045 = vmatprep.subr.mxu0 0.0
    %5046 = vmatpush2.msra.mxu0 0.0
    %5047 = vmatprep.subr.mxu0 0.0
    %5048 = vmatpush2.msra.mxu0 0.0
    %5049 = vmatprep.subr.mxu0 0.0
    %5050 = vmatpush2.msra.mxu0 0.0
    %5051 = vmatprep.subr.mxu0 0.0
    %5052 = vmatpush2.msra.mxu0 0.0
    %5053 = vmatprep.subr.mxu0 0.0
    %5054 = vmatpush2.msra.mxu0 0.0
    %5055 = vmatprep.subr.mxu0 0.0
    %5056 = vmatpush2.msra.mxu0 0.0
    %5057 = vmatprep.subr.mxu0 0.0
    %5058 = vmatpush2.msra.mxu0 0.0
    %5059 = vmatprep.subr.mxu0 0.0
    %5060 = vmatpush2.msra.mxu0 0.0
    %5061 = vmatprep.subr.mxu0 0.0
    %5062 = vmatpush2.msra.mxu0 0.0
    %5063 = vmatprep.subr.mxu0 0.0
    %5064 = vmatpush2.msra.mxu0 0.0
    %5065 = vmatprep.subr.mxu0 0.0
    %5066 = vmatpush2.msra.mxu0 0.0
    %5067 = vmatprep.subr.mxu0 0.0
    %5068 = vmatpush2.msra.mxu0 0.0
    %5069 = vmatprep.mubr.f32.mxu0 0.0
    %5070 = vmatmul.mubr.f32.gmra.mxu0 %v5003
    %v5071 = vpop.f32.mrf.mxu0
    %v5072 = vadd.f32 %v4999, %v5071
    %v5073 = vpop.f32.mrf.mxu0
    %5074 = vdwg.mxu0
    %v5075 = vld [vmem:[#allocation14] sm:$0xff]
    %v5076 = vld [vmem:[#allocation14 + $0x8] sm:$0xff]
    %v5077 = vld [vmem:[#allocation14 + $0x10] sm:$0xff]
    %v5078 = vld [vmem:[#allocation14 + $0x18] sm:$0xff]
    %v5080 = vsel %vm1716, %v4922, 0
    %5082 = vmatprep.subr.mxu0 0.0
    %5083 = vmatpush1.msra.mxu0 0.0
    %5084 = vmatprep.subr.mxu0 0.0
    %5085 = vmatpush1.msra.mxu0 0.0
    %5086 = vmatprep.subr.mxu0 0.0
    %5087 = vmatpush1.msra.mxu0 0.0
    %5088 = vmatprep.subr.mxu0 0.0
    %5089 = vmatpush1.msra.mxu0 0.0
    %5090 = vmatprep.subr.mxu0 0.0
    %5091 = vmatpush1.msra.mxu0 0.0
    %5092 = vmatprep.subr.mxu0 0.0
    %5093 = vmatpush1.msra.mxu0 0.0
    %5094 = vmatprep.subr.mxu0 0.0
    %5095 = vmatpush1.msra.mxu0 0.0
    %5096 = vmatprep.subr.mxu0 0.0
    %5097 = vmatpush1.msra.mxu0 0.0
    %5098 = vmatprep.subr.mxu0 0.0
    %5099 = vmatpush1.msra.mxu0 0.0
    %5100 = vmatprep.subr.mxu0 0.0
    %5101 = vmatpush1.msra.mxu0 0.0
    %5102 = vmatprep.subr.mxu0 0.0
    %5103 = vmatpush1.msra.mxu0 0.0
    %5104 = vmatprep.subr.mxu0 0.0
    %5105 = vmatpush1.msra.mxu0 0.0
    %5106 = vmatprep.subr.mxu0 0.0
    %5107 = vmatpush1.msra.mxu0 %v5078
    %5108 = vmatprep.subr.mxu0 0.0
    %5109 = vmatpush1.msra.mxu0 %v5077
    %5110 = vmatprep.subr.mxu0 0.0
    %5111 = vmatpush1.msra.mxu0 %v5076
    %5112 = vmatprep.subr.mxu0 0.0
    %5113 = vmatpush1.msra.mxu0 %v5075
    %5114 = vmatprep.subr.mxu0 0.0
    %5115 = vmatpush2.msra.mxu0 0.0
    %5116 = vmatprep.subr.mxu0 0.0
    %5117 = vmatpush2.msra.mxu0 0.0
    %5118 = vmatprep.subr.mxu0 0.0
    %5119 = vmatpush2.msra.mxu0 0.0
    %5120 = vmatprep.subr.mxu0 0.0
    %5121 = vmatpush2.msra.mxu0 0.0
    %5122 = vmatprep.subr.mxu0 0.0
    %5123 = vmatpush2.msra.mxu0 0.0
    %5124 = vmatprep.subr.mxu0 0.0
    %5125 = vmatpush2.msra.mxu0 0.0
    %5126 = vmatprep.subr.mxu0 0.0
    %5127 = vmatpush2.msra.mxu0 0.0
    %5128 = vmatprep.subr.mxu0 0.0
    %5129 = vmatpush2.msra.mxu0 0.0
    %5130 = vmatprep.subr.mxu0 0.0
    %5131 = vmatpush2.msra.mxu0 0.0
    %5132 = vmatprep.subr.mxu0 0.0
    %5133 = vmatpush2.msra.mxu0 0.0
    %5134 = vmatprep.subr.mxu0 0.0
    %5135 = vmatpush2.msra.mxu0 0.0
    %5136 = vmatprep.subr.mxu0 0.0
    %5137 = vmatpush2.msra.mxu0 0.0
    %5138 = vmatprep.subr.mxu0 0.0
    %5139 = vmatpush2.msra.mxu0 0.0
    %5140 = vmatprep.subr.mxu0 0.0
    %5141 = vmatpush2.msra.mxu0 0.0
    %5142 = vmatprep.subr.mxu0 0.0
    %5143 = vmatpush2.msra.mxu0 0.0
    %5144 = vmatprep.subr.mxu0 0.0
    %5145 = vmatpush2.msra.mxu0 0.0
    %5146 = vmatprep.mubr.f32.mxu0 0.0
    %5147 = vmatmul.mubr.f32.gmra.mxu0 %v5080
    %v5148 = vpop.f32.mrf.mxu0
    %v5149 = vadd.f32 0.0, %v5148
    %v5150 = vpop.f32.mrf.mxu0
    %5151 = vdwg.mxu0
    %v5152 = vadd.f32 %v5072, %v5149
    %v5153 = vld [vmem:[%s10] sm:$0x1]
    %v5154 = vadd.f32 %v5152, %v5153
    %5155 = vst [vmem:[#allocation16 + $0x1] sm:$0x1] %v5154
    // Predicated region
    $region78: #{forward.1} parent=1 // pred_check
      _
    $region79: #{forward.1} parent=1 // pred_check_branch
      %5157 = sbr.rel (0) target = $region81
    $region80: #{forward.1} parent=1 // pred_region
      %s5159 = ssub.s32 32, 32
      %5160 = vsyncadd [#allocation4], %s5159
      %s5162 = sshll.u32 [#allocation16], 4
      %s5163 = int_to_ptr.vmem [resolvable:$true] %s5162
      %5165 = dma.vmem_to_hbm [thread:$0]  %s5163, 32, %s11, [#allocation4]
    $region81: #{forward.1} parent=1 // pred_fallthru
      _
    // Predicated region
    $region82: #{forward.1} parent=1 // pred_check
      _
    $region83: #{forward.1} parent=1 // pred_check_branch
      %5167 = sbr.rel (0) target = $region85
    $region84: #{forward.1} parent=1 // pred_region
      %5168 = dma.done [#allocation4], 32
    $region85: #{forward.1} parent=1 // pred_fallthru
      _
    %5169 = vsyncpa [#allocation3], 1
    %5170 = vsyncpa [#allocation6], 1
    %5171 = vsyncpa [#allocation9], 1
    %5172 = vsyncpa [#allocation12], 1
    %5173 = vsyncpa [#allocation15], 1
    %5174 = vsyncpa [#allocation4], 1

</llo_original>
